<compile_context>
chip_gen: v6e
topology: v6e:2x2x1
jax: 0.10.0
libtpu: 0.0.40
codegen_flags: <defaults>
</compile_context>

<pallas_src>
import numpy as np

import jax
import jax.numpy as jnp
from jax.experimental import pallas as pl
from jax.experimental.pallas import tpu as pltpu


LANE = 128       # lane width of every weight slot's output (N) dim
N_SLOTS = 10     # 8 fused enc/dec layers + 2 MLP layers per view


def _packing_dims(view_size, n_units_1, n_units_2, n_units_3):
    """SHARED_OFF (column offset of the shared branch) and padded K rows."""
    widths = list(view_size) + list(n_units_1) + list(n_units_2) + list(n_units_3)
    max_w = max(widths)
    off = ((max_w + 7) // 8) * 8        # shared-branch column offset
    kpad = 2 * off                      # rows of each packed weight slot
    assert kpad <= LANE, "enc/dec widths must be <= 64 for block-diagonal fusion"
    return off, kpad


# ----------------------------------------------------------------------------
# Parameter construction (kaiming-normal-like).  Weights stored transposed vs
# PyTorch: (in, out); bias: (1, out).
# ----------------------------------------------------------------------------
def _make_linear(key, fan_in, fan_out, dtype=jnp.float32):
    kw, kb = jax.random.split(key)
    std = (2.0 / fan_in) ** 0.5
    w = std * jax.random.normal(kw, (fan_in, fan_out), dtype=dtype)
    bound = 1.0 / (fan_in ** 0.5)
    b = jax.random.uniform(kb, (1, fan_out), dtype=dtype,
                           minval=-bound, maxval=bound)
    return (w, b)


def init_params(key, view_size, n_units_1, n_units_2, n_units_3, mlp_size):
    units = {1: n_units_1, 2: n_units_2, 3: n_units_3}
    params = {}
    keys = iter(jax.random.split(key, 3 * (2 * 8 + 2)))
    for i in (1, 2, 3):
        u = units[i]
        dims = [view_size[i - 1], u[0], u[1], u[2], u[3],
                u[2], u[1], u[0], view_size[i - 1]]
        for kind in ('shared', 'specific'):
            layers = []
            for a, b in zip(dims[:-1], dims[1:]):
                layers.append(_make_linear(next(keys), a, b))
            params[f'{kind}{i}'] = layers
        params[f'view{i}_mlp'] = [
            _make_linear(next(keys), u[3], mlp_size[0]),
            _make_linear(next(keys), mlp_size[0], mlp_size[1]),
        ]
    return params


# ----------------------------------------------------------------------------
# Host-side packing of all 54 Linear layers into
#   w_all: (3, 10, KPAD, 128)  bf16   (block-diagonal: specific @0, shared @OFF)
#   b_all: (3, 10, 128)        f32
# ----------------------------------------------------------------------------
def pack_params(params, view_size, n_units_1, n_units_2, n_units_3, mlp_size):
    off, kpad = _packing_dims(view_size, n_units_1, n_units_2, n_units_3)
    units = {1: n_units_1, 2: n_units_2, 3: n_units_3}
    m0, m1 = mlp_size
    assert m0 <= min(kpad, LANE) and m1 <= LANE

    w_all = np.zeros((3, N_SLOTS, kpad, LANE), np.float32)
    b_all = np.zeros((3, N_SLOTS, LANE), np.float32)

    for i in (1, 2, 3):
        u = units[i]
        vs = view_size[i - 1]
        dims = [vs, u[0], u[1], u[2], u[3], u[2], u[1], u[0], vs]

        spec = params[f'specific{i}']
        shar = params[f'shared{i}']
        for l in range(8):
            d_in, d_out = dims[l], dims[l + 1]
            w_sp, bias_sp = np.asarray(spec[l][0]), np.asarray(spec[l][1])
            w_sh, bias_sh = np.asarray(shar[l][0]), np.asarray(shar[l][1])
            if l == 0:
                # both branches read the same input x (rows 0:vs)
                w_all[i - 1, l, :d_in, :d_out] = w_sp
                w_all[i - 1, l, :d_in, off:off + d_out] = w_sh
            else:
                # block-diagonal: specific @ (row 0, col 0), shared @ (off, off)
                w_all[i - 1, l, :d_in, :d_out] = w_sp
                w_all[i - 1, l, off:off + d_in, off:off + d_out] = w_sh
            b_all[i - 1, l, :d_out] = bias_sp[0]
            b_all[i - 1, l, off:off + d_out] = bias_sh[0]

        # MLP head: rows aligned with the shared-embedding columns.
        (w_m1, b_m1), (w_m2, b_m2) = params[f'view{i}_mlp']
        u3 = u[3]
        w_all[i - 1, 8, off:off + u3, :m0] = np.asarray(w_m1)
        b_all[i - 1, 8, :m0] = np.asarray(b_m1)[0]
        w_all[i - 1, 9, :m0, :m1] = np.asarray(w_m2)
        b_all[i - 1, 9, :m1] = np.asarray(b_m2)[0]

    return jnp.asarray(w_all, dtype=jnp.bfloat16), jnp.asarray(b_all)


# ----------------------------------------------------------------------------
# Forward pass: single fused pallas_call, batch-tile grid, view loop unrolled.
# ----------------------------------------------------------------------------
def make_forward(view_size, n_units_1, n_units_2, n_units_3, mlp_size, batch):
    off, kpad = _packing_dims(view_size, n_units_1, n_units_2, n_units_3)
    units = (n_units_1, n_units_2, n_units_3)
    u3s = [units[v][3] for v in range(3)]
    m1 = mlp_size[1]

    # Batch tiling: a single tile at toy sizes; 256-row tiles for big batches
    # (weights stay resident across tiles via a constant index_map).
    b_pad = max(8, ((batch + 7) // 8) * 8)
    if b_pad > 256:
        b_tile = 256
        b_pad = ((b_pad + b_tile - 1) // b_tile) * b_tile
    else:
        b_tile = b_pad
    n_bt = b_pad // b_tile

    def kernel(x_ref, w_ref, b_ref, out_ref):
        # x_ref:   (3, b_tile, kpad)  f32   (view input in cols [0:vs), zeros elsewhere)
        # w_ref:   (3, 10, kpad, 128) bf16  (block-diagonal packed weights)
        # b_ref:   (3, 10, 128)       f32
        # out_ref: (3, b_tile, 384)   f32   [ em(128) | rec(128) | mlp(128) ] per view
        for v in range(3):
            bv = b_ref[v]                       # hoisted bias load, (10, 128)
            h = x_ref[v]                        # (b_tile, kpad)
            em = None
            for l in range(8):
                lhs = h if l == 0 else h[:, :kpad]   # lanes >= kpad are exactly 0
                z = jnp.dot(lhs.astype(jnp.bfloat16), w_ref[v, l],
                            preferred_element_type=jnp.float32)
                z = z + bv[l:l + 1, :]
                h = jnp.tanh(z) if l < 7 else jax.nn.sigmoid(z)
                if l == 3:
                    em = h                      # fused embedding (spec @0, shared @off)
                    out_ref[v, :, 0:LANE] = em.astype(out_ref.dtype)
            out_ref[v, :, LANE:2 * LANE] = h.astype(out_ref.dtype)

            # MLP head consumes the shared embedding (its weight rows are
            # packed at [off:off+u3], so the plain dense matmul selects it).
            m = em
            for l in range(8, 10):
                z = jnp.dot(m[:, :kpad].astype(jnp.bfloat16), w_ref[v, l],
                            preferred_element_type=jnp.float32)
                m = jnp.tanh(z + bv[l:l + 1, :])
            out_ref[v, :, 2 * LANE:3 * LANE] = m.astype(out_ref.dtype)

    cost = pl.CostEstimate(
        flops=int(3 * N_SLOTS * 2 * b_pad * kpad * LANE),
        transcendentals=int(3 * N_SLOTS * b_pad * LANE),
        bytes_accessed=int(3 * b_pad * kpad * 4
                           + 3 * N_SLOTS * kpad * LANE * 2
                           + 3 * N_SLOTS * LANE * 4
                           + 3 * b_pad * 3 * LANE * 4),
    )

    def forward(w_all, b_all, view1_input, view2_input, view3_input):
        xs = (view1_input, view2_input, view3_input)
        # jnp.pad + stack (no zeros + dynamic-update-slice round trip).
        x_all = jnp.stack([
            jnp.pad(x.astype(jnp.float32),
                    ((0, b_pad - x.shape[0]), (0, kpad - x.shape[1])))
            for x in xs
        ])  # (3, b_pad, kpad)

        out = pl.pallas_call(
            kernel,
            grid=(n_bt,),
            in_specs=[
                pl.BlockSpec((3, b_tile, kpad), lambda b: (0, b, 0)),
                pl.BlockSpec((3, N_SLOTS, kpad, LANE), lambda b: (0, 0, 0, 0)),
                pl.BlockSpec((3, N_SLOTS, LANE), lambda b: (0, 0, 0)),
            ],
            out_specs=pl.BlockSpec((3, b_tile, 3 * LANE), lambda b: (0, b, 0)),
            out_shape=jax.ShapeDtypeStruct((3, b_pad, 3 * LANE), jnp.float32),
            compiler_params=pltpu.CompilerParams(
                dimension_semantics=("parallel",)),
            cost_estimate=cost,
        )(x_all, w_all, b_all)

        # Unpack the lane-dense slabs at the exact (unpadded) offsets.
        ems, recs, mlps = [], [], []
        for v in range(3):
            vs = view_size[v]
            u3 = u3s[v]
            slab = out[v, :batch]
            ems += [slab[:, 0:u3],                              # specific em
                    slab[:, off:off + u3]]                      # shared em
            recs += [slab[:, LANE:LANE + vs],                   # specific rec
                     slab[:, LANE + off:LANE + off + vs]]       # shared rec
            mlps += [slab[:, 2 * LANE:2 * LANE + m1]]
        # Output order matches the PyTorch module's forward().
        return tuple(ems + recs + mlps)

    return forward


# ----------------------------------------------------------------------------
# Pure-JAX f32 reference (mirrors the PyTorch module exactly).
# ----------------------------------------------------------------------------
def _ref_enc_dec(x, layers):
    h = x
    for w, b in layers[:4]:
        h = jnp.tanh(h @ w + b)
    em = h
    for w, b in layers[4:7]:
        h = jnp.tanh(h @ w + b)
    w, b = layers[7]
    rec = jax.nn.sigmoid(h @ w + b)
    return em, rec


def _ref_forward(params, v1, v2, v3):
    inputs = {1: v1, 2: v2, 3: v3}
    outs_em, outs_rec, outs_mlp = [], [], []
    for i in (1, 2, 3):
        sp_em, sp_rec = _ref_enc_dec(inputs[i], params[f'specific{i}'])
        sh_em, sh_rec = _ref_enc_dec(inputs[i], params[f'shared{i}'])
        (w1, b1), (w2, b2) = params[f'view{i}_mlp']
        mlp = jnp.tanh(jnp.tanh(sh_em @ w1 + b1) @ w2 + b2)
        outs_em += [sp_em, sh_em]
        outs_rec += [sp_rec, sh_rec]
        outs_mlp += [mlp]
    return tuple(outs_em + outs_rec + outs_mlp)


# ----------------------------------------------------------------------------
if __name__ == "__main__":
    # Small synthetic configuration consistent with the module's __init__.
    view_size = [40, 32, 24]
    n_units_1 = [32, 24, 16, 8]
    n_units_2 = [28, 20, 14, 8]
    n_units_3 = [24, 18, 12, 8]
    mlp_size = [16, 8]
    batch = 4

    key = jax.random.PRNGKey(0)
    kp, k1, k2, k3 = jax.random.split(key, 4)
    params = init_params(kp, view_size, n_units_1, n_units_2, n_units_3,
                         mlp_size)
    w_all, b_all = pack_params(params, view_size, n_units_1, n_units_2,
                               n_units_3, mlp_size)

    view1 = jax.random.uniform(k1, (batch, view_size[0]), dtype=jnp.float32)
    view2 = jax.random.uniform(k2, (batch, view_size[1]), dtype=jnp.float32)
    view3 = jax.random.uniform(k3, (batch, view_size[2]), dtype=jnp.float32)

    forward = jax.jit(make_forward(view_size, n_units_1, n_units_2,
                                   n_units_3, mlp_size, batch))
    outs = forward(w_all, b_all, view1, view2, view3)
    outs = jax.block_until_ready(outs)

    refs = _ref_forward(params, view1, view2, view3)
    assert len(outs) == 15
    # bf16 weights/activations inside the kernel -> loosened tolerance vs the
    # f32 reference (activations are tanh/sigmoid-bounded, so 5e-2 is ample).
    for got, want in zip(outs, refs):
        assert got.shape == want.shape and got.dtype == want.dtype
        assert jnp.allclose(got, want, atol=5e-2, rtol=5e-2), \
            float(jnp.max(jnp.abs(got - want)))

    print("KERNEL_OK")
</pallas_src>

<mosaic_0001>
module attributes {stable_mosaic.version = 11 : i64} {
  func.func @kernel(%arg0: i32, %arg1: memref<3x8x80xf32, #tpu.memory_space<vmem>>, %arg2: memref<3x10x80x128xbf16, #tpu.memory_space<vmem>>, %arg3: memref<3x10x128xf32, #tpu.memory_space<vmem>>, %arg4: memref<3x8x384xf32, #tpu.memory_space<vmem>>) attributes {dimension_semantics = [#tpu.dimension_semantics<parallel>], iteration_bounds = array<i64: 1>, scalar_prefetch = 0 : i64, scratch_operands = 0 : i64, tpu.core_type = #tpu.core_type<tc>, window_params = [{transform_indices = @transform_0, window_bounds = array<i64: 3, 8, 80>}, {pipeline_mode = #tpu.pipeline_mode<synchronous>, transform_indices = @transform_1, window_bounds = array<i64: 3, 10, 80, 128>}, {pipeline_mode = #tpu.pipeline_mode<synchronous>, transform_indices = @transform_2, window_bounds = array<i64: 3, 10, 128>}, {transform_indices = @transform_3, window_bounds = array<i64: 3, 8, 384>}]} {
    %c0 = arith.constant 0 : index
    %c0_0 = arith.constant 0 : index
    %c0_1 = arith.constant 0 : index
    %0 = vector.load %arg3[%c0, %c0_0, %c0_1] : memref<3x10x128xf32, #tpu.memory_space<vmem>>, vector<1x10x128xf32>
    %1 = vector.shape_cast %0 : vector<1x10x128xf32> to vector<10x128xf32>
    %c0_2 = arith.constant 0 : index
    %c0_3 = arith.constant 0 : index
    %c0_4 = arith.constant 0 : index
    %2 = vector.load %arg1[%c0_2, %c0_3, %c0_4] : memref<3x8x80xf32, #tpu.memory_space<vmem>>, vector<1x8x80xf32>
    %3 = vector.shape_cast %2 : vector<1x8x80xf32> to vector<8x80xf32>
    %4 = arith.truncf %3 : vector<8x80xf32> to vector<8x80xbf16>
    %c0_5 = arith.constant 0 : index
    %c0_6 = arith.constant 0 : index
    %c0_7 = arith.constant 0 : index
    %c0_8 = arith.constant 0 : index
    %5 = vector.load %arg2[%c0_5, %c0_6, %c0_7, %c0_8] : memref<3x10x80x128xbf16, #tpu.memory_space<vmem>>, vector<1x1x80x128xbf16>
    %6 = vector.shape_cast %5 : vector<1x1x80x128xbf16> to vector<80x128xbf16>
    %cst = arith.constant dense<0.000000e+00> : vector<8x128xf32>
    %7 = tpu.matmul %4, %6, %cst {dimension_numbers = #tpu.dot_dimension_numbers<[1], [0], [0], [1], [0, 0, 1, 1], [], []>} : vector<8x80xbf16>, vector<80x128xbf16>, vector<8x128xf32> -> vector<8x128xf32>
    %8 = vector.extract_strided_slice %1 {offsets = [0, 0], sizes = [1, 128], strides = [1, 1]} : vector<10x128xf32> to vector<1x128xf32>
    %9 = vector.broadcast %8 : vector<1x128xf32> to vector<8x128xf32>
    %10 = arith.addf %7, %9 : vector<8x128xf32>
    %11 = math.tanh %10 : vector<8x128xf32>
    %12 = vector.extract_strided_slice %11 {offsets = [0, 0], sizes = [8, 80], strides = [1, 1]} : vector<8x128xf32> to vector<8x80xf32>
    %13 = arith.truncf %12 : vector<8x80xf32> to vector<8x80xbf16>
    %c0_9 = arith.constant 0 : index
    %c1 = arith.constant 1 : index
    %c0_10 = arith.constant 0 : index
    %c0_11 = arith.constant 0 : index
    %14 = vector.load %arg2[%c0_9, %c1, %c0_10, %c0_11] : memref<3x10x80x128xbf16, #tpu.memory_space<vmem>>, vector<1x1x80x128xbf16>
    %15 = vector.shape_cast %14 : vector<1x1x80x128xbf16> to vector<80x128xbf16>
    %cst_12 = arith.constant dense<0.000000e+00> : vector<8x128xf32>
    %16 = tpu.matmul %13, %15, %cst_12 {dimension_numbers = #tpu.dot_dimension_numbers<[1], [0], [0], [1], [0, 0, 1, 1], [], []>} : vector<8x80xbf16>, vector<80x128xbf16>, vector<8x128xf32> -> vector<8x128xf32>
    %17 = vector.extract_strided_slice %1 {offsets = [1, 0], sizes = [1, 128], strides = [1, 1]} : vector<10x128xf32> to vector<1x128xf32>
    %18 = vector.broadcast %17 : vector<1x128xf32> to vector<8x128xf32>
    %19 = arith.addf %16, %18 : vector<8x128xf32>
    %20 = math.tanh %19 : vector<8x128xf32>
    %21 = vector.extract_strided_slice %20 {offsets = [0, 0], sizes = [8, 80], strides = [1, 1]} : vector<8x128xf32> to vector<8x80xf32>
    %22 = arith.truncf %21 : vector<8x80xf32> to vector<8x80xbf16>
    %c0_13 = arith.constant 0 : index
    %c2 = arith.constant 2 : index
    %c0_14 = arith.constant 0 : index
    %c0_15 = arith.constant 0 : index
    %23 = vector.load %arg2[%c0_13, %c2, %c0_14, %c0_15] : memref<3x10x80x128xbf16, #tpu.memory_space<vmem>>, vector<1x1x80x128xbf16>
    %24 = vector.shape_cast %23 : vector<1x1x80x128xbf16> to vector<80x128xbf16>
    %cst_16 = arith.constant dense<0.000000e+00> : vector<8x128xf32>
    %25 = tpu.matmul %22, %24, %cst_16 {dimension_numbers = #tpu.dot_dimension_numbers<[1], [0], [0], [1], [0, 0, 1, 1], [], []>} : vector<8x80xbf16>, vector<80x128xbf16>, vector<8x128xf32> -> vector<8x128xf32>
    %26 = vector.extract_strided_slice %1 {offsets = [2, 0], sizes = [1, 128], strides = [1, 1]} : vector<10x128xf32> to vector<1x128xf32>
    %27 = vector.broadcast %26 : vector<1x128xf32> to vector<8x128xf32>
    %28 = arith.addf %25, %27 : vector<8x128xf32>
    %29 = math.tanh %28 : vector<8x128xf32>
    %30 = vector.extract_strided_slice %29 {offsets = [0, 0], sizes = [8, 80], strides = [1, 1]} : vector<8x128xf32> to vector<8x80xf32>
    %31 = arith.truncf %30 : vector<8x80xf32> to vector<8x80xbf16>
    %c0_17 = arith.constant 0 : index
    %c3 = arith.constant 3 : index
    %c0_18 = arith.constant 0 : index
    %c0_19 = arith.constant 0 : index
    %32 = vector.load %arg2[%c0_17, %c3, %c0_18, %c0_19] : memref<3x10x80x128xbf16, #tpu.memory_space<vmem>>, vector<1x1x80x128xbf16>
    %33 = vector.shape_cast %32 : vector<1x1x80x128xbf16> to vector<80x128xbf16>
    %cst_20 = arith.constant dense<0.000000e+00> : vector<8x128xf32>
    %34 = tpu.matmul %31, %33, %cst_20 {dimension_numbers = #tpu.dot_dimension_numbers<[1], [0], [0], [1], [0, 0, 1, 1], [], []>} : vector<8x80xbf16>, vector<80x128xbf16>, vector<8x128xf32> -> vector<8x128xf32>
    %35 = vector.extract_strided_slice %1 {offsets = [3, 0], sizes = [1, 128], strides = [1, 1]} : vector<10x128xf32> to vector<1x128xf32>
    %36 = vector.broadcast %35 : vector<1x128xf32> to vector<8x128xf32>
    %37 = arith.addf %34, %36 : vector<8x128xf32>
    %38 = math.tanh %37 : vector<8x128xf32>
    %c0_21 = arith.constant 0 : index
    %c0_22 = arith.constant 0 : index
    %c0_23 = arith.constant 0 : index
    %39 = vector.load %arg4[%c0_21, %c0_22, %c0_23] : memref<3x8x384xf32, #tpu.memory_space<vmem>>, vector<1x8x128xf32>
    %40 = vector.shape_cast %39 : vector<1x8x128xf32> to vector<8x128xf32>
    %41 = vector.shape_cast %38 : vector<8x128xf32> to vector<1x8x128xf32>
    tpu.vector_store %arg4[%c0_21, %c0_22, %c0_23], %41 {strides = array<i32>} : memref<3x8x384xf32, #tpu.memory_space<vmem>>, vector<1x8x128xf32>,
    %42 = vector.extract_strided_slice %38 {offsets = [0, 0], sizes = [8, 80], strides = [1, 1]} : vector<8x128xf32> to vector<8x80xf32>
    %43 = arith.truncf %42 : vector<8x80xf32> to vector<8x80xbf16>
    %c0_24 = arith.constant 0 : index
    %c4 = arith.constant 4 : index
    %c0_25 = arith.constant 0 : index
    %c0_26 = arith.constant 0 : index
    %44 = vector.load %arg2[%c0_24, %c4, %c0_25, %c0_26] : memref<3x10x80x128xbf16, #tpu.memory_space<vmem>>, vector<1x1x80x128xbf16>
    %45 = vector.shape_cast %44 : vector<1x1x80x128xbf16> to vector<80x128xbf16>
    %cst_27 = arith.constant dense<0.000000e+00> : vector<8x128xf32>
    %46 = tpu.matmul %43, %45, %cst_27 {dimension_numbers = #tpu.dot_dimension_numbers<[1], [0], [0], [1], [0, 0, 1, 1], [], []>} : vector<8x80xbf16>, vector<80x128xbf16>, vector<8x128xf32> -> vector<8x128xf32>
    %47 = vector.extract_strided_slice %1 {offsets = [4, 0], sizes = [1, 128], strides = [1, 1]} : vector<10x128xf32> to vector<1x128xf32>
    %48 = vector.broadcast %47 : vector<1x128xf32> to vector<8x128xf32>
    %49 = arith.addf %46, %48 : vector<8x128xf32>
    %50 = math.tanh %49 : vector<8x128xf32>
    %51 = vector.extract_strided_slice %50 {offsets = [0, 0], sizes = [8, 80], strides = [1, 1]} : vector<8x128xf32> to vector<8x80xf32>
    %52 = arith.truncf %51 : vector<8x80xf32> to vector<8x80xbf16>
    %c0_28 = arith.constant 0 : index
    %c5 = arith.constant 5 : index
    %c0_29 = arith.constant 0 : index
    %c0_30 = arith.constant 0 : index
    %53 = vector.load %arg2[%c0_28, %c5, %c0_29, %c0_30] : memref<3x10x80x128xbf16, #tpu.memory_space<vmem>>, vector<1x1x80x128xbf16>
    %54 = vector.shape_cast %53 : vector<1x1x80x128xbf16> to vector<80x128xbf16>
    %cst_31 = arith.constant dense<0.000000e+00> : vector<8x128xf32>
    %55 = tpu.matmul %52, %54, %cst_31 {dimension_numbers = #tpu.dot_dimension_numbers<[1], [0], [0], [1], [0, 0, 1, 1], [], []>} : vector<8x80xbf16>, vector<80x128xbf16>, vector<8x128xf32> -> vector<8x128xf32>
    %56 = vector.extract_strided_slice %1 {offsets = [5, 0], sizes = [1, 128], strides = [1, 1]} : vector<10x128xf32> to vector<1x128xf32>
    %57 = vector.broadcast %56 : vector<1x128xf32> to vector<8x128xf32>
    %58 = arith.addf %55, %57 : vector<8x128xf32>
    %59 = math.tanh %58 : vector<8x128xf32>
    %60 = vector.extract_strided_slice %59 {offsets = [0, 0], sizes = [8, 80], strides = [1, 1]} : vector<8x128xf32> to vector<8x80xf32>
    %61 = arith.truncf %60 : vector<8x80xf32> to vector<8x80xbf16>
    %c0_32 = arith.constant 0 : index
    %c6 = arith.constant 6 : index
    %c0_33 = arith.constant 0 : index
    %c0_34 = arith.constant 0 : index
    %62 = vector.load %arg2[%c0_32, %c6, %c0_33, %c0_34] : memref<3x10x80x128xbf16, #tpu.memory_space<vmem>>, vector<1x1x80x128xbf16>
    %63 = vector.shape_cast %62 : vector<1x1x80x128xbf16> to vector<80x128xbf16>
    %cst_35 = arith.constant dense<0.000000e+00> : vector<8x128xf32>
    %64 = tpu.matmul %61, %63, %cst_35 {dimension_numbers = #tpu.dot_dimension_numbers<[1], [0], [0], [1], [0, 0, 1, 1], [], []>} : vector<8x80xbf16>, vector<80x128xbf16>, vector<8x128xf32> -> vector<8x128xf32>
    %65 = vector.extract_strided_slice %1 {offsets = [6, 0], sizes = [1, 128], strides = [1, 1]} : vector<10x128xf32> to vector<1x128xf32>
    %66 = vector.broadcast %65 : vector<1x128xf32> to vector<8x128xf32>
    %67 = arith.addf %64, %66 : vector<8x128xf32>
    %68 = math.tanh %67 : vector<8x128xf32>
    %69 = vector.extract_strided_slice %68 {offsets = [0, 0], sizes = [8, 80], strides = [1, 1]} : vector<8x128xf32> to vector<8x80xf32>
    %70 = arith.truncf %69 : vector<8x80xf32> to vector<8x80xbf16>
    %c0_36 = arith.constant 0 : index
    %c7 = arith.constant 7 : index
    %c0_37 = arith.constant 0 : index
    %c0_38 = arith.constant 0 : index
    %71 = vector.load %arg2[%c0_36, %c7, %c0_37, %c0_38] : memref<3x10x80x128xbf16, #tpu.memory_space<vmem>>, vector<1x1x80x128xbf16>
    %72 = vector.shape_cast %71 : vector<1x1x80x128xbf16> to vector<80x128xbf16>
    %cst_39 = arith.constant dense<0.000000e+00> : vector<8x128xf32>
    %73 = tpu.matmul %70, %72, %cst_39 {dimension_numbers = #tpu.dot_dimension_numbers<[1], [0], [0], [1], [0, 0, 1, 1], [], []>} : vector<8x80xbf16>, vector<80x128xbf16>, vector<8x128xf32> -> vector<8x128xf32>
    %74 = vector.extract_strided_slice %1 {offsets = [7, 0], sizes = [1, 128], strides = [1, 1]} : vector<10x128xf32> to vector<1x128xf32>
    %75 = vector.broadcast %74 : vector<1x128xf32> to vector<8x128xf32>
    %76 = arith.addf %73, %75 : vector<8x128xf32>
    %77 = arith.negf %76 : vector<8x128xf32>
    %78 = math.exp %77 : vector<8x128xf32>
    %cst_40 = arith.constant 1.000000e+00 : f32
    %79 = vector.broadcast %cst_40 : f32 to vector<8x128xf32>
    %80 = arith.addf %79, %78 : vector<8x128xf32>
    %81 = arith.divf %79, %80 : vector<8x128xf32>
    %c0_41 = arith.constant 0 : index
    %c0_42 = arith.constant 0 : index
    %c128 = arith.constant 128 : index
    %82 = vector.load %arg4[%c0_41, %c0_42, %c128] : memref<3x8x384xf32, #tpu.memory_space<vmem>>, vector<1x8x128xf32>
    %83 = vector.shape_cast %82 : vector<1x8x128xf32> to vector<8x128xf32>
    %84 = vector.shape_cast %81 : vector<8x128xf32> to vector<1x8x128xf32>
    tpu.vector_store %arg4[%c0_41, %c0_42, %c128], %84 {strides = array<i32>} : memref<3x8x384xf32, #tpu.memory_space<vmem>>, vector<1x8x128xf32>,
    %85 = vector.extract_strided_slice %38 {offsets = [0, 0], sizes = [8, 80], strides = [1, 1]} : vector<8x128xf32> to vector<8x80xf32>
    %86 = arith.truncf %85 : vector<8x80xf32> to vector<8x80xbf16>
    %c0_43 = arith.constant 0 : index
    %c8 = arith.constant 8 : index
    %c0_44 = arith.constant 0 : index
    %c0_45 = arith.constant 0 : index
    %87 = vector.load %arg2[%c0_43, %c8, %c0_44, %c0_45] : memref<3x10x80x128xbf16, #tpu.memory_space<vmem>>, vector<1x1x80x128xbf16>
    %88 = vector.shape_cast %87 : vector<1x1x80x128xbf16> to vector<80x128xbf16>
    %cst_46 = arith.constant dense<0.000000e+00> : vector<8x128xf32>
    %89 = tpu.matmul %86, %88, %cst_46 {dimension_numbers = #tpu.dot_dimension_numbers<[1], [0], [0], [1], [0, 0, 1, 1], [], []>} : vector<8x80xbf16>, vector<80x128xbf16>, vector<8x128xf32> -> vector<8x128xf32>
    %90 = vector.extract_strided_slice %1 {offsets = [8, 0], sizes = [1, 128], strides = [1, 1]} : vector<10x128xf32> to vector<1x128xf32>
    %91 = vector.broadcast %90 : vector<1x128xf32> to vector<8x128xf32>
    %92 = arith.addf %89, %91 : vector<8x128xf32>
    %93 = math.tanh %92 : vector<8x128xf32>
    %94 = vector.extract_strided_slice %93 {offsets = [0, 0], sizes = [8, 80], strides = [1, 1]} : vector<8x128xf32> to vector<8x80xf32>
    %95 = arith.truncf %94 : vector<8x80xf32> to vector<8x80xbf16>
    %c0_47 = arith.constant 0 : index
    %c9 = arith.constant 9 : index
    %c0_48 = arith.constant 0 : index
    %c0_49 = arith.constant 0 : index
    %96 = vector.load %arg2[%c0_47, %c9, %c0_48, %c0_49] : memref<3x10x80x128xbf16, #tpu.memory_space<vmem>>, vector<1x1x80x128xbf16>
    %97 = vector.shape_cast %96 : vector<1x1x80x128xbf16> to vector<80x128xbf16>
    %cst_50 = arith.constant dense<0.000000e+00> : vector<8x128xf32>
    %98 = tpu.matmul %95, %97, %cst_50 {dimension_numbers = #tpu.dot_dimension_numbers<[1], [0], [0], [1], [0, 0, 1, 1], [], []>} : vector<8x80xbf16>, vector<80x128xbf16>, vector<8x128xf32> -> vector<8x128xf32>
    %99 = vector.extract_strided_slice %1 {offsets = [9, 0], sizes = [1, 128], strides = [1, 1]} : vector<10x128xf32> to vector<1x128xf32>
    %100 = vector.broadcast %99 : vector<1x128xf32> to vector<8x128xf32>
    %101 = arith.addf %98, %100 : vector<8x128xf32>
    %102 = math.tanh %101 : vector<8x128xf32>
    %c0_51 = arith.constant 0 : index
    %c0_52 = arith.constant 0 : index
    %c256 = arith.constant 256 : index
    %103 = vector.load %arg4[%c0_51, %c0_52, %c256] : memref<3x8x384xf32, #tpu.memory_space<vmem>>, vector<1x8x128xf32>
    %104 = vector.shape_cast %103 : vector<1x8x128xf32> to vector<8x128xf32>
    %105 = vector.shape_cast %102 : vector<8x128xf32> to vector<1x8x128xf32>
    tpu.vector_store %arg4[%c0_51, %c0_52, %c256], %105 {strides = array<i32>} : memref<3x8x384xf32, #tpu.memory_space<vmem>>, vector<1x8x128xf32>,
    %c1_53 = arith.constant 1 : index
    %c0_54 = arith.constant 0 : index
    %c0_55 = arith.constant 0 : index
    %106 = vector.load %arg3[%c1_53, %c0_54, %c0_55] : memref<3x10x128xf32, #tpu.memory_space<vmem>>, vector<1x10x128xf32>
    %107 = vector.shape_cast %106 : vector<1x10x128xf32> to vector<10x128xf32>
    %c1_56 = arith.constant 1 : index
    %c0_57 = arith.constant 0 : index
    %c0_58 = arith.constant 0 : index
    %108 = vector.load %arg1[%c1_56, %c0_57, %c0_58] : memref<3x8x80xf32, #tpu.memory_space<vmem>>, vector<1x8x80xf32>
    %109 = vector.shape_cast %108 : vector<1x8x80xf32> to vector<8x80xf32>
    %110 = arith.truncf %109 : vector<8x80xf32> to vector<8x80xbf16>
    %c1_59 = arith.constant 1 : index
    %c0_60 = arith.constant 0 : index
    %c0_61 = arith.constant 0 : index
    %c0_62 = arith.constant 0 : index
    %111 = vector.load %arg2[%c1_59, %c0_60, %c0_61, %c0_62] : memref<3x10x80x128xbf16, #tpu.memory_space<vmem>>, vector<1x1x80x128xbf16>
    %112 = vector.shape_cast %111 : vector<1x1x80x128xbf16> to vector<80x128xbf16>
    %cst_63 = arith.constant dense<0.000000e+00> : vector<8x128xf32>
    %113 = tpu.matmul %110, %112, %cst_63 {dimension_numbers = #tpu.dot_dimension_numbers<[1], [0], [0], [1], [0, 0, 1, 1], [], []>} : vector<8x80xbf16>, vector<80x128xbf16>, vector<8x128xf32> -> vector<8x128xf32>
    %114 = vector.extract_strided_slice %107 {offsets = [0, 0], sizes = [1, 128], strides = [1, 1]} : vector<10x128xf32> to vector<1x128xf32>
    %115 = vector.broadcast %114 : vector<1x128xf32> to vector<8x128xf32>
    %116 = arith.addf %113, %115 : vector<8x128xf32>
    %117 = math.tanh %116 : vector<8x128xf32>
    %118 = vector.extract_strided_slice %117 {offsets = [0, 0], sizes = [8, 80], strides = [1, 1]} : vector<8x128xf32> to vector<8x80xf32>
    %119 = arith.truncf %118 : vector<8x80xf32> to vector<8x80xbf16>
    %c1_64 = arith.constant 1 : index
    %c1_65 = arith.constant 1 : index
    %c0_66 = arith.constant 0 : index
    %c0_67 = arith.constant 0 : index
    %120 = vector.load %arg2[%c1_64, %c1_65, %c0_66, %c0_67] : memref<3x10x80x128xbf16, #tpu.memory_space<vmem>>, vector<1x1x80x128xbf16>
    %121 = vector.shape_cast %120 : vector<1x1x80x128xbf16> to vector<80x128xbf16>
    %cst_68 = arith.constant dense<0.000000e+00> : vector<8x128xf32>
    %122 = tpu.matmul %119, %121, %cst_68 {dimension_numbers = #tpu.dot_dimension_numbers<[1], [0], [0], [1], [0, 0, 1, 1], [], []>} : vector<8x80xbf16>, vector<80x128xbf16>, vector<8x128xf32> -> vector<8x128xf32>
    %123 = vector.extract_strided_slice %107 {offsets = [1, 0], sizes = [1, 128], strides = [1, 1]} : vector<10x128xf32> to vector<1x128xf32>
    %124 = vector.broadcast %123 : vector<1x128xf32> to vector<8x128xf32>
    %125 = arith.addf %122, %124 : vector<8x128xf32>
    %126 = math.tanh %125 : vector<8x128xf32>
    %127 = vector.extract_strided_slice %126 {offsets = [0, 0], sizes = [8, 80], strides = [1, 1]} : vector<8x128xf32> to vector<8x80xf32>
    %128 = arith.truncf %127 : vector<8x80xf32> to vector<8x80xbf16>
    %c1_69 = arith.constant 1 : index
    %c2_70 = arith.constant 2 : index
    %c0_71 = arith.constant 0 : index
    %c0_72 = arith.constant 0 : index
    %129 = vector.load %arg2[%c1_69, %c2_70, %c0_71, %c0_72] : memref<3x10x80x128xbf16, #tpu.memory_space<vmem>>, vector<1x1x80x128xbf16>
    %130 = vector.shape_cast %129 : vector<1x1x80x128xbf16> to vector<80x128xbf16>
    %cst_73 = arith.constant dense<0.000000e+00> : vector<8x128xf32>
    %131 = tpu.matmul %128, %130, %cst_73 {dimension_numbers = #tpu.dot_dimension_numbers<[1], [0], [0], [1], [0, 0, 1, 1], [], []>} : vector<8x80xbf16>, vector<80x128xbf16>, vector<8x128xf32> -> vector<8x128xf32>
    %132 = vector.extract_strided_slice %107 {offsets = [2, 0], sizes = [1, 128], strides = [1, 1]} : vector<10x128xf32> to vector<1x128xf32>
    %133 = vector.broadcast %132 : vector<1x128xf32> to vector<8x128xf32>
    %134 = arith.addf %131, %133 : vector<8x128xf32>
    %135 = math.tanh %134 : vector<8x128xf32>
    %136 = vector.extract_strided_slice %135 {offsets = [0, 0], sizes = [8, 80], strides = [1, 1]} : vector<8x128xf32> to vector<8x80xf32>
    %137 = arith.truncf %136 : vector<8x80xf32> to vector<8x80xbf16>
    %c1_74 = arith.constant 1 : index
    %c3_75 = arith.constant 3 : index
    %c0_76 = arith.constant 0 : index
    %c0_77 = arith.constant 0 : index
    %138 = vector.load %arg2[%c1_74, %c3_75, %c0_76, %c0_77] : memref<3x10x80x128xbf16, #tpu.memory_space<vmem>>, vector<1x1x80x128xbf16>
    %139 = vector.shape_cast %138 : vector<1x1x80x128xbf16> to vector<80x128xbf16>
    %cst_78 = arith.constant dense<0.000000e+00> : vector<8x128xf32>
    %140 = tpu.matmul %137, %139, %cst_78 {dimension_numbers = #tpu.dot_dimension_numbers<[1], [0], [0], [1], [0, 0, 1, 1], [], []>} : vector<8x80xbf16>, vector<80x128xbf16>, vector<8x128xf32> -> vector<8x128xf32>
    %141 = vector.extract_strided_slice %107 {offsets = [3, 0], sizes = [1, 128], strides = [1, 1]} : vector<10x128xf32> to vector<1x128xf32>
    %142 = vector.broadcast %141 : vector<1x128xf32> to vector<8x128xf32>
    %143 = arith.addf %140, %142 : vector<8x128xf32>
    %144 = math.tanh %143 : vector<8x128xf32>
    %c1_79 = arith.constant 1 : index
    %c0_80 = arith.constant 0 : index
    %c0_81 = arith.constant 0 : index
    %145 = vector.load %arg4[%c1_79, %c0_80, %c0_81] : memref<3x8x384xf32, #tpu.memory_space<vmem>>, vector<1x8x128xf32>
    %146 = vector.shape_cast %145 : vector<1x8x128xf32> to vector<8x128xf32>
    %147 = vector.shape_cast %144 : vector<8x128xf32> to vector<1x8x128xf32>
    tpu.vector_store %arg4[%c1_79, %c0_80, %c0_81], %147 {strides = array<i32>} : memref<3x8x384xf32, #tpu.memory_space<vmem>>, vector<1x8x128xf32>,
    %148 = vector.extract_strided_slice %144 {offsets = [0, 0], sizes = [8, 80], strides = [1, 1]} : vector<8x128xf32> to vector<8x80xf32>
    %149 = arith.truncf %148 : vector<8x80xf32> to vector<8x80xbf16>
    %c1_82 = arith.constant 1 : index
    %c4_83 = arith.constant 4 : index
    %c0_84 = arith.constant 0 : index
    %c0_85 = arith.constant 0 : index
    %150 = vector.load %arg2[%c1_82, %c4_83, %c0_84, %c0_85] : memref<3x10x80x128xbf16, #tpu.memory_space<vmem>>, vector<1x1x80x128xbf16>
    %151 = vector.shape_cast %150 : vector<1x1x80x128xbf16> to vector<80x128xbf16>
    %cst_86 = arith.constant dense<0.000000e+00> : vector<8x128xf32>
    %152 = tpu.matmul %149, %151, %cst_86 {dimension_numbers = #tpu.dot_dimension_numbers<[1], [0], [0], [1], [0, 0, 1, 1], [], []>} : vector<8x80xbf16>, vector<80x128xbf16>, vector<8x128xf32> -> vector<8x128xf32>
    %153 = vector.extract_strided_slice %107 {offsets = [4, 0], sizes = [1, 128], strides = [1, 1]} : vector<10x128xf32> to vector<1x128xf32>
    %154 = vector.broadcast %153 : vector<1x128xf32> to vector<8x128xf32>
    %155 = arith.addf %152, %154 : vector<8x128xf32>
    %156 = math.tanh %155 : vector<8x128xf32>
    %157 = vector.extract_strided_slice %156 {offsets = [0, 0], sizes = [8, 80], strides = [1, 1]} : vector<8x128xf32> to vector<8x80xf32>
    %158 = arith.truncf %157 : vector<8x80xf32> to vector<8x80xbf16>
    %c1_87 = arith.constant 1 : index
    %c5_88 = arith.constant 5 : index
    %c0_89 = arith.constant 0 : index
    %c0_90 = arith.constant 0 : index
    %159 = vector.load %arg2[%c1_87, %c5_88, %c0_89, %c0_90] : memref<3x10x80x128xbf16, #tpu.memory_space<vmem>>, vector<1x1x80x128xbf16>
    %160 = vector.shape_cast %159 : vector<1x1x80x128xbf16> to vector<80x128xbf16>
    %cst_91 = arith.constant dense<0.000000e+00> : vector<8x128xf32>
    %161 = tpu.matmul %158, %160, %cst_91 {dimension_numbers = #tpu.dot_dimension_numbers<[1], [0], [0], [1], [0, 0, 1, 1], [], []>} : vector<8x80xbf16>, vector<80x128xbf16>, vector<8x128xf32> -> vector<8x128xf32>
    %162 = vector.extract_strided_slice %107 {offsets = [5, 0], sizes = [1, 128], strides = [1, 1]} : vector<10x128xf32> to vector<1x128xf32>
    %163 = vector.broadcast %162 : vector<1x128xf32> to vector<8x128xf32>
    %164 = arith.addf %161, %163 : vector<8x128xf32>
    %165 = math.tanh %164 : vector<8x128xf32>
    %166 = vector.extract_strided_slice %165 {offsets = [0, 0], sizes = [8, 80], strides = [1, 1]} : vector<8x128xf32> to vector<8x80xf32>
    %167 = arith.truncf %166 : vector<8x80xf32> to vector<8x80xbf16>
    %c1_92 = arith.constant 1 : index
    %c6_93 = arith.constant 6 : index
    %c0_94 = arith.constant 0 : index
    %c0_95 = arith.constant 0 : index
    %168 = vector.load %arg2[%c1_92, %c6_93, %c0_94, %c0_95] : memref<3x10x80x128xbf16, #tpu.memory_space<vmem>>, vector<1x1x80x128xbf16>
    %169 = vector.shape_cast %168 : vector<1x1x80x128xbf16> to vector<80x128xbf16>
    %cst_96 = arith.constant dense<0.000000e+00> : vector<8x128xf32>
    %170 = tpu.matmul %167, %169, %cst_96 {dimension_numbers = #tpu.dot_dimension_numbers<[1], [0], [0], [1], [0, 0, 1, 1], [], []>} : vector<8x80xbf16>, vector<80x128xbf16>, vector<8x128xf32> -> vector<8x128xf32>
    %171 = vector.extract_strided_slice %107 {offsets = [6, 0], sizes = [1, 128], strides = [1, 1]} : vector<10x128xf32> to vector<1x128xf32>
    %172 = vector.broadcast %171 : vector<1x128xf32> to vector<8x128xf32>
    %173 = arith.addf %170, %172 : vector<8x128xf32>
    %174 = math.tanh %173 : vector<8x128xf32>
    %175 = vector.extract_strided_slice %174 {offsets = [0, 0], sizes = [8, 80], strides = [1, 1]} : vector<8x128xf32> to vector<8x80xf32>
    %176 = arith.truncf %175 : vector<8x80xf32> to vector<8x80xbf16>
    %c1_97 = arith.constant 1 : index
    %c7_98 = arith.constant 7 : index
    %c0_99 = arith.constant 0 : index
    %c0_100 = arith.constant 0 : index
    %177 = vector.load %arg2[%c1_97, %c7_98, %c0_99, %c0_100] : memref<3x10x80x128xbf16, #tpu.memory_space<vmem>>, vector<1x1x80x128xbf16>
    %178 = vector.shape_cast %177 : vector<1x1x80x128xbf16> to vector<80x128xbf16>
    %cst_101 = arith.constant dense<0.000000e+00> : vector<8x128xf32>
    %179 = tpu.matmul %176, %178, %cst_101 {dimension_numbers = #tpu.dot_dimension_numbers<[1], [0], [0], [1], [0, 0, 1, 1], [], []>} : vector<8x80xbf16>, vector<80x128xbf16>, vector<8x128xf32> -> vector<8x128xf32>
    %180 = vector.extract_strided_slice %107 {offsets = [7, 0], sizes = [1, 128], strides = [1, 1]} : vector<10x128xf32> to vector<1x128xf32>
    %181 = vector.broadcast %180 : vector<1x128xf32> to vector<8x128xf32>
    %182 = arith.addf %179, %181 : vector<8x128xf32>
    %183 = arith.negf %182 : vector<8x128xf32>
    %184 = math.exp %183 : vector<8x128xf32>
    %cst_102 = arith.constant 1.000000e+00 : f32
    %185 = vector.broadcast %cst_102 : f32 to vector<8x128xf32>
    %186 = arith.addf %185, %184 : vector<8x128xf32>
    %187 = arith.divf %185, %186 : vector<8x128xf32>
    %c1_103 = arith.constant 1 : index
    %c0_104 = arith.constant 0 : index
    %c128_105 = arith.constant 128 : index
    %188 = vector.load %arg4[%c1_103, %c0_104, %c128_105] : memref<3x8x384xf32, #tpu.memory_space<vmem>>, vector<1x8x128xf32>
    %189 = vector.shape_cast %188 : vector<1x8x128xf32> to vector<8x128xf32>
    %190 = vector.shape_cast %187 : vector<8x128xf32> to vector<1x8x128xf32>
    tpu.vector_store %arg4[%c1_103, %c0_104, %c128_105], %190 {strides = array<i32>} : memref<3x8x384xf32, #tpu.memory_space<vmem>>, vector<1x8x128xf32>,
    %191 = vector.extract_strided_slice %144 {offsets = [0, 0], sizes = [8, 80], strides = [1, 1]} : vector<8x128xf32> to vector<8x80xf32>
    %192 = arith.truncf %191 : vector<8x80xf32> to vector<8x80xbf16>
    %c1_106 = arith.constant 1 : index
    %c8_107 = arith.constant 8 : index
    %c0_108 = arith.constant 0 : index
    %c0_109 = arith.constant 0 : index
    %193 = vector.load %arg2[%c1_106, %c8_107, %c0_108, %c0_109] : memref<3x10x80x128xbf16, #tpu.memory_space<vmem>>, vector<1x1x80x128xbf16>
    %194 = vector.shape_cast %193 : vector<1x1x80x128xbf16> to vector<80x128xbf16>
    %cst_110 = arith.constant dense<0.000000e+00> : vector<8x128xf32>
    %195 = tpu.matmul %192, %194, %cst_110 {dimension_numbers = #tpu.dot_dimension_numbers<[1], [0], [0], [1], [0, 0, 1, 1], [], []>} : vector<8x80xbf16>, vector<80x128xbf16>, vector<8x128xf32> -> vector<8x128xf32>
    %196 = vector.extract_strided_slice %107 {offsets = [8, 0], sizes = [1, 128], strides = [1, 1]} : vector<10x128xf32> to vector<1x128xf32>
    %197 = vector.broadcast %196 : vector<1x128xf32> to vector<8x128xf32>
    %198 = arith.addf %195, %197 : vector<8x128xf32>
    %199 = math.tanh %198 : vector<8x128xf32>
    %200 = vector.extract_strided_slice %199 {offsets = [0, 0], sizes = [8, 80], strides = [1, 1]} : vector<8x128xf32> to vector<8x80xf32>
    %201 = arith.truncf %200 : vector<8x80xf32> to vector<8x80xbf16>
    %c1_111 = arith.constant 1 : index
    %c9_112 = arith.constant 9 : index
    %c0_113 = arith.constant 0 : index
    %c0_114 = arith.constant 0 : index
    %202 = vector.load %arg2[%c1_111, %c9_112, %c0_113, %c0_114] : memref<3x10x80x128xbf16, #tpu.memory_space<vmem>>, vector<1x1x80x128xbf16>
    %203 = vector.shape_cast %202 : vector<1x1x80x128xbf16> to vector<80x128xbf16>
    %cst_115 = arith.constant dense<0.000000e+00> : vector<8x128xf32>
    %204 = tpu.matmul %201, %203, %cst_115 {dimension_numbers = #tpu.dot_dimension_numbers<[1], [0], [0], [1], [0, 0, 1, 1], [], []>} : vector<8x80xbf16>, vector<80x128xbf16>, vector<8x128xf32> -> vector<8x128xf32>
    %205 = vector.extract_strided_slice %107 {offsets = [9, 0], sizes = [1, 128], strides = [1, 1]} : vector<10x128xf32> to vector<1x128xf32>
    %206 = vector.broadcast %205 : vector<1x128xf32> to vector<8x128xf32>
    %207 = arith.addf %204, %206 : vector<8x128xf32>
    %208 = math.tanh %207 : vector<8x128xf32>
    %c1_116 = arith.constant 1 : index
    %c0_117 = arith.constant 0 : index
    %c256_118 = arith.constant 256 : index
    %209 = vector.load %arg4[%c1_116, %c0_117, %c256_118] : memref<3x8x384xf32, #tpu.memory_space<vmem>>, vector<1x8x128xf32>
    %210 = vector.shape_cast %209 : vector<1x8x128xf32> to vector<8x128xf32>
    %211 = vector.shape_cast %208 : vector<8x128xf32> to vector<1x8x128xf32>
    tpu.vector_store %arg4[%c1_116, %c0_117, %c256_118], %211 {strides = array<i32>} : memref<3x8x384xf32, #tpu.memory_space<vmem>>, vector<1x8x128xf32>,
    %c2_119 = arith.constant 2 : index
    %c0_120 = arith.constant 0 : index
    %c0_121 = arith.constant 0 : index
    %212 = vector.load %arg3[%c2_119, %c0_120, %c0_121] : memref<3x10x128xf32, #tpu.memory_space<vmem>>, vector<1x10x128xf32>
    %213 = vector.shape_cast %212 : vector<1x10x128xf32> to vector<10x128xf32>
    %c2_122 = arith.constant 2 : index
    %c0_123 = arith.constant 0 : index
    %c0_124 = arith.constant 0 : index
    %214 = vector.load %arg1[%c2_122, %c0_123, %c0_124] : memref<3x8x80xf32, #tpu.memory_space<vmem>>, vector<1x8x80xf32>
    %215 = vector.shape_cast %214 : vector<1x8x80xf32> to vector<8x80xf32>
    %216 = arith.truncf %215 : vector<8x80xf32> to vector<8x80xbf16>
    %c2_125 = arith.constant 2 : index
    %c0_126 = arith.constant 0 : index
    %c0_127 = arith.constant 0 : index
    %c0_128 = arith.constant 0 : index
    %217 = vector.load %arg2[%c2_125, %c0_126, %c0_127, %c0_128] : memref<3x10x80x128xbf16, #tpu.memory_space<vmem>>, vector<1x1x80x128xbf16>
    %218 = vector.shape_cast %217 : vector<1x1x80x128xbf16> to vector<80x128xbf16>
    %cst_129 = arith.constant dense<0.000000e+00> : vector<8x128xf32>
    %219 = tpu.matmul %216, %218, %cst_129 {dimension_numbers = #tpu.dot_dimension_numbers<[1], [0], [0], [1], [0, 0, 1, 1], [], []>} : vector<8x80xbf16>, vector<80x128xbf16>, vector<8x128xf32> -> vector<8x128xf32>
    %220 = vector.extract_strided_slice %213 {offsets = [0, 0], sizes = [1, 128], strides = [1, 1]} : vector<10x128xf32> to vector<1x128xf32>
    %221 = vector.broadcast %220 : vector<1x128xf32> to vector<8x128xf32>
    %222 = arith.addf %219, %221 : vector<8x128xf32>
    %223 = math.tanh %222 : vector<8x128xf32>
    %224 = vector.extract_strided_slice %223 {offsets = [0, 0], sizes = [8, 80], strides = [1, 1]} : vector<8x128xf32> to vector<8x80xf32>
    %225 = arith.truncf %224 : vector<8x80xf32> to vector<8x80xbf16>
    %c2_130 = arith.constant 2 : index
    %c1_131 = arith.constant 1 : index
    %c0_132 = arith.constant 0 : index
    %c0_133 = arith.constant 0 : index
    %226 = vector.load %arg2[%c2_130, %c1_131, %c0_132, %c0_133] : memref<3x10x80x128xbf16, #tpu.memory_space<vmem>>, vector<1x1x80x128xbf16>
    %227 = vector.shape_cast %226 : vector<1x1x80x128xbf16> to vector<80x128xbf16>
    %cst_134 = arith.constant dense<0.000000e+00> : vector<8x128xf32>
    %228 = tpu.matmul %225, %227, %cst_134 {dimension_numbers = #tpu.dot_dimension_numbers<[1], [0], [0], [1], [0, 0, 1, 1], [], []>} : vector<8x80xbf16>, vector<80x128xbf16>, vector<8x128xf32> -> vector<8x128xf32>
    %229 = vector.extract_strided_slice %213 {offsets = [1, 0], sizes = [1, 128], strides = [1, 1]} : vector<10x128xf32> to vector<1x128xf32>
    %230 = vector.broadcast %229 : vector<1x128xf32> to vector<8x128xf32>
    %231 = arith.addf %228, %230 : vector<8x128xf32>
    %232 = math.tanh %231 : vector<8x128xf32>
    %233 = vector.extract_strided_slice %232 {offsets = [0, 0], sizes = [8, 80], strides = [1, 1]} : vector<8x128xf32> to vector<8x80xf32>
    %234 = arith.truncf %233 : vector<8x80xf32> to vector<8x80xbf16>
    %c2_135 = arith.constant 2 : index
    %c2_136 = arith.constant 2 : index
    %c0_137 = arith.constant 0 : index
    %c0_138 = arith.constant 0 : index
    %235 = vector.load %arg2[%c2_135, %c2_136, %c0_137, %c0_138] : memref<3x10x80x128xbf16, #tpu.memory_space<vmem>>, vector<1x1x80x128xbf16>
    %236 = vector.shape_cast %235 : vector<1x1x80x128xbf16> to vector<80x128xbf16>
    %cst_139 = arith.constant dense<0.000000e+00> : vector<8x128xf32>
    %237 = tpu.matmul %234, %236, %cst_139 {dimension_numbers = #tpu.dot_dimension_numbers<[1], [0], [0], [1], [0, 0, 1, 1], [], []>} : vector<8x80xbf16>, vector<80x128xbf16>, vector<8x128xf32> -> vector<8x128xf32>
    %238 = vector.extract_strided_slice %213 {offsets = [2, 0], sizes = [1, 128], strides = [1, 1]} : vector<10x128xf32> to vector<1x128xf32>
    %239 = vector.broadcast %238 : vector<1x128xf32> to vector<8x128xf32>
    %240 = arith.addf %237, %239 : vector<8x128xf32>
    %241 = math.tanh %240 : vector<8x128xf32>
    %242 = vector.extract_strided_slice %241 {offsets = [0, 0], sizes = [8, 80], strides = [1, 1]} : vector<8x128xf32> to vector<8x80xf32>
    %243 = arith.truncf %242 : vector<8x80xf32> to vector<8x80xbf16>
    %c2_140 = arith.constant 2 : index
    %c3_141 = arith.constant 3 : index
    %c0_142 = arith.constant 0 : index
    %c0_143 = arith.constant 0 : index
    %244 = vector.load %arg2[%c2_140, %c3_141, %c0_142, %c0_143] : memref<3x10x80x128xbf16, #tpu.memory_space<vmem>>, vector<1x1x80x128xbf16>
    %245 = vector.shape_cast %244 : vector<1x1x80x128xbf16> to vector<80x128xbf16>
    %cst_144 = arith.constant dense<0.000000e+00> : vector<8x128xf32>
    %246 = tpu.matmul %243, %245, %cst_144 {dimension_numbers = #tpu.dot_dimension_numbers<[1], [0], [0], [1], [0, 0, 1, 1], [], []>} : vector<8x80xbf16>, vector<80x128xbf16>, vector<8x128xf32> -> vector<8x128xf32>
    %247 = vector.extract_strided_slice %213 {offsets = [3, 0], sizes = [1, 128], strides = [1, 1]} : vector<10x128xf32> to vector<1x128xf32>
    %248 = vector.broadcast %247 : vector<1x128xf32> to vector<8x128xf32>
    %249 = arith.addf %246, %248 : vector<8x128xf32>
    %250 = math.tanh %249 : vector<8x128xf32>
    %c2_145 = arith.constant 2 : index
    %c0_146 = arith.constant 0 : index
    %c0_147 = arith.constant 0 : index
    %251 = vector.load %arg4[%c2_145, %c0_146, %c0_147] : memref<3x8x384xf32, #tpu.memory_space<vmem>>, vector<1x8x128xf32>
    %252 = vector.shape_cast %251 : vector<1x8x128xf32> to vector<8x128xf32>
    %253 = vector.shape_cast %250 : vector<8x128xf32> to vector<1x8x128xf32>
    tpu.vector_store %arg4[%c2_145, %c0_146, %c0_147], %253 {strides = array<i32>} : memref<3x8x384xf32, #tpu.memory_space<vmem>>, vector<1x8x128xf32>,
    %254 = vector.extract_strided_slice %250 {offsets = [0, 0], sizes = [8, 80], strides = [1, 1]} : vector<8x128xf32> to vector<8x80xf32>
    %255 = arith.truncf %254 : vector<8x80xf32> to vector<8x80xbf16>
    %c2_148 = arith.constant 2 : index
    %c4_149 = arith.constant 4 : index
    %c0_150 = arith.constant 0 : index
    %c0_151 = arith.constant 0 : index
    %256 = vector.load %arg2[%c2_148, %c4_149, %c0_150, %c0_151] : memref<3x10x80x128xbf16, #tpu.memory_space<vmem>>, vector<1x1x80x128xbf16>
    %257 = vector.shape_cast %256 : vector<1x1x80x128xbf16> to vector<80x128xbf16>
    %cst_152 = arith.constant dense<0.000000e+00> : vector<8x128xf32>
    %258 = tpu.matmul %255, %257, %cst_152 {dimension_numbers = #tpu.dot_dimension_numbers<[1], [0], [0], [1], [0, 0, 1, 1], [], []>} : vector<8x80xbf16>, vector<80x128xbf16>, vector<8x128xf32> -> vector<8x128xf32>
    %259 = vector.extract_strided_slice %213 {offsets = [4, 0], sizes = [1, 128], strides = [1, 1]} : vector<10x128xf32> to vector<1x128xf32>
    %260 = vector.broadcast %259 : vector<1x128xf32> to vector<8x128xf32>
    %261 = arith.addf %258, %260 : vector<8x128xf32>
    %262 = math.tanh %261 : vector<8x128xf32>
    %263 = vector.extract_strided_slice %262 {offsets = [0, 0], sizes = [8, 80], strides = [1, 1]} : vector<8x128xf32> to vector<8x80xf32>
    %264 = arith.truncf %263 : vector<8x80xf32> to vector<8x80xbf16>
    %c2_153 = arith.constant 2 : index
    %c5_154 = arith.constant 5 : index
    %c0_155 = arith.constant 0 : index
    %c0_156 = arith.constant 0 : index
    %265 = vector.load %arg2[%c2_153, %c5_154, %c0_155, %c0_156] : memref<3x10x80x128xbf16, #tpu.memory_space<vmem>>, vector<1x1x80x128xbf16>
    %266 = vector.shape_cast %265 : vector<1x1x80x128xbf16> to vector<80x128xbf16>
    %cst_157 = arith.constant dense<0.000000e+00> : vector<8x128xf32>
    %267 = tpu.matmul %264, %266, %cst_157 {dimension_numbers = #tpu.dot_dimension_numbers<[1], [0], [0], [1], [0, 0, 1, 1], [], []>} : vector<8x80xbf16>, vector<80x128xbf16>, vector<8x128xf32> -> vector<8x128xf32>
    %268 = vector.extract_strided_slice %213 {offsets = [5, 0], sizes = [1, 128], strides = [1, 1]} : vector<10x128xf32> to vector<1x128xf32>
    %269 = vector.broadcast %268 : vector<1x128xf32> to vector<8x128xf32>
    %270 = arith.addf %267, %269 : vector<8x128xf32>
    %271 = math.tanh %270 : vector<8x128xf32>
    %272 = vector.extract_strided_slice %271 {offsets = [0, 0], sizes = [8, 80], strides = [1, 1]} : vector<8x128xf32> to vector<8x80xf32>
    %273 = arith.truncf %272 : vector<8x80xf32> to vector<8x80xbf16>
    %c2_158 = arith.constant 2 : index
    %c6_159 = arith.constant 6 : index
    %c0_160 = arith.constant 0 : index
    %c0_161 = arith.constant 0 : index
    %274 = vector.load %arg2[%c2_158, %c6_159, %c0_160, %c0_161] : memref<3x10x80x128xbf16, #tpu.memory_space<vmem>>, vector<1x1x80x128xbf16>
    %275 = vector.shape_cast %274 : vector<1x1x80x128xbf16> to vector<80x128xbf16>
    %cst_162 = arith.constant dense<0.000000e+00> : vector<8x128xf32>
    %276 = tpu.matmul %273, %275, %cst_162 {dimension_numbers = #tpu.dot_dimension_numbers<[1], [0], [0], [1], [0, 0, 1, 1], [], []>} : vector<8x80xbf16>, vector<80x128xbf16>, vector<8x128xf32> -> vector<8x128xf32>
    %277 = vector.extract_strided_slice %213 {offsets = [6, 0], sizes = [1, 128], strides = [1, 1]} : vector<10x128xf32> to vector<1x128xf32>
    %278 = vector.broadcast %277 : vector<1x128xf32> to vector<8x128xf32>
    %279 = arith.addf %276, %278 : vector<8x128xf32>
    %280 = math.tanh %279 : vector<8x128xf32>
    %281 = vector.extract_strided_slice %280 {offsets = [0, 0], sizes = [8, 80], strides = [1, 1]} : vector<8x128xf32> to vector<8x80xf32>
    %282 = arith.truncf %281 : vector<8x80xf32> to vector<8x80xbf16>
    %c2_163 = arith.constant 2 : index
    %c7_164 = arith.constant 7 : index
    %c0_165 = arith.constant 0 : index
    %c0_166 = arith.constant 0 : index
    %283 = vector.load %arg2[%c2_163, %c7_164, %c0_165, %c0_166] : memref<3x10x80x128xbf16, #tpu.memory_space<vmem>>, vector<1x1x80x128xbf16>
    %284 = vector.shape_cast %283 : vector<1x1x80x128xbf16> to vector<80x128xbf16>
    %cst_167 = arith.constant dense<0.000000e+00> : vector<8x128xf32>
    %285 = tpu.matmul %282, %284, %cst_167 {dimension_numbers = #tpu.dot_dimension_numbers<[1], [0], [0], [1], [0, 0, 1, 1], [], []>} : vector<8x80xbf16>, vector<80x128xbf16>, vector<8x128xf32> -> vector<8x128xf32>
    %286 = vector.extract_strided_slice %213 {offsets = [7, 0], sizes = [1, 128], strides = [1, 1]} : vector<10x128xf32> to vector<1x128xf32>
    %287 = vector.broadcast %286 : vector<1x128xf32> to vector<8x128xf32>
    %288 = arith.addf %285, %287 : vector<8x128xf32>
    %289 = arith.negf %288 : vector<8x128xf32>
    %290 = math.exp %289 : vector<8x128xf32>
    %cst_168 = arith.constant 1.000000e+00 : f32
    %291 = vector.broadcast %cst_168 : f32 to vector<8x128xf32>
    %292 = arith.addf %291, %290 : vector<8x128xf32>
    %293 = arith.divf %291, %292 : vector<8x128xf32>
    %c2_169 = arith.constant 2 : index
    %c0_170 = arith.constant 0 : index
    %c128_171 = arith.constant 128 : index
    %294 = vector.load %arg4[%c2_169, %c0_170, %c128_171] : memref<3x8x384xf32, #tpu.memory_space<vmem>>, vector<1x8x128xf32>
    %295 = vector.shape_cast %294 : vector<1x8x128xf32> to vector<8x128xf32>
    %296 = vector.shape_cast %293 : vector<8x128xf32> to vector<1x8x128xf32>
    tpu.vector_store %arg4[%c2_169, %c0_170, %c128_171], %296 {strides = array<i32>} : memref<3x8x384xf32, #tpu.memory_space<vmem>>, vector<1x8x128xf32>,
    %297 = vector.extract_strided_slice %250 {offsets = [0, 0], sizes = [8, 80], strides = [1, 1]} : vector<8x128xf32> to vector<8x80xf32>
    %298 = arith.truncf %297 : vector<8x80xf32> to vector<8x80xbf16>
    %c2_172 = arith.constant 2 : index
    %c8_173 = arith.constant 8 : index
    %c0_174 = arith.constant 0 : index
    %c0_175 = arith.constant 0 : index
    %299 = vector.load %arg2[%c2_172, %c8_173, %c0_174, %c0_175] : memref<3x10x80x128xbf16, #tpu.memory_space<vmem>>, vector<1x1x80x128xbf16>
    %300 = vector.shape_cast %299 : vector<1x1x80x128xbf16> to vector<80x128xbf16>
    %cst_176 = arith.constant dense<0.000000e+00> : vector<8x128xf32>
    %301 = tpu.matmul %298, %300, %cst_176 {dimension_numbers = #tpu.dot_dimension_numbers<[1], [0], [0], [1], [0, 0, 1, 1], [], []>} : vector<8x80xbf16>, vector<80x128xbf16>, vector<8x128xf32> -> vector<8x128xf32>
    %302 = vector.extract_strided_slice %213 {offsets = [8, 0], sizes = [1, 128], strides = [1, 1]} : vector<10x128xf32> to vector<1x128xf32>
    %303 = vector.broadcast %302 : vector<1x128xf32> to vector<8x128xf32>
    %304 = arith.addf %301, %303 : vector<8x128xf32>
    %305 = math.tanh %304 : vector<8x128xf32>
    %306 = vector.extract_strided_slice %305 {offsets = [0, 0], sizes = [8, 80], strides = [1, 1]} : vector<8x128xf32> to vector<8x80xf32>
    %307 = arith.truncf %306 : vector<8x80xf32> to vector<8x80xbf16>
    %c2_177 = arith.constant 2 : index
    %c9_178 = arith.constant 9 : index
    %c0_179 = arith.constant 0 : index
    %c0_180 = arith.constant 0 : index
    %308 = vector.load %arg2[%c2_177, %c9_178, %c0_179, %c0_180] : memref<3x10x80x128xbf16, #tpu.memory_space<vmem>>, vector<1x1x80x128xbf16>
    %309 = vector.shape_cast %308 : vector<1x1x80x128xbf16> to vector<80x128xbf16>
    %cst_181 = arith.constant dense<0.000000e+00> : vector<8x128xf32>
    %310 = tpu.matmul %307, %309, %cst_181 {dimension_numbers = #tpu.dot_dimension_numbers<[1], [0], [0], [1], [0, 0, 1, 1], [], []>} : vector<8x80xbf16>, vector<80x128xbf16>, vector<8x128xf32> -> vector<8x128xf32>
    %311 = vector.extract_strided_slice %213 {offsets = [9, 0], sizes = [1, 128], strides = [1, 1]} : vector<10x128xf32> to vector<1x128xf32>
    %312 = vector.broadcast %311 : vector<1x128xf32> to vector<8x128xf32>
    %313 = arith.addf %310, %312 : vector<8x128xf32>
    %314 = math.tanh %313 : vector<8x128xf32>
    %c2_182 = arith.constant 2 : index
    %c0_183 = arith.constant 0 : index
    %c256_184 = arith.constant 256 : index
    %315 = vector.load %arg4[%c2_182, %c0_183, %c256_184] : memref<3x8x384xf32, #tpu.memory_space<vmem>>, vector<1x8x128xf32>
    %316 = vector.shape_cast %315 : vector<1x8x128xf32> to vector<8x128xf32>
    %317 = vector.shape_cast %314 : vector<8x128xf32> to vector<1x8x128xf32>
    tpu.vector_store %arg4[%c2_182, %c0_183, %c256_184], %317 {strides = array<i32>} : memref<3x8x384xf32, #tpu.memory_space<vmem>>, vector<1x8x128xf32>,
    return
  }
  func.func @transform_0(%arg0: i32) -> (i32, i32, i32) {
    %c0_i32 = arith.constant 0 : i32
    %c0_i32_0 = arith.constant 0 : i32
    %c0_i32_1 = arith.constant 0 : i32
    return %c0_i32, %arg0, %c0_i32_0 : i32, i32, i32
  }
  func.func @transform_1(%arg0: i32) -> (i32, i32, i32, i32) {
    %c0_i32 = arith.constant 0 : i32
    %c0_i32_0 = arith.constant 0 : i32
    %c0_i32_1 = arith.constant 0 : i32
    %c0_i32_2 = arith.constant 0 : i32
    %c0_i32_3 = arith.constant 0 : i32
    return %c0_i32, %c0_i32_0, %c0_i32_1, %c0_i32_2 : i32, i32, i32, i32
  }
  func.func @transform_2(%arg0: i32) -> (i32, i32, i32) {
    %c0_i32 = arith.constant 0 : i32
    %c0_i32_0 = arith.constant 0 : i32
    %c0_i32_1 = arith.constant 0 : i32
    %c0_i32_2 = arith.constant 0 : i32
    return %c0_i32, %c0_i32_0, %c0_i32_1 : i32, i32, i32
  }
  func.func @transform_3(%arg0: i32) -> (i32, i32, i32) {
    %c0_i32 = arith.constant 0 : i32
    %c0_i32_0 = arith.constant 0 : i32
    %c0_i32_1 = arith.constant 0 : i32
    return %c0_i32, %arg0, %c0_i32_0 : i32, i32, i32
  }
}

</mosaic_0001>

<llo_original>
// kernel: forward.1
$region0: #{forward.1}
  #allocation0 [shape = 'u32[]', space=smem, size = 0x4, offset = 0x4, fixed_abs, tag = 'smem constant byte address 0x4 - core index']
  #allocation1 [shape = 'u32[144,128]{1,0:T(1,128)}', space=vmem, size = 0x12000, scoped, tag = 'internal scratch']
  %s0 = inlined_call_operand.vmem [shape: f32[3,8,80], index: 0, kind: input, shape index: {}]
  %s1 = inlined_call_operand.hbm [shape: bf16[3,10,80,128], index: 1, kind: input, shape index: {}]
  %s2 = inlined_call_operand.vmem [shape: f32[3,10,128], index: 2, kind: input, shape index: {}]
  %s3 = inlined_call_operand.vmem [shape: f32[3,8,384], index: 3, kind: output, shape index: {}]
  %s4 = sld [smem:[#allocation0]]
  $region26: #{forward.1} parent=0
    _
  %s6 = ssub.s32 1, %s4
  %s7 = scalar_select 0, %s6, %s4
  $region1: #{forward.1} parent=0
    #allocation2 [shape = 'u8[614400]{0}', space=vmem, size = 0x96000, scoped, tag = 'input window, operand 1, single buffered']
    #allocation3 [shape = 's32[1]{0}', space=sflag, size = 0x4, scoped, tag = 'scoped memory for forward.1']
    %8 = vsyncpa [#allocation3], 0
    // Predicated region
    $region2: #{forward.1} parent=1 // pred_check
      _
    $region3: #{forward.1} parent=1 // pred_check_branch
      %10 = sbr.rel (0) target = $region5
    $region4: #{forward.1} parent=1 // pred_region
      _
    $region5: #{forward.1} parent=1 // pred_fallthru
      _
    // Predicated region
    $region6: #{forward.1} parent=1 // pred_check
      _
    $region7: #{forward.1} parent=1 // pred_check_branch
      %12 = sbr.rel (0) target = $region9
    $region8: #{forward.1} parent=1 // pred_region
      %s14 = ssub.s32 19200, 19200
      %15 = vsyncadd [#allocation3], %s14
      %s16 = sshll.u32 [#allocation2], 4
      %s17 = int_to_ptr.vmem [resolvable:$true] %s16
      %22 = dma.hbm_to_vmem [thread:$0]  %s1, 19200, %s17, [#allocation3], 64, 64, 4
    $region9: #{forward.1} parent=1 // pred_fallthru
      _
    // Predicated region
    $region10: #{forward.1} parent=1 // pred_check
      _
    $region11: #{forward.1} parent=1 // pred_check_branch
      %24 = sbr.rel (0) target = $region13
    $region12: #{forward.1} parent=1 // pred_region
      _
    $region13: #{forward.1} parent=1 // pred_fallthru
      _
    // Predicated region
    $region14: #{forward.1} parent=1 // pred_check
      _
    $region15: #{forward.1} parent=1 // pred_check_branch
      %26 = sbr.rel (0) target = $region17
    $region16: #{forward.1} parent=1 // pred_region
      %27 = dma.done [#allocation3], 19200
    $region17: #{forward.1} parent=1 // pred_fallthru
      _
    %v29 = vld [vmem:[%s2] sm:$0xff]
    %v30 = vld [vmem:[%s2 + $0x8] sm:$0x3]
    %v31 = vld [vmem:[%s0] sm:$0xff]
    %v32 = vpack.c.bf16 %v31, %v31
    %v33 = vld [vmem:[#allocation2] sm:$0xf]
    %v34 = vld [vmem:[#allocation2 + $0x4] sm:$0xf]
    %v35 = vld [vmem:[#allocation2 + $0x8] sm:$0xf]
    %v36 = vld [vmem:[#allocation2 + $0xc] sm:$0xf]
    %v37 = vld [vmem:[#allocation2 + $0x10] sm:$0xf]
    %v38 = vld [vmem:[#allocation2 + $0x14] sm:$0xf]
    %v39 = vld [vmem:[#allocation2 + $0x18] sm:$0xf]
    %v40 = vld [vmem:[#allocation2 + $0x1c] sm:$0xf]
    %v41 = vld [vmem:[#allocation2 + $0x20] sm:$0xf]
    %v42 = vld [vmem:[#allocation2 + $0x24] sm:$0xf]
    %v43 = vlaneseq
    %v44 = vshrl.u32 %v43, 7
    %v45 = vsub.s32 0, %v44
    %v46 = vrot.slane %v29, %v45
    %v57 = vunpack.c.l.b16 %v33
    %v58 = vunpack.c.l.b16 %v34
    %v59 = vunpack.c.l.b16 %v35
    %v60 = vunpack.c.l.b16 %v36
    %v61 = vunpack.c.l.b16 %v37
    %v62 = vunpack.c.l.b16 %v38
    %v63 = vunpack.c.l.b16 %v39
    %v64 = vunpack.c.l.b16 %v40
    %v65 = vunpack.c.l.b16 %v41
    %v66 = vunpack.c.l.b16 %v42
    %v67 = vpack.c.b16 %v58, %v57
    %v68 = vpack.c.b16 %v60, %v59
    %v69 = vpack.c.b16 %v62, %v61
    %v70 = vpack.c.b16 %v64, %v63
    %v71 = vpack.c.b16 %v66, %v65
    %vm77 = vcmask 654336
    %v79 = vsel %vm77, %v32, 0
    %81 = vmatprep.subr.bf16.mxu0 0
    %82 = vmatpush1.bf16.msra.mxu0 0
    %83 = vmatprep.subr.bf16.mxu0 0
    %84 = vmatpush1.bf16.msra.mxu0 0
    %85 = vmatprep.subr.bf16.mxu0 0
    %86 = vmatpush1.bf16.msra.mxu0 0
    %87 = vmatprep.subr.bf16.mxu0 0
    %88 = vmatpush1.bf16.msra.mxu0 %v71
    %89 = vmatprep.subr.bf16.mxu0 0
    %90 = vmatpush1.bf16.msra.mxu0 %v70
    %91 = vmatprep.subr.bf16.mxu0 0
    %92 = vmatpush1.bf16.msra.mxu0 %v69
    %93 = vmatprep.subr.bf16.mxu0 0
    %94 = vmatpush1.bf16.msra.mxu0 %v68
    %95 = vmatprep.subr.bf16.mxu0 0
    %96 = vmatpush1.bf16.msra.mxu0 %v67
    %97 = vmatprep.subr.bf16.mxu0 0
    %98 = vmatpush2.bf16.msra.mxu0 0
    %99 = vmatprep.subr.bf16.mxu0 0
    %100 = vmatpush2.bf16.msra.mxu0 0
    %101 = vmatprep.subr.bf16.mxu0 0
    %102 = vmatpush2.bf16.msra.mxu0 0
    %103 = vmatprep.subr.bf16.mxu0 0
    %104 = vmatpush2.bf16.msra.mxu0 0
    %105 = vmatprep.subr.bf16.mxu0 0
    %106 = vmatpush2.bf16.msra.mxu0 0
    %107 = vmatprep.subr.bf16.mxu0 0
    %108 = vmatpush2.bf16.msra.mxu0 0
    %109 = vmatprep.subr.bf16.mxu0 0
    %110 = vmatpush2.bf16.msra.mxu0 0
    %111 = vmatprep.subr.bf16.mxu0 0
    %112 = vmatpush2.bf16.msra.mxu0 0
    %113 = vmatprep.mubr.bf16.mxu0 0
    %114 = vmatmul.mubr.bf16.gmra.mxu0 %v79
    %v115 = vpop.f32.mrf.mxu0
    %v116 = vadd.f32 %v46, %v115
    %v117 = vpop.f32.mrf.mxu0
    %v118 = vpop.f32.mrf.mxu0
    %v119 = vpop.f32.mrf.mxu0
    %120 = vdwg.mxu0
    %v121 = vtanh.pop %v116
    %v122 = vpack.c.bf16 %v121, %v121
    %s123 = scalar_lea.vmem [#allocation2], 40
    %v124 = vld [vmem:[%s123] sm:$0xf]
    %v125 = vld [vmem:[%s123 + $0x4] sm:$0xf]
    %v126 = vld [vmem:[%s123 + $0x8] sm:$0xf]
    %v127 = vld [vmem:[%s123 + $0xc] sm:$0xf]
    %v128 = vld [vmem:[%s123 + $0x10] sm:$0xf]
    %v129 = vld [vmem:[%s123 + $0x14] sm:$0xf]
    %v130 = vld [vmem:[%s123 + $0x18] sm:$0xf]
    %v131 = vld [vmem:[%s123 + $0x1c] sm:$0xf]
    %v132 = vld [vmem:[%s123 + $0x20] sm:$0xf]
    %v133 = vld [vmem:[%s123 + $0x24] sm:$0xf]
    %v134 = vlaneseq
    %v135 = vshrl.u32 %v134, 7
    %v136 = vsub.s32 1, %v135
    %v137 = vrot.slane %v29, %v136
    %v148 = vunpack.c.l.b16 %v124
    %v149 = vunpack.c.l.b16 %v125
    %v150 = vunpack.c.l.b16 %v126
    %v151 = vunpack.c.l.b16 %v127
    %v152 = vunpack.c.l.b16 %v128
    %v153 = vunpack.c.l.b16 %v129
    %v154 = vunpack.c.l.b16 %v130
    %v155 = vunpack.c.l.b16 %v131
    %v156 = vunpack.c.l.b16 %v132
    %v157 = vunpack.c.l.b16 %v133
    %v158 = vpack.c.b16 %v149, %v148
    %v159 = vpack.c.b16 %v151, %v150
    %v160 = vpack.c.b16 %v153, %v152
    %v161 = vpack.c.b16 %v155, %v154
    %v162 = vpack.c.b16 %v157, %v156
    %v169 = vsel %vm77, %v122, 0
    %171 = vmatprep.subr.bf16.mxu0 0
    %172 = vmatpush1.bf16.msra.mxu0 0
    %173 = vmatprep.subr.bf16.mxu0 0
    %174 = vmatpush1.bf16.msra.mxu0 0
    %175 = vmatprep.subr.bf16.mxu0 0
    %176 = vmatpush1.bf16.msra.mxu0 0
    %177 = vmatprep.subr.bf16.mxu0 0
    %178 = vmatpush1.bf16.msra.mxu0 %v162
    %179 = vmatprep.subr.bf16.mxu0 0
    %180 = vmatpush1.bf16.msra.mxu0 %v161
    %181 = vmatprep.subr.bf16.mxu0 0
    %182 = vmatpush1.bf16.msra.mxu0 %v160
    %183 = vmatprep.subr.bf16.mxu0 0
    %184 = vmatpush1.bf16.msra.mxu0 %v159
    %185 = vmatprep.subr.bf16.mxu0 0
    %186 = vmatpush1.bf16.msra.mxu0 %v158
    %187 = vmatprep.subr.bf16.mxu0 0
    %188 = vmatpush2.bf16.msra.mxu0 0
    %189 = vmatprep.subr.bf16.mxu0 0
    %190 = vmatpush2.bf16.msra.mxu0 0
    %191 = vmatprep.subr.bf16.mxu0 0
    %192 = vmatpush2.bf16.msra.mxu0 0
    %193 = vmatprep.subr.bf16.mxu0 0
    %194 = vmatpush2.bf16.msra.mxu0 0
    %195 = vmatprep.subr.bf16.mxu0 0
    %196 = vmatpush2.bf16.msra.mxu0 0
    %197 = vmatprep.subr.bf16.mxu0 0
    %198 = vmatpush2.bf16.msra.mxu0 0
    %199 = vmatprep.subr.bf16.mxu0 0
    %200 = vmatpush2.bf16.msra.mxu0 0
    %201 = vmatprep.subr.bf16.mxu0 0
    %202 = vmatpush2.bf16.msra.mxu0 0
    %203 = vmatprep.mubr.bf16.mxu0 0
    %204 = vmatmul.mubr.bf16.gmra.mxu0 %v169
    %v205 = vpop.f32.mrf.mxu0
    %v206 = vadd.f32 %v137, %v205
    %v207 = vpop.f32.mrf.mxu0
    %v208 = vpop.f32.mrf.mxu0
    %v209 = vpop.f32.mrf.mxu0
    %210 = vdwg.mxu0
    %v211 = vtanh.pop %v206
    %v212 = vpack.c.bf16 %v211, %v211
    %s213 = scalar_lea.vmem [#allocation2], 80
    %v214 = vld [vmem:[%s213] sm:$0xf]
    %v215 = vld [vmem:[%s213 + $0x4] sm:$0xf]
    %v216 = vld [vmem:[%s213 + $0x8] sm:$0xf]
    %v217 = vld [vmem:[%s213 + $0xc] sm:$0xf]
    %v218 = vld [vmem:[%s213 + $0x10] sm:$0xf]
    %v219 = vld [vmem:[%s213 + $0x14] sm:$0xf]
    %v220 = vld [vmem:[%s213 + $0x18] sm:$0xf]
    %v221 = vld [vmem:[%s213 + $0x1c] sm:$0xf]
    %v222 = vld [vmem:[%s213 + $0x20] sm:$0xf]
    %v223 = vld [vmem:[%s213 + $0x24] sm:$0xf]
    %v224 = vlaneseq
    %v225 = vshrl.u32 %v224, 7
    %v226 = vsub.s32 2, %v225
    %v227 = vrot.slane %v29, %v226
    %v238 = vunpack.c.l.b16 %v214
    %v239 = vunpack.c.l.b16 %v215
    %v240 = vunpack.c.l.b16 %v216
    %v241 = vunpack.c.l.b16 %v217
    %v242 = vunpack.c.l.b16 %v218
    %v243 = vunpack.c.l.b16 %v219
    %v244 = vunpack.c.l.b16 %v220
    %v245 = vunpack.c.l.b16 %v221
    %v246 = vunpack.c.l.b16 %v222
    %v247 = vunpack.c.l.b16 %v223
    %v248 = vpack.c.b16 %v239, %v238
    %v249 = vpack.c.b16 %v241, %v240
    %v250 = vpack.c.b16 %v243, %v242
    %v251 = vpack.c.b16 %v245, %v244
    %v252 = vpack.c.b16 %v247, %v246
    %v259 = vsel %vm77, %v212, 0
    %261 = vmatprep.subr.bf16.mxu0 0
    %262 = vmatpush1.bf16.msra.mxu0 0
    %263 = vmatprep.subr.bf16.mxu0 0
    %264 = vmatpush1.bf16.msra.mxu0 0
    %265 = vmatprep.subr.bf16.mxu0 0
    %266 = vmatpush1.bf16.msra.mxu0 0
    %267 = vmatprep.subr.bf16.mxu0 0
    %268 = vmatpush1.bf16.msra.mxu0 %v252
    %269 = vmatprep.subr.bf16.mxu0 0
    %270 = vmatpush1.bf16.msra.mxu0 %v251
    %271 = vmatprep.subr.bf16.mxu0 0
    %272 = vmatpush1.bf16.msra.mxu0 %v250
    %273 = vmatprep.subr.bf16.mxu0 0
    %274 = vmatpush1.bf16.msra.mxu0 %v249
    %275 = vmatprep.subr.bf16.mxu0 0
    %276 = vmatpush1.bf16.msra.mxu0 %v248
    %277 = vmatprep.subr.bf16.mxu0 0
    %278 = vmatpush2.bf16.msra.mxu0 0
    %279 = vmatprep.subr.bf16.mxu0 0
    %280 = vmatpush2.bf16.msra.mxu0 0
    %281 = vmatprep.subr.bf16.mxu0 0
    %282 = vmatpush2.bf16.msra.mxu0 0
    %283 = vmatprep.subr.bf16.mxu0 0
    %284 = vmatpush2.bf16.msra.mxu0 0
    %285 = vmatprep.subr.bf16.mxu0 0
    %286 = vmatpush2.bf16.msra.mxu0 0
    %287 = vmatprep.subr.bf16.mxu0 0
    %288 = vmatpush2.bf16.msra.mxu0 0
    %289 = vmatprep.subr.bf16.mxu0 0
    %290 = vmatpush2.bf16.msra.mxu0 0
    %291 = vmatprep.subr.bf16.mxu0 0
    %292 = vmatpush2.bf16.msra.mxu0 0
    %293 = vmatprep.mubr.bf16.mxu0 0
    %294 = vmatmul.mubr.bf16.gmra.mxu0 %v259
    %v295 = vpop.f32.mrf.mxu0
    %v296 = vadd.f32 %v227, %v295
    %v297 = vpop.f32.mrf.mxu0
    %v298 = vpop.f32.mrf.mxu0
    %v299 = vpop.f32.mrf.mxu0
    %300 = vdwg.mxu0
    %v301 = vtanh.pop %v296
    %v302 = vpack.c.bf16 %v301, %v301
    %s303 = scalar_lea.vmem [#allocation2], 120
    %v304 = vld [vmem:[%s303] sm:$0xf]
    %v305 = vld [vmem:[%s303 + $0x4] sm:$0xf]
    %v306 = vld [vmem:[%s303 + $0x8] sm:$0xf]
    %v307 = vld [vmem:[%s303 + $0xc] sm:$0xf]
    %v308 = vld [vmem:[%s303 + $0x10] sm:$0xf]
    %v309 = vld [vmem:[%s303 + $0x14] sm:$0xf]
    %v310 = vld [vmem:[%s303 + $0x18] sm:$0xf]
    %v311 = vld [vmem:[%s303 + $0x1c] sm:$0xf]
    %v312 = vld [vmem:[%s303 + $0x20] sm:$0xf]
    %v313 = vld [vmem:[%s303 + $0x24] sm:$0xf]
    %v314 = vlaneseq
    %v315 = vshrl.u32 %v314, 7
    %v316 = vsub.s32 3, %v315
    %v317 = vrot.slane %v29, %v316
    %v328 = vunpack.c.l.b16 %v304
    %v329 = vunpack.c.l.b16 %v305
    %v330 = vunpack.c.l.b16 %v306
    %v331 = vunpack.c.l.b16 %v307
    %v332 = vunpack.c.l.b16 %v308
    %v333 = vunpack.c.l.b16 %v309
    %v334 = vunpack.c.l.b16 %v310
    %v335 = vunpack.c.l.b16 %v311
    %v336 = vunpack.c.l.b16 %v312
    %v337 = vunpack.c.l.b16 %v313
    %v338 = vpack.c.b16 %v329, %v328
    %v339 = vpack.c.b16 %v331, %v330
    %v340 = vpack.c.b16 %v333, %v332
    %v341 = vpack.c.b16 %v335, %v334
    %v342 = vpack.c.b16 %v337, %v336
    %v349 = vsel %vm77, %v302, 0
    %351 = vmatprep.subr.bf16.mxu0 0
    %352 = vmatpush1.bf16.msra.mxu0 0
    %353 = vmatprep.subr.bf16.mxu0 0
    %354 = vmatpush1.bf16.msra.mxu0 0
    %355 = vmatprep.subr.bf16.mxu0 0
    %356 = vmatpush1.bf16.msra.mxu0 0
    %357 = vmatprep.subr.bf16.mxu0 0
    %358 = vmatpush1.bf16.msra.mxu0 %v342
    %359 = vmatprep.subr.bf16.mxu0 0
    %360 = vmatpush1.bf16.msra.mxu0 %v341
    %361 = vmatprep.subr.bf16.mxu0 0
    %362 = vmatpush1.bf16.msra.mxu0 %v340
    %363 = vmatprep.subr.bf16.mxu0 0
    %364 = vmatpush1.bf16.msra.mxu0 %v339
    %365 = vmatprep.subr.bf16.mxu0 0
    %366 = vmatpush1.bf16.msra.mxu0 %v338
    %367 = vmatprep.subr.bf16.mxu0 0
    %368 = vmatpush2.bf16.msra.mxu0 0
    %369 = vmatprep.subr.bf16.mxu0 0
    %370 = vmatpush2.bf16.msra.mxu0 0
    %371 = vmatprep.subr.bf16.mxu0 0
    %372 = vmatpush2.bf16.msra.mxu0 0
    %373 = vmatprep.subr.bf16.mxu0 0
    %374 = vmatpush2.bf16.msra.mxu0 0
    %375 = vmatprep.subr.bf16.mxu0 0
    %376 = vmatpush2.bf16.msra.mxu0 0
    %377 = vmatprep.subr.bf16.mxu0 0
    %378 = vmatpush2.bf16.msra.mxu0 0
    %379 = vmatprep.subr.bf16.mxu0 0
    %380 = vmatpush2.bf16.msra.mxu0 0
    %381 = vmatprep.subr.bf16.mxu0 0
    %382 = vmatpush2.bf16.msra.mxu0 0
    %383 = vmatprep.mubr.bf16.mxu0 0
    %384 = vmatmul.mubr.bf16.gmra.mxu0 %v349
    %v385 = vpop.f32.mrf.mxu0
    %v386 = vadd.f32 %v317, %v385
    %v387 = vpop.f32.mrf.mxu0
    %v388 = vpop.f32.mrf.mxu0
    %v389 = vpop.f32.mrf.mxu0
    %390 = vdwg.mxu0
    %v391 = vtanh.pop %v386
    %392 = vst [vmem:[%s3] sm:$0xff] %v391
    %v393 = vpack.c.bf16 %v391, %v391
    %s394 = scalar_lea.vmem [#allocation2], 160
    %v395 = vld [vmem:[%s394] sm:$0xf]
    %v396 = vld [vmem:[%s394 + $0x4] sm:$0xf]
    %v397 = vld [vmem:[%s394 + $0x8] sm:$0xf]
    %v398 = vld [vmem:[%s394 + $0xc] sm:$0xf]
    %v399 = vld [vmem:[%s394 + $0x10] sm:$0xf]
    %v400 = vld [vmem:[%s394 + $0x14] sm:$0xf]
    %v401 = vld [vmem:[%s394 + $0x18] sm:$0xf]
    %v402 = vld [vmem:[%s394 + $0x1c] sm:$0xf]
    %v403 = vld [vmem:[%s394 + $0x20] sm:$0xf]
    %v404 = vld [vmem:[%s394 + $0x24] sm:$0xf]
    %v405 = vlaneseq
    %v406 = vshrl.u32 %v405, 7
    %v407 = vsub.s32 4, %v406
    %v408 = vrot.slane %v29, %v407
    %v419 = vunpack.c.l.b16 %v395
    %v420 = vunpack.c.l.b16 %v396
    %v421 = vunpack.c.l.b16 %v397
    %v422 = vunpack.c.l.b16 %v398
    %v423 = vunpack.c.l.b16 %v399
    %v424 = vunpack.c.l.b16 %v400
    %v425 = vunpack.c.l.b16 %v401
    %v426 = vunpack.c.l.b16 %v402
    %v427 = vunpack.c.l.b16 %v403
    %v428 = vunpack.c.l.b16 %v404
    %v429 = vpack.c.b16 %v420, %v419
    %v430 = vpack.c.b16 %v422, %v421
    %v431 = vpack.c.b16 %v424, %v423
    %v432 = vpack.c.b16 %v426, %v425
    %v433 = vpack.c.b16 %v428, %v427
    %v440 = vsel %vm77, %v393, 0
    %442 = vmatprep.subr.bf16.mxu0 0
    %443 = vmatpush1.bf16.msra.mxu0 0
    %444 = vmatprep.subr.bf16.mxu0 0
    %445 = vmatpush1.bf16.msra.mxu0 0
    %446 = vmatprep.subr.bf16.mxu0 0
    %447 = vmatpush1.bf16.msra.mxu0 0
    %448 = vmatprep.subr.bf16.mxu0 0
    %449 = vmatpush1.bf16.msra.mxu0 %v433
    %450 = vmatprep.subr.bf16.mxu0 0
    %451 = vmatpush1.bf16.msra.mxu0 %v432
    %452 = vmatprep.subr.bf16.mxu0 0
    %453 = vmatpush1.bf16.msra.mxu0 %v431
    %454 = vmatprep.subr.bf16.mxu0 0
    %455 = vmatpush1.bf16.msra.mxu0 %v430
    %456 = vmatprep.subr.bf16.mxu0 0
    %457 = vmatpush1.bf16.msra.mxu0 %v429
    %458 = vmatprep.subr.bf16.mxu0 0
    %459 = vmatpush2.bf16.msra.mxu0 0
    %460 = vmatprep.subr.bf16.mxu0 0
    %461 = vmatpush2.bf16.msra.mxu0 0
    %462 = vmatprep.subr.bf16.mxu0 0
    %463 = vmatpush2.bf16.msra.mxu0 0
    %464 = vmatprep.subr.bf16.mxu0 0
    %465 = vmatpush2.bf16.msra.mxu0 0
    %466 = vmatprep.subr.bf16.mxu0 0
    %467 = vmatpush2.bf16.msra.mxu0 0
    %468 = vmatprep.subr.bf16.mxu0 0
    %469 = vmatpush2.bf16.msra.mxu0 0
    %470 = vmatprep.subr.bf16.mxu0 0
    %471 = vmatpush2.bf16.msra.mxu0 0
    %472 = vmatprep.subr.bf16.mxu0 0
    %473 = vmatpush2.bf16.msra.mxu0 0
    %474 = vmatprep.mubr.bf16.mxu0 0
    %475 = vmatmul.mubr.bf16.gmra.mxu0 %v440
    %v476 = vpop.f32.mrf.mxu0
    %v477 = vadd.f32 %v408, %v476
    %v478 = vpop.f32.mrf.mxu0
    %v479 = vpop.f32.mrf.mxu0
    %v480 = vpop.f32.mrf.mxu0
    %481 = vdwg.mxu0
    %v482 = vtanh.pop %v477
    %v483 = vpack.c.bf16 %v482, %v482
    %s484 = scalar_lea.vmem [#allocation2], 200
    %v485 = vld [vmem:[%s484] sm:$0xf]
    %v486 = vld [vmem:[%s484 + $0x4] sm:$0xf]
    %v487 = vld [vmem:[%s484 + $0x8] sm:$0xf]
    %v488 = vld [vmem:[%s484 + $0xc] sm:$0xf]
    %v489 = vld [vmem:[%s484 + $0x10] sm:$0xf]
    %v490 = vld [vmem:[%s484 + $0x14] sm:$0xf]
    %v491 = vld [vmem:[%s484 + $0x18] sm:$0xf]
    %v492 = vld [vmem:[%s484 + $0x1c] sm:$0xf]
    %v493 = vld [vmem:[%s484 + $0x20] sm:$0xf]
    %v494 = vld [vmem:[%s484 + $0x24] sm:$0xf]
    %v495 = vlaneseq
    %v496 = vshrl.u32 %v495, 7
    %v497 = vsub.s32 5, %v496
    %v498 = vrot.slane %v29, %v497
    %v509 = vunpack.c.l.b16 %v485
    %v510 = vunpack.c.l.b16 %v486
    %v511 = vunpack.c.l.b16 %v487
    %v512 = vunpack.c.l.b16 %v488
    %v513 = vunpack.c.l.b16 %v489
    %v514 = vunpack.c.l.b16 %v490
    %v515 = vunpack.c.l.b16 %v491
    %v516 = vunpack.c.l.b16 %v492
    %v517 = vunpack.c.l.b16 %v493
    %v518 = vunpack.c.l.b16 %v494
    %v519 = vpack.c.b16 %v510, %v509
    %v520 = vpack.c.b16 %v512, %v511
    %v521 = vpack.c.b16 %v514, %v513
    %v522 = vpack.c.b16 %v516, %v515
    %v523 = vpack.c.b16 %v518, %v517
    %v530 = vsel %vm77, %v483, 0
    %532 = vmatprep.subr.bf16.mxu0 0
    %533 = vmatpush1.bf16.msra.mxu0 0
    %534 = vmatprep.subr.bf16.mxu0 0
    %535 = vmatpush1.bf16.msra.mxu0 0
    %536 = vmatprep.subr.bf16.mxu0 0
    %537 = vmatpush1.bf16.msra.mxu0 0
    %538 = vmatprep.subr.bf16.mxu0 0
    %539 = vmatpush1.bf16.msra.mxu0 %v523
    %540 = vmatprep.subr.bf16.mxu0 0
    %541 = vmatpush1.bf16.msra.mxu0 %v522
    %542 = vmatprep.subr.bf16.mxu0 0
    %543 = vmatpush1.bf16.msra.mxu0 %v521
    %544 = vmatprep.subr.bf16.mxu0 0
    %545 = vmatpush1.bf16.msra.mxu0 %v520
    %546 = vmatprep.subr.bf16.mxu0 0
    %547 = vmatpush1.bf16.msra.mxu0 %v519
    %548 = vmatprep.subr.bf16.mxu0 0
    %549 = vmatpush2.bf16.msra.mxu0 0
    %550 = vmatprep.subr.bf16.mxu0 0
    %551 = vmatpush2.bf16.msra.mxu0 0
    %552 = vmatprep.subr.bf16.mxu0 0
    %553 = vmatpush2.bf16.msra.mxu0 0
    %554 = vmatprep.subr.bf16.mxu0 0
    %555 = vmatpush2.bf16.msra.mxu0 0
    %556 = vmatprep.subr.bf16.mxu0 0
    %557 = vmatpush2.bf16.msra.mxu0 0
    %558 = vmatprep.subr.bf16.mxu0 0
    %559 = vmatpush2.bf16.msra.mxu0 0
    %560 = vmatprep.subr.bf16.mxu0 0
    %561 = vmatpush2.bf16.msra.mxu0 0
    %562 = vmatprep.subr.bf16.mxu0 0
    %563 = vmatpush2.bf16.msra.mxu0 0
    %564 = vmatprep.mubr.bf16.mxu0 0
    %565 = vmatmul.mubr.bf16.gmra.mxu0 %v530
    %v566 = vpop.f32.mrf.mxu0
    %v567 = vadd.f32 %v498, %v566
    %v568 = vpop.f32.mrf.mxu0
    %v569 = vpop.f32.mrf.mxu0
    %v570 = vpop.f32.mrf.mxu0
    %571 = vdwg.mxu0
    %v572 = vtanh.pop %v567
    %v573 = vpack.c.bf16 %v572, %v572
    %s574 = scalar_lea.vmem [#allocation2], 240
    %v575 = vld [vmem:[%s574] sm:$0xf]
    %v576 = vld [vmem:[%s574 + $0x4] sm:$0xf]
    %v577 = vld [vmem:[%s574 + $0x8] sm:$0xf]
    %v578 = vld [vmem:[%s574 + $0xc] sm:$0xf]
    %v579 = vld [vmem:[%s574 + $0x10] sm:$0xf]
    %v580 = vld [vmem:[%s574 + $0x14] sm:$0xf]
    %v581 = vld [vmem:[%s574 + $0x18] sm:$0xf]
    %v582 = vld [vmem:[%s574 + $0x1c] sm:$0xf]
    %v583 = vld [vmem:[%s574 + $0x20] sm:$0xf]
    %v584 = vld [vmem:[%s574 + $0x24] sm:$0xf]
    %v585 = vlaneseq
    %v586 = vshrl.u32 %v585, 7
    %v587 = vsub.s32 6, %v586
    %v588 = vrot.slane %v29, %v587
    %v599 = vunpack.c.l.b16 %v575
    %v600 = vunpack.c.l.b16 %v576
    %v601 = vunpack.c.l.b16 %v577
    %v602 = vunpack.c.l.b16 %v578
    %v603 = vunpack.c.l.b16 %v579
    %v604 = vunpack.c.l.b16 %v580
    %v605 = vunpack.c.l.b16 %v581
    %v606 = vunpack.c.l.b16 %v582
    %v607 = vunpack.c.l.b16 %v583
    %v608 = vunpack.c.l.b16 %v584
    %v609 = vpack.c.b16 %v600, %v599
    %v610 = vpack.c.b16 %v602, %v601
    %v611 = vpack.c.b16 %v604, %v603
    %v612 = vpack.c.b16 %v606, %v605
    %v613 = vpack.c.b16 %v608, %v607
    %v620 = vsel %vm77, %v573, 0
    %622 = vmatprep.subr.bf16.mxu0 0
    %623 = vmatpush1.bf16.msra.mxu0 0
    %624 = vmatprep.subr.bf16.mxu0 0
    %625 = vmatpush1.bf16.msra.mxu0 0
    %626 = vmatprep.subr.bf16.mxu0 0
    %627 = vmatpush1.bf16.msra.mxu0 0
    %628 = vmatprep.subr.bf16.mxu0 0
    %629 = vmatpush1.bf16.msra.mxu0 %v613
    %630 = vmatprep.subr.bf16.mxu0 0
    %631 = vmatpush1.bf16.msra.mxu0 %v612
    %632 = vmatprep.subr.bf16.mxu0 0
    %633 = vmatpush1.bf16.msra.mxu0 %v611
    %634 = vmatprep.subr.bf16.mxu0 0
    %635 = vmatpush1.bf16.msra.mxu0 %v610
    %636 = vmatprep.subr.bf16.mxu0 0
    %637 = vmatpush1.bf16.msra.mxu0 %v609
    %638 = vmatprep.subr.bf16.mxu0 0
    %639 = vmatpush2.bf16.msra.mxu0 0
    %640 = vmatprep.subr.bf16.mxu0 0
    %641 = vmatpush2.bf16.msra.mxu0 0
    %642 = vmatprep.subr.bf16.mxu0 0
    %643 = vmatpush2.bf16.msra.mxu0 0
    %644 = vmatprep.subr.bf16.mxu0 0
    %645 = vmatpush2.bf16.msra.mxu0 0
    %646 = vmatprep.subr.bf16.mxu0 0
    %647 = vmatpush2.bf16.msra.mxu0 0
    %648 = vmatprep.subr.bf16.mxu0 0
    %649 = vmatpush2.bf16.msra.mxu0 0
    %650 = vmatprep.subr.bf16.mxu0 0
    %651 = vmatpush2.bf16.msra.mxu0 0
    %652 = vmatprep.subr.bf16.mxu0 0
    %653 = vmatpush2.bf16.msra.mxu0 0
    %654 = vmatprep.mubr.bf16.mxu0 0
    %655 = vmatmul.mubr.bf16.gmra.mxu0 %v620
    %v656 = vpop.f32.mrf.mxu0
    %v657 = vadd.f32 %v588, %v656
    %v658 = vpop.f32.mrf.mxu0
    %v659 = vpop.f32.mrf.mxu0
    %v660 = vpop.f32.mrf.mxu0
    %661 = vdwg.mxu0
    %v662 = vtanh.pop %v657
    %v663 = vpack.c.bf16 %v662, %v662
    %s664 = scalar_lea.vmem [#allocation2], 280
    %v665 = vld [vmem:[%s664] sm:$0xf]
    %v666 = vld [vmem:[%s664 + $0x4] sm:$0xf]
    %v667 = vld [vmem:[%s664 + $0x8] sm:$0xf]
    %v668 = vld [vmem:[%s664 + $0xc] sm:$0xf]
    %v669 = vld [vmem:[%s664 + $0x10] sm:$0xf]
    %v670 = vld [vmem:[%s664 + $0x14] sm:$0xf]
    %v671 = vld [vmem:[%s664 + $0x18] sm:$0xf]
    %v672 = vld [vmem:[%s664 + $0x1c] sm:$0xf]
    %v673 = vld [vmem:[%s664 + $0x20] sm:$0xf]
    %v674 = vld [vmem:[%s664 + $0x24] sm:$0xf]
    %v675 = vlaneseq
    %v676 = vshrl.u32 %v675, 7
    %v677 = vsub.s32 7, %v676
    %v678 = vrot.slane %v29, %v677
    %v689 = vunpack.c.l.b16 %v665
    %v690 = vunpack.c.l.b16 %v666
    %v691 = vunpack.c.l.b16 %v667
    %v692 = vunpack.c.l.b16 %v668
    %v693 = vunpack.c.l.b16 %v669
    %v694 = vunpack.c.l.b16 %v670
    %v695 = vunpack.c.l.b16 %v671
    %v696 = vunpack.c.l.b16 %v672
    %v697 = vunpack.c.l.b16 %v673
    %v698 = vunpack.c.l.b16 %v674
    %v699 = vpack.c.b16 %v690, %v689
    %v700 = vpack.c.b16 %v692, %v691
    %v701 = vpack.c.b16 %v694, %v693
    %v702 = vpack.c.b16 %v696, %v695
    %v703 = vpack.c.b16 %v698, %v697
    %v710 = vsel %vm77, %v663, 0
    %712 = vmatprep.subr.bf16.mxu0 0
    %713 = vmatpush1.bf16.msra.mxu0 0
    %714 = vmatprep.subr.bf16.mxu0 0
    %715 = vmatpush1.bf16.msra.mxu0 0
    %716 = vmatprep.subr.bf16.mxu0 0
    %717 = vmatpush1.bf16.msra.mxu0 0
    %718 = vmatprep.subr.bf16.mxu0 0
    %719 = vmatpush1.bf16.msra.mxu0 %v703
    %720 = vmatprep.subr.bf16.mxu0 0
    %721 = vmatpush1.bf16.msra.mxu0 %v702
    %722 = vmatprep.subr.bf16.mxu0 0
    %723 = vmatpush1.bf16.msra.mxu0 %v701
    %724 = vmatprep.subr.bf16.mxu0 0
    %725 = vmatpush1.bf16.msra.mxu0 %v700
    %726 = vmatprep.subr.bf16.mxu0 0
    %727 = vmatpush1.bf16.msra.mxu0 %v699
    %728 = vmatprep.subr.bf16.mxu0 0
    %729 = vmatpush2.bf16.msra.mxu0 0
    %730 = vmatprep.subr.bf16.mxu0 0
    %731 = vmatpush2.bf16.msra.mxu0 0
    %732 = vmatprep.subr.bf16.mxu0 0
    %733 = vmatpush2.bf16.msra.mxu0 0
    %734 = vmatprep.subr.bf16.mxu0 0
    %735 = vmatpush2.bf16.msra.mxu0 0
    %736 = vmatprep.subr.bf16.mxu0 0
    %737 = vmatpush2.bf16.msra.mxu0 0
    %738 = vmatprep.subr.bf16.mxu0 0
    %739 = vmatpush2.bf16.msra.mxu0 0
    %740 = vmatprep.subr.bf16.mxu0 0
    %741 = vmatpush2.bf16.msra.mxu0 0
    %742 = vmatprep.subr.bf16.mxu0 0
    %743 = vmatpush2.bf16.msra.mxu0 0
    %744 = vmatprep.mubr.bf16.mxu0 0
    %745 = vmatmul.mubr.bf16.gmra.mxu0 %v710
    %v746 = vpop.f32.mrf.mxu0
    %v747 = vadd.f32 %v678, %v746
    %v748 = vpop.f32.mrf.mxu0
    %v749 = vpop.f32.mrf.mxu0
    %v750 = vpop.f32.mrf.mxu0
    %751 = vdwg.mxu0
    %v752 = vxor.u32 %v747, 2147483648
    %v753 = vmul.f32 %v752, 1.442695
    %v754 = vpow.pop %v753
    %v755 = vadd.f32 %v754, 1.0
    %v756 = vrcp.pop %v755
    %v757 = vmul.f32 1.0, %v756
    %758 = vst [vmem:[%s3 + $0x8] sm:$0xff] %v757
    %s759 = scalar_lea.vmem [#allocation2], 320
    %v760 = vld [vmem:[%s759] sm:$0xf]
    %v761 = vld [vmem:[%s759 + $0x4] sm:$0xf]
    %v762 = vld [vmem:[%s759 + $0x8] sm:$0xf]
    %v763 = vld [vmem:[%s759 + $0xc] sm:$0xf]
    %v764 = vld [vmem:[%s759 + $0x10] sm:$0xf]
    %v765 = vld [vmem:[%s759 + $0x14] sm:$0xf]
    %v766 = vld [vmem:[%s759 + $0x18] sm:$0xf]
    %v767 = vld [vmem:[%s759 + $0x1c] sm:$0xf]
    %v768 = vld [vmem:[%s759 + $0x20] sm:$0xf]
    %v769 = vld [vmem:[%s759 + $0x24] sm:$0xf]
    %v770 = vlaneseq
    %v771 = vshrl.u32 %v770, 7
    %v772 = vsub.s32 0, %v771
    %v773 = vrot.slane %v30, %v772
    %v784 = vunpack.c.l.b16 %v760
    %v785 = vunpack.c.l.b16 %v761
    %v786 = vunpack.c.l.b16 %v762
    %v787 = vunpack.c.l.b16 %v763
    %v788 = vunpack.c.l.b16 %v764
    %v789 = vunpack.c.l.b16 %v765
    %v790 = vunpack.c.l.b16 %v766
    %v791 = vunpack.c.l.b16 %v767
    %v792 = vunpack.c.l.b16 %v768
    %v793 = vunpack.c.l.b16 %v769
    %v794 = vpack.c.b16 %v785, %v784
    %v795 = vpack.c.b16 %v787, %v786
    %v796 = vpack.c.b16 %v789, %v788
    %v797 = vpack.c.b16 %v791, %v790
    %v798 = vpack.c.b16 %v793, %v792
    %804 = vmatprep.subr.bf16.mxu0 0
    %805 = vmatpush1.bf16.msra.mxu0 0
    %806 = vmatprep.subr.bf16.mxu0 0
    %807 = vmatpush1.bf16.msra.mxu0 0
    %808 = vmatprep.subr.bf16.mxu0 0
    %809 = vmatpush1.bf16.msra.mxu0 0
    %810 = vmatprep.subr.bf16.mxu0 0
    %811 = vmatpush1.bf16.msra.mxu0 %v798
    %812 = vmatprep.subr.bf16.mxu0 0
    %813 = vmatpush1.bf16.msra.mxu0 %v797
    %814 = vmatprep.subr.bf16.mxu0 0
    %815 = vmatpush1.bf16.msra.mxu0 %v796
    %816 = vmatprep.subr.bf16.mxu0 0
    %817 = vmatpush1.bf16.msra.mxu0 %v795
    %818 = vmatprep.subr.bf16.mxu0 0
    %819 = vmatpush1.bf16.msra.mxu0 %v794
    %820 = vmatprep.subr.bf16.mxu0 0
    %821 = vmatpush2.bf16.msra.mxu0 0
    %822 = vmatprep.subr.bf16.mxu0 0
    %823 = vmatpush2.bf16.msra.mxu0 0
    %824 = vmatprep.subr.bf16.mxu0 0
    %825 = vmatpush2.bf16.msra.mxu0 0
    %826 = vmatprep.subr.bf16.mxu0 0
    %827 = vmatpush2.bf16.msra.mxu0 0
    %828 = vmatprep.subr.bf16.mxu0 0
    %829 = vmatpush2.bf16.msra.mxu0 0
    %830 = vmatprep.subr.bf16.mxu0 0
    %831 = vmatpush2.bf16.msra.mxu0 0
    %832 = vmatprep.subr.bf16.mxu0 0
    %833 = vmatpush2.bf16.msra.mxu0 0
    %834 = vmatprep.subr.bf16.mxu0 0
    %835 = vmatpush2.bf16.msra.mxu0 0
    %836 = vmatprep.mubr.bf16.mxu0 0
    %837 = vmatmul.mubr.bf16.gmra.mxu0 %v440
    %v838 = vpop.f32.mrf.mxu0
    %v839 = vadd.f32 %v773, %v838
    %v840 = vpop.f32.mrf.mxu0
    %v841 = vpop.f32.mrf.mxu0
    %v842 = vpop.f32.mrf.mxu0
    %843 = vdwg.mxu0
    %v844 = vtanh.pop %v839
    %v845 = vpack.c.bf16 %v844, %v844
    %s846 = scalar_lea.vmem [#allocation2], 360
    %v847 = vld [vmem:[%s846] sm:$0xf]
    %v848 = vld [vmem:[%s846 + $0x4] sm:$0xf]
    %v849 = vld [vmem:[%s846 + $0x8] sm:$0xf]
    %v850 = vld [vmem:[%s846 + $0xc] sm:$0xf]
    %v851 = vld [vmem:[%s846 + $0x10] sm:$0xf]
    %v852 = vld [vmem:[%s846 + $0x14] sm:$0xf]
    %v853 = vld [vmem:[%s846 + $0x18] sm:$0xf]
    %v854 = vld [vmem:[%s846 + $0x1c] sm:$0xf]
    %v855 = vld [vmem:[%s846 + $0x20] sm:$0xf]
    %v856 = vld [vmem:[%s846 + $0x24] sm:$0xf]
    %v857 = vlaneseq
    %v858 = vshrl.u32 %v857, 7
    %v859 = vsub.s32 1, %v858
    %v860 = vrot.slane %v30, %v859
    %v871 = vunpack.c.l.b16 %v847
    %v872 = vunpack.c.l.b16 %v848
    %v873 = vunpack.c.l.b16 %v849
    %v874 = vunpack.c.l.b16 %v850
    %v875 = vunpack.c.l.b16 %v851
    %v876 = vunpack.c.l.b16 %v852
    %v877 = vunpack.c.l.b16 %v853
    %v878 = vunpack.c.l.b16 %v854
    %v879 = vunpack.c.l.b16 %v855
    %v880 = vunpack.c.l.b16 %v856
    %v881 = vpack.c.b16 %v872, %v871
    %v882 = vpack.c.b16 %v874, %v873
    %v883 = vpack.c.b16 %v876, %v875
    %v884 = vpack.c.b16 %v878, %v877
    %v885 = vpack.c.b16 %v880, %v879
    %v892 = vsel %vm77, %v845, 0
    %894 = vmatprep.subr.bf16.mxu0 0
    %895 = vmatpush1.bf16.msra.mxu0 0
    %896 = vmatprep.subr.bf16.mxu0 0
    %897 = vmatpush1.bf16.msra.mxu0 0
    %898 = vmatprep.subr.bf16.mxu0 0
    %899 = vmatpush1.bf16.msra.mxu0 0
    %900 = vmatprep.subr.bf16.mxu0 0
    %901 = vmatpush1.bf16.msra.mxu0 %v885
    %902 = vmatprep.subr.bf16.mxu0 0
    %903 = vmatpush1.bf16.msra.mxu0 %v884
    %904 = vmatprep.subr.bf16.mxu0 0
    %905 = vmatpush1.bf16.msra.mxu0 %v883
    %906 = vmatprep.subr.bf16.mxu0 0
    %907 = vmatpush1.bf16.msra.mxu0 %v882
    %908 = vmatprep.subr.bf16.mxu0 0
    %909 = vmatpush1.bf16.msra.mxu0 %v881
    %910 = vmatprep.subr.bf16.mxu0 0
    %911 = vmatpush2.bf16.msra.mxu0 0
    %912 = vmatprep.subr.bf16.mxu0 0
    %913 = vmatpush2.bf16.msra.mxu0 0
    %914 = vmatprep.subr.bf16.mxu0 0
    %915 = vmatpush2.bf16.msra.mxu0 0
    %916 = vmatprep.subr.bf16.mxu0 0
    %917 = vmatpush2.bf16.msra.mxu0 0
    %918 = vmatprep.subr.bf16.mxu0 0
    %919 = vmatpush2.bf16.msra.mxu0 0
    %920 = vmatprep.subr.bf16.mxu0 0
    %921 = vmatpush2.bf16.msra.mxu0 0
    %922 = vmatprep.subr.bf16.mxu0 0
    %923 = vmatpush2.bf16.msra.mxu0 0
    %924 = vmatprep.subr.bf16.mxu0 0
    %925 = vmatpush2.bf16.msra.mxu0 0
    %926 = vmatprep.mubr.bf16.mxu0 0
    %927 = vmatmul.mubr.bf16.gmra.mxu0 %v892
    %v928 = vpop.f32.mrf.mxu0
    %v929 = vadd.f32 %v860, %v928
    %v930 = vpop.f32.mrf.mxu0
    %v931 = vpop.f32.mrf.mxu0
    %v932 = vpop.f32.mrf.mxu0
    %933 = vdwg.mxu0
    %v934 = vtanh.pop %v929
    %935 = vst [vmem:[%s3 + $0x10] sm:$0xff] %v934
    %s936 = scalar_lea.vmem %s2, 16
    %v937 = vld [vmem:[%s936] sm:$0xff]
    %v938 = vld [vmem:[%s936 + $0x8] sm:$0x3]
    %s939 = scalar_lea.vmem %s0, 8
    %v940 = vld [vmem:[%s939] sm:$0xff]
    %v941 = vpack.c.bf16 %v940, %v940
    %s942 = scalar_lea.vmem [#allocation2], 400
    %v943 = vld [vmem:[%s942] sm:$0xf]
    %v944 = vld [vmem:[%s942 + $0x4] sm:$0xf]
    %v945 = vld [vmem:[%s942 + $0x8] sm:$0xf]
    %v946 = vld [vmem:[%s942 + $0xc] sm:$0xf]
    %v947 = vld [vmem:[%s942 + $0x10] sm:$0xf]
    %v948 = vld [vmem:[%s942 + $0x14] sm:$0xf]
    %v949 = vld [vmem:[%s942 + $0x18] sm:$0xf]
    %v950 = vld [vmem:[%s942 + $0x1c] sm:$0xf]
    %v951 = vld [vmem:[%s942 + $0x20] sm:$0xf]
    %v952 = vld [vmem:[%s942 + $0x24] sm:$0xf]
    %v953 = vlaneseq
    %v954 = vshrl.u32 %v953, 7
    %v955 = vsub.s32 0, %v954
    %v956 = vrot.slane %v937, %v955
    %v967 = vunpack.c.l.b16 %v943
    %v968 = vunpack.c.l.b16 %v944
    %v969 = vunpack.c.l.b16 %v945
    %v970 = vunpack.c.l.b16 %v946
    %v971 = vunpack.c.l.b16 %v947
    %v972 = vunpack.c.l.b16 %v948
    %v973 = vunpack.c.l.b16 %v949
    %v974 = vunpack.c.l.b16 %v950
    %v975 = vunpack.c.l.b16 %v951
    %v976 = vunpack.c.l.b16 %v952
    %v977 = vpack.c.b16 %v968, %v967
    %v978 = vpack.c.b16 %v970, %v969
    %v979 = vpack.c.b16 %v972, %v971
    %v980 = vpack.c.b16 %v974, %v973
    %v981 = vpack.c.b16 %v976, %v975
    %v988 = vsel %vm77, %v941, 0
    %990 = vmatprep.subr.bf16.mxu0 0
    %991 = vmatpush1.bf16.msra.mxu0 0
    %992 = vmatprep.subr.bf16.mxu0 0
    %993 = vmatpush1.bf16.msra.mxu0 0
    %994 = vmatprep.subr.bf16.mxu0 0
    %995 = vmatpush1.bf16.msra.mxu0 0
    %996 = vmatprep.subr.bf16.mxu0 0
    %997 = vmatpush1.bf16.msra.mxu0 %v981
    %998 = vmatprep.subr.bf16.mxu0 0
    %999 = vmatpush1.bf16.msra.mxu0 %v980
    %1000 = vmatprep.subr.bf16.mxu0 0
    %1001 = vmatpush1.bf16.msra.mxu0 %v979
    %1002 = vmatprep.subr.bf16.mxu0 0
    %1003 = vmatpush1.bf16.msra.mxu0 %v978
    %1004 = vmatprep.subr.bf16.mxu0 0
    %1005 = vmatpush1.bf16.msra.mxu0 %v977
    %1006 = vmatprep.subr.bf16.mxu0 0
    %1007 = vmatpush2.bf16.msra.mxu0 0
    %1008 = vmatprep.subr.bf16.mxu0 0
    %1009 = vmatpush2.bf16.msra.mxu0 0
    %1010 = vmatprep.subr.bf16.mxu0 0
    %1011 = vmatpush2.bf16.msra.mxu0 0
    %1012 = vmatprep.subr.bf16.mxu0 0
    %1013 = vmatpush2.bf16.msra.mxu0 0
    %1014 = vmatprep.subr.bf16.mxu0 0
    %1015 = vmatpush2.bf16.msra.mxu0 0
    %1016 = vmatprep.subr.bf16.mxu0 0
    %1017 = vmatpush2.bf16.msra.mxu0 0
    %1018 = vmatprep.subr.bf16.mxu0 0
    %1019 = vmatpush2.bf16.msra.mxu0 0
    %1020 = vmatprep.subr.bf16.mxu0 0
    %1021 = vmatpush2.bf16.msra.mxu0 0
    %1022 = vmatprep.mubr.bf16.mxu0 0
    %1023 = vmatmul.mubr.bf16.gmra.mxu0 %v988
    %v1024 = vpop.f32.mrf.mxu0
    %v1025 = vadd.f32 %v956, %v1024
    %v1026 = vpop.f32.mrf.mxu0
    %v1027 = vpop.f32.mrf.mxu0
    %v1028 = vpop.f32.mrf.mxu0
    %1029 = vdwg.mxu0
    %v1030 = vtanh.pop %v1025
    %v1031 = vpack.c.bf16 %v1030, %v1030
    %s1032 = scalar_lea.vmem [#allocation2], 440
    %v1033 = vld [vmem:[%s1032] sm:$0xf]
    %v1034 = vld [vmem:[%s1032 + $0x4] sm:$0xf]
    %v1035 = vld [vmem:[%s1032 + $0x8] sm:$0xf]
    %v1036 = vld [vmem:[%s1032 + $0xc] sm:$0xf]
    %v1037 = vld [vmem:[%s1032 + $0x10] sm:$0xf]
    %v1038 = vld [vmem:[%s1032 + $0x14] sm:$0xf]
    %v1039 = vld [vmem:[%s1032 + $0x18] sm:$0xf]
    %v1040 = vld [vmem:[%s1032 + $0x1c] sm:$0xf]
    %v1041 = vld [vmem:[%s1032 + $0x20] sm:$0xf]
    %v1042 = vld [vmem:[%s1032 + $0x24] sm:$0xf]
    %v1043 = vlaneseq
    %v1044 = vshrl.u32 %v1043, 7
    %v1045 = vsub.s32 1, %v1044
    %v1046 = vrot.slane %v937, %v1045
    %v1057 = vunpack.c.l.b16 %v1033
    %v1058 = vunpack.c.l.b16 %v1034
    %v1059 = vunpack.c.l.b16 %v1035
    %v1060 = vunpack.c.l.b16 %v1036
    %v1061 = vunpack.c.l.b16 %v1037
    %v1062 = vunpack.c.l.b16 %v1038
    %v1063 = vunpack.c.l.b16 %v1039
    %v1064 = vunpack.c.l.b16 %v1040
    %v1065 = vunpack.c.l.b16 %v1041
    %v1066 = vunpack.c.l.b16 %v1042
    %v1067 = vpack.c.b16 %v1058, %v1057
    %v1068 = vpack.c.b16 %v1060, %v1059
    %v1069 = vpack.c.b16 %v1062, %v1061
    %v1070 = vpack.c.b16 %v1064, %v1063
    %v1071 = vpack.c.b16 %v1066, %v1065
    %v1078 = vsel %vm77, %v1031, 0
    %1080 = vmatprep.subr.bf16.mxu0 0
    %1081 = vmatpush1.bf16.msra.mxu0 0
    %1082 = vmatprep.subr.bf16.mxu0 0
    %1083 = vmatpush1.bf16.msra.mxu0 0
    %1084 = vmatprep.subr.bf16.mxu0 0
    %1085 = vmatpush1.bf16.msra.mxu0 0
    %1086 = vmatprep.subr.bf16.mxu0 0
    %1087 = vmatpush1.bf16.msra.mxu0 %v1071
    %1088 = vmatprep.subr.bf16.mxu0 0
    %1089 = vmatpush1.bf16.msra.mxu0 %v1070
    %1090 = vmatprep.subr.bf16.mxu0 0
    %1091 = vmatpush1.bf16.msra.mxu0 %v1069
    %1092 = vmatprep.subr.bf16.mxu0 0
    %1093 = vmatpush1.bf16.msra.mxu0 %v1068
    %1094 = vmatprep.subr.bf16.mxu0 0
    %1095 = vmatpush1.bf16.msra.mxu0 %v1067
    %1096 = vmatprep.subr.bf16.mxu0 0
    %1097 = vmatpush2.bf16.msra.mxu0 0
    %1098 = vmatprep.subr.bf16.mxu0 0
    %1099 = vmatpush2.bf16.msra.mxu0 0
    %1100 = vmatprep.subr.bf16.mxu0 0
    %1101 = vmatpush2.bf16.msra.mxu0 0
    %1102 = vmatprep.subr.bf16.mxu0 0
    %1103 = vmatpush2.bf16.msra.mxu0 0
    %1104 = vmatprep.subr.bf16.mxu0 0
    %1105 = vmatpush2.bf16.msra.mxu0 0
    %1106 = vmatprep.subr.bf16.mxu0 0
    %1107 = vmatpush2.bf16.msra.mxu0 0
    %1108 = vmatprep.subr.bf16.mxu0 0
    %1109 = vmatpush2.bf16.msra.mxu0 0
    %1110 = vmatprep.subr.bf16.mxu0 0
    %1111 = vmatpush2.bf16.msra.mxu0 0
    %1112 = vmatprep.mubr.bf16.mxu0 0
    %1113 = vmatmul.mubr.bf16.gmra.mxu0 %v1078
    %v1114 = vpop.f32.mrf.mxu0
    %v1115 = vadd.f32 %v1046, %v1114
    %v1116 = vpop.f32.mrf.mxu0
    %v1117 = vpop.f32.mrf.mxu0
    %v1118 = vpop.f32.mrf.mxu0
    %1119 = vdwg.mxu0
    %v1120 = vtanh.pop %v1115
    %v1121 = vpack.c.bf16 %v1120, %v1120
    %s1122 = scalar_lea.vmem [#allocation2], 480
    %v1123 = vld [vmem:[%s1122] sm:$0xf]
    %v1124 = vld [vmem:[%s1122 + $0x4] sm:$0xf]
    %v1125 = vld [vmem:[%s1122 + $0x8] sm:$0xf]
    %v1126 = vld [vmem:[%s1122 + $0xc] sm:$0xf]
    %v1127 = vld [vmem:[%s1122 + $0x10] sm:$0xf]
    %v1128 = vld [vmem:[%s1122 + $0x14] sm:$0xf]
    %v1129 = vld [vmem:[%s1122 + $0x18] sm:$0xf]
    %v1130 = vld [vmem:[%s1122 + $0x1c] sm:$0xf]
    %v1131 = vld [vmem:[%s1122 + $0x20] sm:$0xf]
    %v1132 = vld [vmem:[%s1122 + $0x24] sm:$0xf]
    %v1133 = vlaneseq
    %v1134 = vshrl.u32 %v1133, 7
    %v1135 = vsub.s32 2, %v1134
    %v1136 = vrot.slane %v937, %v1135
    %v1147 = vunpack.c.l.b16 %v1123
    %v1148 = vunpack.c.l.b16 %v1124
    %v1149 = vunpack.c.l.b16 %v1125
    %v1150 = vunpack.c.l.b16 %v1126
    %v1151 = vunpack.c.l.b16 %v1127
    %v1152 = vunpack.c.l.b16 %v1128
    %v1153 = vunpack.c.l.b16 %v1129
    %v1154 = vunpack.c.l.b16 %v1130
    %v1155 = vunpack.c.l.b16 %v1131
    %v1156 = vunpack.c.l.b16 %v1132
    %v1157 = vpack.c.b16 %v1148, %v1147
    %v1158 = vpack.c.b16 %v1150, %v1149
    %v1159 = vpack.c.b16 %v1152, %v1151
    %v1160 = vpack.c.b16 %v1154, %v1153
    %v1161 = vpack.c.b16 %v1156, %v1155
    %v1168 = vsel %vm77, %v1121, 0
    %1170 = vmatprep.subr.bf16.mxu0 0
    %1171 = vmatpush1.bf16.msra.mxu0 0
    %1172 = vmatprep.subr.bf16.mxu0 0
    %1173 = vmatpush1.bf16.msra.mxu0 0
    %1174 = vmatprep.subr.bf16.mxu0 0
    %1175 = vmatpush1.bf16.msra.mxu0 0
    %1176 = vmatprep.subr.bf16.mxu0 0
    %1177 = vmatpush1.bf16.msra.mxu0 %v1161
    %1178 = vmatprep.subr.bf16.mxu0 0
    %1179 = vmatpush1.bf16.msra.mxu0 %v1160
    %1180 = vmatprep.subr.bf16.mxu0 0
    %1181 = vmatpush1.bf16.msra.mxu0 %v1159
    %1182 = vmatprep.subr.bf16.mxu0 0
    %1183 = vmatpush1.bf16.msra.mxu0 %v1158
    %1184 = vmatprep.subr.bf16.mxu0 0
    %1185 = vmatpush1.bf16.msra.mxu0 %v1157
    %1186 = vmatprep.subr.bf16.mxu0 0
    %1187 = vmatpush2.bf16.msra.mxu0 0
    %1188 = vmatprep.subr.bf16.mxu0 0
    %1189 = vmatpush2.bf16.msra.mxu0 0
    %1190 = vmatprep.subr.bf16.mxu0 0
    %1191 = vmatpush2.bf16.msra.mxu0 0
    %1192 = vmatprep.subr.bf16.mxu0 0
    %1193 = vmatpush2.bf16.msra.mxu0 0
    %1194 = vmatprep.subr.bf16.mxu0 0
    %1195 = vmatpush2.bf16.msra.mxu0 0
    %1196 = vmatprep.subr.bf16.mxu0 0
    %1197 = vmatpush2.bf16.msra.mxu0 0
    %1198 = vmatprep.subr.bf16.mxu0 0
    %1199 = vmatpush2.bf16.msra.mxu0 0
    %1200 = vmatprep.subr.bf16.mxu0 0
    %1201 = vmatpush2.bf16.msra.mxu0 0
    %1202 = vmatprep.mubr.bf16.mxu0 0
    %1203 = vmatmul.mubr.bf16.gmra.mxu0 %v1168
    %v1204 = vpop.f32.mrf.mxu0
    %v1205 = vadd.f32 %v1136, %v1204
    %v1206 = vpop.f32.mrf.mxu0
    %v1207 = vpop.f32.mrf.mxu0
    %v1208 = vpop.f32.mrf.mxu0
    %1209 = vdwg.mxu0
    %v1210 = vtanh.pop %v1205
    %v1211 = vpack.c.bf16 %v1210, %v1210
    %s1212 = scalar_lea.vmem [#allocation2], 520
    %v1213 = vld [vmem:[%s1212] sm:$0xf]
    %v1214 = vld [vmem:[%s1212 + $0x4] sm:$0xf]
    %v1215 = vld [vmem:[%s1212 + $0x8] sm:$0xf]
    %v1216 = vld [vmem:[%s1212 + $0xc] sm:$0xf]
    %v1217 = vld [vmem:[%s1212 + $0x10] sm:$0xf]
    %v1218 = vld [vmem:[%s1212 + $0x14] sm:$0xf]
    %v1219 = vld [vmem:[%s1212 + $0x18] sm:$0xf]
    %v1220 = vld [vmem:[%s1212 + $0x1c] sm:$0xf]
    %v1221 = vld [vmem:[%s1212 + $0x20] sm:$0xf]
    %v1222 = vld [vmem:[%s1212 + $0x24] sm:$0xf]
    %v1223 = vlaneseq
    %v1224 = vshrl.u32 %v1223, 7
    %v1225 = vsub.s32 3, %v1224
    %v1226 = vrot.slane %v937, %v1225
    %v1237 = vunpack.c.l.b16 %v1213
    %v1238 = vunpack.c.l.b16 %v1214
    %v1239 = vunpack.c.l.b16 %v1215
    %v1240 = vunpack.c.l.b16 %v1216
    %v1241 = vunpack.c.l.b16 %v1217
    %v1242 = vunpack.c.l.b16 %v1218
    %v1243 = vunpack.c.l.b16 %v1219
    %v1244 = vunpack.c.l.b16 %v1220
    %v1245 = vunpack.c.l.b16 %v1221
    %v1246 = vunpack.c.l.b16 %v1222
    %v1247 = vpack.c.b16 %v1238, %v1237
    %v1248 = vpack.c.b16 %v1240, %v1239
    %v1249 = vpack.c.b16 %v1242, %v1241
    %v1250 = vpack.c.b16 %v1244, %v1243
    %v1251 = vpack.c.b16 %v1246, %v1245
    %v1258 = vsel %vm77, %v1211, 0
    %1260 = vmatprep.subr.bf16.mxu0 0
    %1261 = vmatpush1.bf16.msra.mxu0 0
    %1262 = vmatprep.subr.bf16.mxu0 0
    %1263 = vmatpush1.bf16.msra.mxu0 0
    %1264 = vmatprep.subr.bf16.mxu0 0
    %1265 = vmatpush1.bf16.msra.mxu0 0
    %1266 = vmatprep.subr.bf16.mxu0 0
    %1267 = vmatpush1.bf16.msra.mxu0 %v1251
    %1268 = vmatprep.subr.bf16.mxu0 0
    %1269 = vmatpush1.bf16.msra.mxu0 %v1250
    %1270 = vmatprep.subr.bf16.mxu0 0
    %1271 = vmatpush1.bf16.msra.mxu0 %v1249
    %1272 = vmatprep.subr.bf16.mxu0 0
    %1273 = vmatpush1.bf16.msra.mxu0 %v1248
    %1274 = vmatprep.subr.bf16.mxu0 0
    %1275 = vmatpush1.bf16.msra.mxu0 %v1247
    %1276 = vmatprep.subr.bf16.mxu0 0
    %1277 = vmatpush2.bf16.msra.mxu0 0
    %1278 = vmatprep.subr.bf16.mxu0 0
    %1279 = vmatpush2.bf16.msra.mxu0 0
    %1280 = vmatprep.subr.bf16.mxu0 0
    %1281 = vmatpush2.bf16.msra.mxu0 0
    %1282 = vmatprep.subr.bf16.mxu0 0
    %1283 = vmatpush2.bf16.msra.mxu0 0
    %1284 = vmatprep.subr.bf16.mxu0 0
    %1285 = vmatpush2.bf16.msra.mxu0 0
    %1286 = vmatprep.subr.bf16.mxu0 0
    %1287 = vmatpush2.bf16.msra.mxu0 0
    %1288 = vmatprep.subr.bf16.mxu0 0
    %1289 = vmatpush2.bf16.msra.mxu0 0
    %1290 = vmatprep.subr.bf16.mxu0 0
    %1291 = vmatpush2.bf16.msra.mxu0 0
    %1292 = vmatprep.mubr.bf16.mxu0 0
    %1293 = vmatmul.mubr.bf16.gmra.mxu0 %v1258
    %v1294 = vpop.f32.mrf.mxu0
    %v1295 = vadd.f32 %v1226, %v1294
    %v1296 = vpop.f32.mrf.mxu0
    %v1297 = vpop.f32.mrf.mxu0
    %v1298 = vpop.f32.mrf.mxu0
    %1299 = vdwg.mxu0
    %v1300 = vtanh.pop %v1295
    %s1301 = scalar_lea.vmem %s3, 24
    %1302 = vst [vmem:[%s1301] sm:$0xff] %v1300
    %v1303 = vpack.c.bf16 %v1300, %v1300
    %s1304 = scalar_lea.vmem [#allocation2], 560
    %v1305 = vld [vmem:[%s1304] sm:$0xf]
    %v1306 = vld [vmem:[%s1304 + $0x4] sm:$0xf]
    %v1307 = vld [vmem:[%s1304 + $0x8] sm:$0xf]
    %v1308 = vld [vmem:[%s1304 + $0xc] sm:$0xf]
    %v1309 = vld [vmem:[%s1304 + $0x10] sm:$0xf]
    %v1310 = vld [vmem:[%s1304 + $0x14] sm:$0xf]
    %v1311 = vld [vmem:[%s1304 + $0x18] sm:$0xf]
    %v1312 = vld [vmem:[%s1304 + $0x1c] sm:$0xf]
    %v1313 = vld [vmem:[%s1304 + $0x20] sm:$0xf]
    %v1314 = vld [vmem:[%s1304 + $0x24] sm:$0xf]
    %v1315 = vlaneseq
    %v1316 = vshrl.u32 %v1315, 7
    %v1317 = vsub.s32 4, %v1316
    %v1318 = vrot.slane %v937, %v1317
    %v1329 = vunpack.c.l.b16 %v1305
    %v1330 = vunpack.c.l.b16 %v1306
    %v1331 = vunpack.c.l.b16 %v1307
    %v1332 = vunpack.c.l.b16 %v1308
    %v1333 = vunpack.c.l.b16 %v1309
    %v1334 = vunpack.c.l.b16 %v1310
    %v1335 = vunpack.c.l.b16 %v1311
    %v1336 = vunpack.c.l.b16 %v1312
    %v1337 = vunpack.c.l.b16 %v1313
    %v1338 = vunpack.c.l.b16 %v1314
    %v1339 = vpack.c.b16 %v1330, %v1329
    %v1340 = vpack.c.b16 %v1332, %v1331
    %v1341 = vpack.c.b16 %v1334, %v1333
    %v1342 = vpack.c.b16 %v1336, %v1335
    %v1343 = vpack.c.b16 %v1338, %v1337
    %v1350 = vsel %vm77, %v1303, 0
    %1352 = vmatprep.subr.bf16.mxu0 0
    %1353 = vmatpush1.bf16.msra.mxu0 0
    %1354 = vmatprep.subr.bf16.mxu0 0
    %1355 = vmatpush1.bf16.msra.mxu0 0
    %1356 = vmatprep.subr.bf16.mxu0 0
    %1357 = vmatpush1.bf16.msra.mxu0 0
    %1358 = vmatprep.subr.bf16.mxu0 0
    %1359 = vmatpush1.bf16.msra.mxu0 %v1343
    %1360 = vmatprep.subr.bf16.mxu0 0
    %1361 = vmatpush1.bf16.msra.mxu0 %v1342
    %1362 = vmatprep.subr.bf16.mxu0 0
    %1363 = vmatpush1.bf16.msra.mxu0 %v1341
    %1364 = vmatprep.subr.bf16.mxu0 0
    %1365 = vmatpush1.bf16.msra.mxu0 %v1340
    %1366 = vmatprep.subr.bf16.mxu0 0
    %1367 = vmatpush1.bf16.msra.mxu0 %v1339
    %1368 = vmatprep.subr.bf16.mxu0 0
    %1369 = vmatpush2.bf16.msra.mxu0 0
    %1370 = vmatprep.subr.bf16.mxu0 0
    %1371 = vmatpush2.bf16.msra.mxu0 0
    %1372 = vmatprep.subr.bf16.mxu0 0
    %1373 = vmatpush2.bf16.msra.mxu0 0
    %1374 = vmatprep.subr.bf16.mxu0 0
    %1375 = vmatpush2.bf16.msra.mxu0 0
    %1376 = vmatprep.subr.bf16.mxu0 0
    %1377 = vmatpush2.bf16.msra.mxu0 0
    %1378 = vmatprep.subr.bf16.mxu0 0
    %1379 = vmatpush2.bf16.msra.mxu0 0
    %1380 = vmatprep.subr.bf16.mxu0 0
    %1381 = vmatpush2.bf16.msra.mxu0 0
    %1382 = vmatprep.subr.bf16.mxu0 0
    %1383 = vmatpush2.bf16.msra.mxu0 0
    %1384 = vmatprep.mubr.bf16.mxu0 0
    %1385 = vmatmul.mubr.bf16.gmra.mxu0 %v1350
    %v1386 = vpop.f32.mrf.mxu0
    %v1387 = vadd.f32 %v1318, %v1386
    %v1388 = vpop.f32.mrf.mxu0
    %v1389 = vpop.f32.mrf.mxu0
    %v1390 = vpop.f32.mrf.mxu0
    %1391 = vdwg.mxu0
    %v1392 = vtanh.pop %v1387
    %v1393 = vpack.c.bf16 %v1392, %v1392
    %s1394 = scalar_lea.vmem [#allocation2], 600
    %v1395 = vld [vmem:[%s1394] sm:$0xf]
    %v1396 = vld [vmem:[%s1394 + $0x4] sm:$0xf]
    %v1397 = vld [vmem:[%s1394 + $0x8] sm:$0xf]
    %v1398 = vld [vmem:[%s1394 + $0xc] sm:$0xf]
    %v1399 = vld [vmem:[%s1394 + $0x10] sm:$0xf]
    %v1400 = vld [vmem:[%s1394 + $0x14] sm:$0xf]
    %v1401 = vld [vmem:[%s1394 + $0x18] sm:$0xf]
    %v1402 = vld [vmem:[%s1394 + $0x1c] sm:$0xf]
    %v1403 = vld [vmem:[%s1394 + $0x20] sm:$0xf]
    %v1404 = vld [vmem:[%s1394 + $0x24] sm:$0xf]
    %v1405 = vlaneseq
    %v1406 = vshrl.u32 %v1405, 7
    %v1407 = vsub.s32 5, %v1406
    %v1408 = vrot.slane %v937, %v1407
    %v1419 = vunpack.c.l.b16 %v1395
    %v1420 = vunpack.c.l.b16 %v1396
    %v1421 = vunpack.c.l.b16 %v1397
    %v1422 = vunpack.c.l.b16 %v1398
    %v1423 = vunpack.c.l.b16 %v1399
    %v1424 = vunpack.c.l.b16 %v1400
    %v1425 = vunpack.c.l.b16 %v1401
    %v1426 = vunpack.c.l.b16 %v1402
    %v1427 = vunpack.c.l.b16 %v1403
    %v1428 = vunpack.c.l.b16 %v1404
    %v1429 = vpack.c.b16 %v1420, %v1419
    %v1430 = vpack.c.b16 %v1422, %v1421
    %v1431 = vpack.c.b16 %v1424, %v1423
    %v1432 = vpack.c.b16 %v1426, %v1425
    %v1433 = vpack.c.b16 %v1428, %v1427
    %v1440 = vsel %vm77, %v1393, 0
    %1442 = vmatprep.subr.bf16.mxu0 0
    %1443 = vmatpush1.bf16.msra.mxu0 0
    %1444 = vmatprep.subr.bf16.mxu0 0
    %1445 = vmatpush1.bf16.msra.mxu0 0
    %1446 = vmatprep.subr.bf16.mxu0 0
    %1447 = vmatpush1.bf16.msra.mxu0 0
    %1448 = vmatprep.subr.bf16.mxu0 0
    %1449 = vmatpush1.bf16.msra.mxu0 %v1433
    %1450 = vmatprep.subr.bf16.mxu0 0
    %1451 = vmatpush1.bf16.msra.mxu0 %v1432
    %1452 = vmatprep.subr.bf16.mxu0 0
    %1453 = vmatpush1.bf16.msra.mxu0 %v1431
    %1454 = vmatprep.subr.bf16.mxu0 0
    %1455 = vmatpush1.bf16.msra.mxu0 %v1430
    %1456 = vmatprep.subr.bf16.mxu0 0
    %1457 = vmatpush1.bf16.msra.mxu0 %v1429
    %1458 = vmatprep.subr.bf16.mxu0 0
    %1459 = vmatpush2.bf16.msra.mxu0 0
    %1460 = vmatprep.subr.bf16.mxu0 0
    %1461 = vmatpush2.bf16.msra.mxu0 0
    %1462 = vmatprep.subr.bf16.mxu0 0
    %1463 = vmatpush2.bf16.msra.mxu0 0
    %1464 = vmatprep.subr.bf16.mxu0 0
    %1465 = vmatpush2.bf16.msra.mxu0 0
    %1466 = vmatprep.subr.bf16.mxu0 0
    %1467 = vmatpush2.bf16.msra.mxu0 0
    %1468 = vmatprep.subr.bf16.mxu0 0
    %1469 = vmatpush2.bf16.msra.mxu0 0
    %1470 = vmatprep.subr.bf16.mxu0 0
    %1471 = vmatpush2.bf16.msra.mxu0 0
    %1472 = vmatprep.subr.bf16.mxu0 0
    %1473 = vmatpush2.bf16.msra.mxu0 0
    %1474 = vmatprep.mubr.bf16.mxu0 0
    %1475 = vmatmul.mubr.bf16.gmra.mxu0 %v1440
    %v1476 = vpop.f32.mrf.mxu0
    %v1477 = vadd.f32 %v1408, %v1476
    %v1478 = vpop.f32.mrf.mxu0
    %v1479 = vpop.f32.mrf.mxu0
    %v1480 = vpop.f32.mrf.mxu0
    %1481 = vdwg.mxu0
    %v1482 = vtanh.pop %v1477
    %v1483 = vpack.c.bf16 %v1482, %v1482
    %s1484 = scalar_lea.vmem [#allocation2], 640
    %v1485 = vld [vmem:[%s1484] sm:$0xf]
    %v1486 = vld [vmem:[%s1484 + $0x4] sm:$0xf]
    %v1487 = vld [vmem:[%s1484 + $0x8] sm:$0xf]
    %v1488 = vld [vmem:[%s1484 + $0xc] sm:$0xf]
    %v1489 = vld [vmem:[%s1484 + $0x10] sm:$0xf]
    %v1490 = vld [vmem:[%s1484 + $0x14] sm:$0xf]
    %v1491 = vld [vmem:[%s1484 + $0x18] sm:$0xf]
    %v1492 = vld [vmem:[%s1484 + $0x1c] sm:$0xf]
    %v1493 = vld [vmem:[%s1484 + $0x20] sm:$0xf]
    %v1494 = vld [vmem:[%s1484 + $0x24] sm:$0xf]
    %v1495 = vlaneseq
    %v1496 = vshrl.u32 %v1495, 7
    %v1497 = vsub.s32 6, %v1496
    %v1498 = vrot.slane %v937, %v1497
    %v1509 = vunpack.c.l.b16 %v1485
    %v1510 = vunpack.c.l.b16 %v1486
    %v1511 = vunpack.c.l.b16 %v1487
    %v1512 = vunpack.c.l.b16 %v1488
    %v1513 = vunpack.c.l.b16 %v1489
    %v1514 = vunpack.c.l.b16 %v1490
    %v1515 = vunpack.c.l.b16 %v1491
    %v1516 = vunpack.c.l.b16 %v1492
    %v1517 = vunpack.c.l.b16 %v1493
    %v1518 = vunpack.c.l.b16 %v1494
    %v1519 = vpack.c.b16 %v1510, %v1509
    %v1520 = vpack.c.b16 %v1512, %v1511
    %v1521 = vpack.c.b16 %v1514, %v1513
    %v1522 = vpack.c.b16 %v1516, %v1515
    %v1523 = vpack.c.b16 %v1518, %v1517
    %v1530 = vsel %vm77, %v1483, 0
    %1532 = vmatprep.subr.bf16.mxu0 0
    %1533 = vmatpush1.bf16.msra.mxu0 0
    %1534 = vmatprep.subr.bf16.mxu0 0
    %1535 = vmatpush1.bf16.msra.mxu0 0
    %1536 = vmatprep.subr.bf16.mxu0 0
    %1537 = vmatpush1.bf16.msra.mxu0 0
    %1538 = vmatprep.subr.bf16.mxu0 0
    %1539 = vmatpush1.bf16.msra.mxu0 %v1523
    %1540 = vmatprep.subr.bf16.mxu0 0
    %1541 = vmatpush1.bf16.msra.mxu0 %v1522
    %1542 = vmatprep.subr.bf16.mxu0 0
    %1543 = vmatpush1.bf16.msra.mxu0 %v1521
    %1544 = vmatprep.subr.bf16.mxu0 0
    %1545 = vmatpush1.bf16.msra.mxu0 %v1520
    %1546 = vmatprep.subr.bf16.mxu0 0
    %1547 = vmatpush1.bf16.msra.mxu0 %v1519
    %1548 = vmatprep.subr.bf16.mxu0 0
    %1549 = vmatpush2.bf16.msra.mxu0 0
    %1550 = vmatprep.subr.bf16.mxu0 0
    %1551 = vmatpush2.bf16.msra.mxu0 0
    %1552 = vmatprep.subr.bf16.mxu0 0
    %1553 = vmatpush2.bf16.msra.mxu0 0
    %1554 = vmatprep.subr.bf16.mxu0 0
    %1555 = vmatpush2.bf16.msra.mxu0 0
    %1556 = vmatprep.subr.bf16.mxu0 0
    %1557 = vmatpush2.bf16.msra.mxu0 0
    %1558 = vmatprep.subr.bf16.mxu0 0
    %1559 = vmatpush2.bf16.msra.mxu0 0
    %1560 = vmatprep.subr.bf16.mxu0 0
    %1561 = vmatpush2.bf16.msra.mxu0 0
    %1562 = vmatprep.subr.bf16.mxu0 0
    %1563 = vmatpush2.bf16.msra.mxu0 0
    %1564 = vmatprep.mubr.bf16.mxu0 0
    %1565 = vmatmul.mubr.bf16.gmra.mxu0 %v1530
    %v1566 = vpop.f32.mrf.mxu0
    %v1567 = vadd.f32 %v1498, %v1566
    %v1568 = vpop.f32.mrf.mxu0
    %v1569 = vpop.f32.mrf.mxu0
    %v1570 = vpop.f32.mrf.mxu0
    %1571 = vdwg.mxu0
    %v1572 = vtanh.pop %v1567
    %v1573 = vpack.c.bf16 %v1572, %v1572
    %s1574 = scalar_lea.vmem [#allocation2], 680
    %v1575 = vld [vmem:[%s1574] sm:$0xf]
    %v1576 = vld [vmem:[%s1574 + $0x4] sm:$0xf]
    %v1577 = vld [vmem:[%s1574 + $0x8] sm:$0xf]
    %v1578 = vld [vmem:[%s1574 + $0xc] sm:$0xf]
    %v1579 = vld [vmem:[%s1574 + $0x10] sm:$0xf]
    %v1580 = vld [vmem:[%s1574 + $0x14] sm:$0xf]
    %v1581 = vld [vmem:[%s1574 + $0x18] sm:$0xf]
    %v1582 = vld [vmem:[%s1574 + $0x1c] sm:$0xf]
    %v1583 = vld [vmem:[%s1574 + $0x20] sm:$0xf]
    %v1584 = vld [vmem:[%s1574 + $0x24] sm:$0xf]
    %v1585 = vlaneseq
    %v1586 = vshrl.u32 %v1585, 7
    %v1587 = vsub.s32 7, %v1586
    %v1588 = vrot.slane %v937, %v1587
    %v1599 = vunpack.c.l.b16 %v1575
    %v1600 = vunpack.c.l.b16 %v1576
    %v1601 = vunpack.c.l.b16 %v1577
    %v1602 = vunpack.c.l.b16 %v1578
    %v1603 = vunpack.c.l.b16 %v1579
    %v1604 = vunpack.c.l.b16 %v1580
    %v1605 = vunpack.c.l.b16 %v1581
    %v1606 = vunpack.c.l.b16 %v1582
    %v1607 = vunpack.c.l.b16 %v1583
    %v1608 = vunpack.c.l.b16 %v1584
    %v1609 = vpack.c.b16 %v1600, %v1599
    %v1610 = vpack.c.b16 %v1602, %v1601
    %v1611 = vpack.c.b16 %v1604, %v1603
    %v1612 = vpack.c.b16 %v1606, %v1605
    %v1613 = vpack.c.b16 %v1608, %v1607
    %v1620 = vsel %vm77, %v1573, 0
    %1622 = vmatprep.subr.bf16.mxu0 0
    %1623 = vmatpush1.bf16.msra.mxu0 0
    %1624 = vmatprep.subr.bf16.mxu0 0
    %1625 = vmatpush1.bf16.msra.mxu0 0
    %1626 = vmatprep.subr.bf16.mxu0 0
    %1627 = vmatpush1.bf16.msra.mxu0 0
    %1628 = vmatprep.subr.bf16.mxu0 0
    %1629 = vmatpush1.bf16.msra.mxu0 %v1613
    %1630 = vmatprep.subr.bf16.mxu0 0
    %1631 = vmatpush1.bf16.msra.mxu0 %v1612
    %1632 = vmatprep.subr.bf16.mxu0 0
    %1633 = vmatpush1.bf16.msra.mxu0 %v1611
    %1634 = vmatprep.subr.bf16.mxu0 0
    %1635 = vmatpush1.bf16.msra.mxu0 %v1610
    %1636 = vmatprep.subr.bf16.mxu0 0
    %1637 = vmatpush1.bf16.msra.mxu0 %v1609
    %1638 = vmatprep.subr.bf16.mxu0 0
    %1639 = vmatpush2.bf16.msra.mxu0 0
    %1640 = vmatprep.subr.bf16.mxu0 0
    %1641 = vmatpush2.bf16.msra.mxu0 0
    %1642 = vmatprep.subr.bf16.mxu0 0
    %1643 = vmatpush2.bf16.msra.mxu0 0
    %1644 = vmatprep.subr.bf16.mxu0 0
    %1645 = vmatpush2.bf16.msra.mxu0 0
    %1646 = vmatprep.subr.bf16.mxu0 0
    %1647 = vmatpush2.bf16.msra.mxu0 0
    %1648 = vmatprep.subr.bf16.mxu0 0
    %1649 = vmatpush2.bf16.msra.mxu0 0
    %1650 = vmatprep.subr.bf16.mxu0 0
    %1651 = vmatpush2.bf16.msra.mxu0 0
    %1652 = vmatprep.subr.bf16.mxu0 0
    %1653 = vmatpush2.bf16.msra.mxu0 0
    %1654 = vmatprep.mubr.bf16.mxu0 0
    %1655 = vmatmul.mubr.bf16.gmra.mxu0 %v1620
    %v1656 = vpop.f32.mrf.mxu0
    %v1657 = vadd.f32 %v1588, %v1656
    %v1658 = vpop.f32.mrf.mxu0
    %v1659 = vpop.f32.mrf.mxu0
    %v1660 = vpop.f32.mrf.mxu0
    %1661 = vdwg.mxu0
    %v1662 = vxor.u32 %v1657, 2147483648
    %v1663 = vmul.f32 %v1662, 1.442695
    %v1664 = vpow.pop %v1663
    %v1665 = vadd.f32 %v1664, 1.0
    %v1666 = vrcp.pop %v1665
    %v1667 = vmul.f32 1.0, %v1666
    %1668 = vst [vmem:[%s1301 + $0x8] sm:$0xff] %v1667
    %s1669 = scalar_lea.vmem [#allocation2], 720
    %v1670 = vld [vmem:[%s1669] sm:$0xf]
    %v1671 = vld [vmem:[%s1669 + $0x4] sm:$0xf]
    %v1672 = vld [vmem:[%s1669 + $0x8] sm:$0xf]
    %v1673 = vld [vmem:[%s1669 + $0xc] sm:$0xf]
    %v1674 = vld [vmem:[%s1669 + $0x10] sm:$0xf]
    %v1675 = vld [vmem:[%s1669 + $0x14] sm:$0xf]
    %v1676 = vld [vmem:[%s1669 + $0x18] sm:$0xf]
    %v1677 = vld [vmem:[%s1669 + $0x1c] sm:$0xf]
    %v1678 = vld [vmem:[%s1669 + $0x20] sm:$0xf]
    %v1679 = vld [vmem:[%s1669 + $0x24] sm:$0xf]
    %v1680 = vlaneseq
    %v1681 = vshrl.u32 %v1680, 7
    %v1682 = vsub.s32 0, %v1681
    %v1683 = vrot.slane %v938, %v1682
    %v1694 = vunpack.c.l.b16 %v1670
    %v1695 = vunpack.c.l.b16 %v1671
    %v1696 = vunpack.c.l.b16 %v1672
    %v1697 = vunpack.c.l.b16 %v1673
    %v1698 = vunpack.c.l.b16 %v1674
    %v1699 = vunpack.c.l.b16 %v1675
    %v1700 = vunpack.c.l.b16 %v1676
    %v1701 = vunpack.c.l.b16 %v1677
    %v1702 = vunpack.c.l.b16 %v1678
    %v1703 = vunpack.c.l.b16 %v1679
    %v1704 = vpack.c.b16 %v1695, %v1694
    %v1705 = vpack.c.b16 %v1697, %v1696
    %v1706 = vpack.c.b16 %v1699, %v1698
    %v1707 = vpack.c.b16 %v1701, %v1700
    %v1708 = vpack.c.b16 %v1703, %v1702
    %1714 = vmatprep.subr.bf16.mxu0 0
    %1715 = vmatpush1.bf16.msra.mxu0 0
    %1716 = vmatprep.subr.bf16.mxu0 0
    %1717 = vmatpush1.bf16.msra.mxu0 0
    %1718 = vmatprep.subr.bf16.mxu0 0
    %1719 = vmatpush1.bf16.msra.mxu0 0
    %1720 = vmatprep.subr.bf16.mxu0 0
    %1721 = vmatpush1.bf16.msra.mxu0 %v1708
    %1722 = vmatprep.subr.bf16.mxu0 0
    %1723 = vmatpush1.bf16.msra.mxu0 %v1707
    %1724 = vmatprep.subr.bf16.mxu0 0
    %1725 = vmatpush1.bf16.msra.mxu0 %v1706
    %1726 = vmatprep.subr.bf16.mxu0 0
    %1727 = vmatpush1.bf16.msra.mxu0 %v1705
    %1728 = vmatprep.subr.bf16.mxu0 0
    %1729 = vmatpush1.bf16.msra.mxu0 %v1704
    %1730 = vmatprep.subr.bf16.mxu0 0
    %1731 = vmatpush2.bf16.msra.mxu0 0
    %1732 = vmatprep.subr.bf16.mxu0 0
    %1733 = vmatpush2.bf16.msra.mxu0 0
    %1734 = vmatprep.subr.bf16.mxu0 0
    %1735 = vmatpush2.bf16.msra.mxu0 0
    %1736 = vmatprep.subr.bf16.mxu0 0
    %1737 = vmatpush2.bf16.msra.mxu0 0
    %1738 = vmatprep.subr.bf16.mxu0 0
    %1739 = vmatpush2.bf16.msra.mxu0 0
    %1740 = vmatprep.subr.bf16.mxu0 0
    %1741 = vmatpush2.bf16.msra.mxu0 0
    %1742 = vmatprep.subr.bf16.mxu0 0
    %1743 = vmatpush2.bf16.msra.mxu0 0
    %1744 = vmatprep.subr.bf16.mxu0 0
    %1745 = vmatpush2.bf16.msra.mxu0 0
    %1746 = vmatprep.mubr.bf16.mxu0 0
    %1747 = vmatmul.mubr.bf16.gmra.mxu0 %v1350
    %v1748 = vpop.f32.mrf.mxu0
    %v1749 = vadd.f32 %v1683, %v1748
    %v1750 = vpop.f32.mrf.mxu0
    %v1751 = vpop.f32.mrf.mxu0
    %v1752 = vpop.f32.mrf.mxu0
    %1753 = vdwg.mxu0
    %v1754 = vtanh.pop %v1749
    %v1755 = vpack.c.bf16 %v1754, %v1754
    %s1756 = scalar_lea.vmem [#allocation2], 760
    %v1757 = vld [vmem:[%s1756] sm:$0xf]
    %v1758 = vld [vmem:[%s1756 + $0x4] sm:$0xf]
    %v1759 = vld [vmem:[%s1756 + $0x8] sm:$0xf]
    %v1760 = vld [vmem:[%s1756 + $0xc] sm:$0xf]
    %v1761 = vld [vmem:[%s1756 + $0x10] sm:$0xf]
    %v1762 = vld [vmem:[%s1756 + $0x14] sm:$0xf]
    %v1763 = vld [vmem:[%s1756 + $0x18] sm:$0xf]
    %v1764 = vld [vmem:[%s1756 + $0x1c] sm:$0xf]
    %v1765 = vld [vmem:[%s1756 + $0x20] sm:$0xf]
    %v1766 = vld [vmem:[%s1756 + $0x24] sm:$0xf]
    %v1767 = vlaneseq
    %v1768 = vshrl.u32 %v1767, 7
    %v1769 = vsub.s32 1, %v1768
    %v1770 = vrot.slane %v938, %v1769
    %v1781 = vunpack.c.l.b16 %v1757
    %v1782 = vunpack.c.l.b16 %v1758
    %v1783 = vunpack.c.l.b16 %v1759
    %v1784 = vunpack.c.l.b16 %v1760
    %v1785 = vunpack.c.l.b16 %v1761
    %v1786 = vunpack.c.l.b16 %v1762
    %v1787 = vunpack.c.l.b16 %v1763
    %v1788 = vunpack.c.l.b16 %v1764
    %v1789 = vunpack.c.l.b16 %v1765
    %v1790 = vunpack.c.l.b16 %v1766
    %v1791 = vpack.c.b16 %v1782, %v1781
    %v1792 = vpack.c.b16 %v1784, %v1783
    %v1793 = vpack.c.b16 %v1786, %v1785
    %v1794 = vpack.c.b16 %v1788, %v1787
    %v1795 = vpack.c.b16 %v1790, %v1789
    %v1802 = vsel %vm77, %v1755, 0
    %1804 = vmatprep.subr.bf16.mxu0 0
    %1805 = vmatpush1.bf16.msra.mxu0 0
    %1806 = vmatprep.subr.bf16.mxu0 0
    %1807 = vmatpush1.bf16.msra.mxu0 0
    %1808 = vmatprep.subr.bf16.mxu0 0
    %1809 = vmatpush1.bf16.msra.mxu0 0
    %1810 = vmatprep.subr.bf16.mxu0 0
    %1811 = vmatpush1.bf16.msra.mxu0 %v1795
    %1812 = vmatprep.subr.bf16.mxu0 0
    %1813 = vmatpush1.bf16.msra.mxu0 %v1794
    %1814 = vmatprep.subr.bf16.mxu0 0
    %1815 = vmatpush1.bf16.msra.mxu0 %v1793
    %1816 = vmatprep.subr.bf16.mxu0 0
    %1817 = vmatpush1.bf16.msra.mxu0 %v1792
    %1818 = vmatprep.subr.bf16.mxu0 0
    %1819 = vmatpush1.bf16.msra.mxu0 %v1791
    %1820 = vmatprep.subr.bf16.mxu0 0
    %1821 = vmatpush2.bf16.msra.mxu0 0
    %1822 = vmatprep.subr.bf16.mxu0 0
    %1823 = vmatpush2.bf16.msra.mxu0 0
    %1824 = vmatprep.subr.bf16.mxu0 0
    %1825 = vmatpush2.bf16.msra.mxu0 0
    %1826 = vmatprep.subr.bf16.mxu0 0
    %1827 = vmatpush2.bf16.msra.mxu0 0
    %1828 = vmatprep.subr.bf16.mxu0 0
    %1829 = vmatpush2.bf16.msra.mxu0 0
    %1830 = vmatprep.subr.bf16.mxu0 0
    %1831 = vmatpush2.bf16.msra.mxu0 0
    %1832 = vmatprep.subr.bf16.mxu0 0
    %1833 = vmatpush2.bf16.msra.mxu0 0
    %1834 = vmatprep.subr.bf16.mxu0 0
    %1835 = vmatpush2.bf16.msra.mxu0 0
    %1836 = vmatprep.mubr.bf16.mxu0 0
    %1837 = vmatmul.mubr.bf16.gmra.mxu0 %v1802
    %v1838 = vpop.f32.mrf.mxu0
    %v1839 = vadd.f32 %v1770, %v1838
    %v1840 = vpop.f32.mrf.mxu0
    %v1841 = vpop.f32.mrf.mxu0
    %v1842 = vpop.f32.mrf.mxu0
    %1843 = vdwg.mxu0
    %v1844 = vtanh.pop %v1839
    %1845 = vst [vmem:[%s1301 + $0x10] sm:$0xff] %v1844
    %s1846 = scalar_lea.vmem %s2, 32
    %v1847 = vld [vmem:[%s1846] sm:$0xff]
    %v1848 = vld [vmem:[%s1846 + $0x8] sm:$0x3]
    %s1849 = scalar_lea.vmem %s0, 16
    %v1850 = vld [vmem:[%s1849] sm:$0xff]
    %v1851 = vpack.c.bf16 %v1850, %v1850
    %s1852 = scalar_lea.vmem [#allocation2], 800
    %v1853 = vld [vmem:[%s1852] sm:$0xf]
    %v1854 = vld [vmem:[%s1852 + $0x4] sm:$0xf]
    %v1855 = vld [vmem:[%s1852 + $0x8] sm:$0xf]
    %v1856 = vld [vmem:[%s1852 + $0xc] sm:$0xf]
    %v1857 = vld [vmem:[%s1852 + $0x10] sm:$0xf]
    %v1858 = vld [vmem:[%s1852 + $0x14] sm:$0xf]
    %v1859 = vld [vmem:[%s1852 + $0x18] sm:$0xf]
    %v1860 = vld [vmem:[%s1852 + $0x1c] sm:$0xf]
    %v1861 = vld [vmem:[%s1852 + $0x20] sm:$0xf]
    %v1862 = vld [vmem:[%s1852 + $0x24] sm:$0xf]
    %v1863 = vlaneseq
    %v1864 = vshrl.u32 %v1863, 7
    %v1865 = vsub.s32 0, %v1864
    %v1866 = vrot.slane %v1847, %v1865
    %v1877 = vunpack.c.l.b16 %v1853
    %v1878 = vunpack.c.l.b16 %v1854
    %v1879 = vunpack.c.l.b16 %v1855
    %v1880 = vunpack.c.l.b16 %v1856
    %v1881 = vunpack.c.l.b16 %v1857
    %v1882 = vunpack.c.l.b16 %v1858
    %v1883 = vunpack.c.l.b16 %v1859
    %v1884 = vunpack.c.l.b16 %v1860
    %v1885 = vunpack.c.l.b16 %v1861
    %v1886 = vunpack.c.l.b16 %v1862
    %v1887 = vpack.c.b16 %v1878, %v1877
    %v1888 = vpack.c.b16 %v1880, %v1879
    %v1889 = vpack.c.b16 %v1882, %v1881
    %v1890 = vpack.c.b16 %v1884, %v1883
    %v1891 = vpack.c.b16 %v1886, %v1885
    %v1898 = vsel %vm77, %v1851, 0
    %1900 = vmatprep.subr.bf16.mxu0 0
    %1901 = vmatpush1.bf16.msra.mxu0 0
    %1902 = vmatprep.subr.bf16.mxu0 0
    %1903 = vmatpush1.bf16.msra.mxu0 0
    %1904 = vmatprep.subr.bf16.mxu0 0
    %1905 = vmatpush1.bf16.msra.mxu0 0
    %1906 = vmatprep.subr.bf16.mxu0 0
    %1907 = vmatpush1.bf16.msra.mxu0 %v1891
    %1908 = vmatprep.subr.bf16.mxu0 0
    %1909 = vmatpush1.bf16.msra.mxu0 %v1890
    %1910 = vmatprep.subr.bf16.mxu0 0
    %1911 = vmatpush1.bf16.msra.mxu0 %v1889
    %1912 = vmatprep.subr.bf16.mxu0 0
    %1913 = vmatpush1.bf16.msra.mxu0 %v1888
    %1914 = vmatprep.subr.bf16.mxu0 0
    %1915 = vmatpush1.bf16.msra.mxu0 %v1887
    %1916 = vmatprep.subr.bf16.mxu0 0
    %1917 = vmatpush2.bf16.msra.mxu0 0
    %1918 = vmatprep.subr.bf16.mxu0 0
    %1919 = vmatpush2.bf16.msra.mxu0 0
    %1920 = vmatprep.subr.bf16.mxu0 0
    %1921 = vmatpush2.bf16.msra.mxu0 0
    %1922 = vmatprep.subr.bf16.mxu0 0
    %1923 = vmatpush2.bf16.msra.mxu0 0
    %1924 = vmatprep.subr.bf16.mxu0 0
    %1925 = vmatpush2.bf16.msra.mxu0 0
    %1926 = vmatprep.subr.bf16.mxu0 0
    %1927 = vmatpush2.bf16.msra.mxu0 0
    %1928 = vmatprep.subr.bf16.mxu0 0
    %1929 = vmatpush2.bf16.msra.mxu0 0
    %1930 = vmatprep.subr.bf16.mxu0 0
    %1931 = vmatpush2.bf16.msra.mxu0 0
    %1932 = vmatprep.mubr.bf16.mxu0 0
    %1933 = vmatmul.mubr.bf16.gmra.mxu0 %v1898
    %v1934 = vpop.f32.mrf.mxu0
    %v1935 = vadd.f32 %v1866, %v1934
    %v1936 = vpop.f32.mrf.mxu0
    %v1937 = vpop.f32.mrf.mxu0
    %v1938 = vpop.f32.mrf.mxu0
    %1939 = vdwg.mxu0
    %v1940 = vtanh.pop %v1935
    %v1941 = vpack.c.bf16 %v1940, %v1940
    %s1942 = scalar_lea.vmem [#allocation2], 840
    %v1943 = vld [vmem:[%s1942] sm:$0xf]
    %v1944 = vld [vmem:[%s1942 + $0x4] sm:$0xf]
    %v1945 = vld [vmem:[%s1942 + $0x8] sm:$0xf]
    %v1946 = vld [vmem:[%s1942 + $0xc] sm:$0xf]
    %v1947 = vld [vmem:[%s1942 + $0x10] sm:$0xf]
    %v1948 = vld [vmem:[%s1942 + $0x14] sm:$0xf]
    %v1949 = vld [vmem:[%s1942 + $0x18] sm:$0xf]
    %v1950 = vld [vmem:[%s1942 + $0x1c] sm:$0xf]
    %v1951 = vld [vmem:[%s1942 + $0x20] sm:$0xf]
    %v1952 = vld [vmem:[%s1942 + $0x24] sm:$0xf]
    %v1953 = vlaneseq
    %v1954 = vshrl.u32 %v1953, 7
    %v1955 = vsub.s32 1, %v1954
    %v1956 = vrot.slane %v1847, %v1955
    %v1967 = vunpack.c.l.b16 %v1943
    %v1968 = vunpack.c.l.b16 %v1944
    %v1969 = vunpack.c.l.b16 %v1945
    %v1970 = vunpack.c.l.b16 %v1946
    %v1971 = vunpack.c.l.b16 %v1947
    %v1972 = vunpack.c.l.b16 %v1948
    %v1973 = vunpack.c.l.b16 %v1949
    %v1974 = vunpack.c.l.b16 %v1950
    %v1975 = vunpack.c.l.b16 %v1951
    %v1976 = vunpack.c.l.b16 %v1952
    %v1977 = vpack.c.b16 %v1968, %v1967
    %v1978 = vpack.c.b16 %v1970, %v1969
    %v1979 = vpack.c.b16 %v1972, %v1971
    %v1980 = vpack.c.b16 %v1974, %v1973
    %v1981 = vpack.c.b16 %v1976, %v1975
    %v1988 = vsel %vm77, %v1941, 0
    %1990 = vmatprep.subr.bf16.mxu0 0
    %1991 = vmatpush1.bf16.msra.mxu0 0
    %1992 = vmatprep.subr.bf16.mxu0 0
    %1993 = vmatpush1.bf16.msra.mxu0 0
    %1994 = vmatprep.subr.bf16.mxu0 0
    %1995 = vmatpush1.bf16.msra.mxu0 0
    %1996 = vmatprep.subr.bf16.mxu0 0
    %1997 = vmatpush1.bf16.msra.mxu0 %v1981
    %1998 = vmatprep.subr.bf16.mxu0 0
    %1999 = vmatpush1.bf16.msra.mxu0 %v1980
    %2000 = vmatprep.subr.bf16.mxu0 0
    %2001 = vmatpush1.bf16.msra.mxu0 %v1979
    %2002 = vmatprep.subr.bf16.mxu0 0
    %2003 = vmatpush1.bf16.msra.mxu0 %v1978
    %2004 = vmatprep.subr.bf16.mxu0 0
    %2005 = vmatpush1.bf16.msra.mxu0 %v1977
    %2006 = vmatprep.subr.bf16.mxu0 0
    %2007 = vmatpush2.bf16.msra.mxu0 0
    %2008 = vmatprep.subr.bf16.mxu0 0
    %2009 = vmatpush2.bf16.msra.mxu0 0
    %2010 = vmatprep.subr.bf16.mxu0 0
    %2011 = vmatpush2.bf16.msra.mxu0 0
    %2012 = vmatprep.subr.bf16.mxu0 0
    %2013 = vmatpush2.bf16.msra.mxu0 0
    %2014 = vmatprep.subr.bf16.mxu0 0
    %2015 = vmatpush2.bf16.msra.mxu0 0
    %2016 = vmatprep.subr.bf16.mxu0 0
    %2017 = vmatpush2.bf16.msra.mxu0 0
    %2018 = vmatprep.subr.bf16.mxu0 0
    %2019 = vmatpush2.bf16.msra.mxu0 0
    %2020 = vmatprep.subr.bf16.mxu0 0
    %2021 = vmatpush2.bf16.msra.mxu0 0
    %2022 = vmatprep.mubr.bf16.mxu0 0
    %2023 = vmatmul.mubr.bf16.gmra.mxu0 %v1988
    %v2024 = vpop.f32.mrf.mxu0
    %v2025 = vadd.f32 %v1956, %v2024
    %v2026 = vpop.f32.mrf.mxu0
    %v2027 = vpop.f32.mrf.mxu0
    %v2028 = vpop.f32.mrf.mxu0
    %2029 = vdwg.mxu0
    %v2030 = vtanh.pop %v2025
    %v2031 = vpack.c.bf16 %v2030, %v2030
    %s2032 = scalar_lea.vmem [#allocation2], 880
    %v2033 = vld [vmem:[%s2032] sm:$0xf]
    %v2034 = vld [vmem:[%s2032 + $0x4] sm:$0xf]
    %v2035 = vld [vmem:[%s2032 + $0x8] sm:$0xf]
    %v2036 = vld [vmem:[%s2032 + $0xc] sm:$0xf]
    %v2037 = vld [vmem:[%s2032 + $0x10] sm:$0xf]
    %v2038 = vld [vmem:[%s2032 + $0x14] sm:$0xf]
    %v2039 = vld [vmem:[%s2032 + $0x18] sm:$0xf]
    %v2040 = vld [vmem:[%s2032 + $0x1c] sm:$0xf]
    %v2041 = vld [vmem:[%s2032 + $0x20] sm:$0xf]
    %v2042 = vld [vmem:[%s2032 + $0x24] sm:$0xf]
    %v2043 = vlaneseq
    %v2044 = vshrl.u32 %v2043, 7
    %v2045 = vsub.s32 2, %v2044
    %v2046 = vrot.slane %v1847, %v2045
    %v2057 = vunpack.c.l.b16 %v2033
    %v2058 = vunpack.c.l.b16 %v2034
    %v2059 = vunpack.c.l.b16 %v2035
    %v2060 = vunpack.c.l.b16 %v2036
    %v2061 = vunpack.c.l.b16 %v2037
    %v2062 = vunpack.c.l.b16 %v2038
    %v2063 = vunpack.c.l.b16 %v2039
    %v2064 = vunpack.c.l.b16 %v2040
    %v2065 = vunpack.c.l.b16 %v2041
    %v2066 = vunpack.c.l.b16 %v2042
    %v2067 = vpack.c.b16 %v2058, %v2057
    %v2068 = vpack.c.b16 %v2060, %v2059
    %v2069 = vpack.c.b16 %v2062, %v2061
    %v2070 = vpack.c.b16 %v2064, %v2063
    %v2071 = vpack.c.b16 %v2066, %v2065
    %v2078 = vsel %vm77, %v2031, 0
    %2080 = vmatprep.subr.bf16.mxu0 0
    %2081 = vmatpush1.bf16.msra.mxu0 0
    %2082 = vmatprep.subr.bf16.mxu0 0
    %2083 = vmatpush1.bf16.msra.mxu0 0
    %2084 = vmatprep.subr.bf16.mxu0 0
    %2085 = vmatpush1.bf16.msra.mxu0 0
    %2086 = vmatprep.subr.bf16.mxu0 0
    %2087 = vmatpush1.bf16.msra.mxu0 %v2071
    %2088 = vmatprep.subr.bf16.mxu0 0
    %2089 = vmatpush1.bf16.msra.mxu0 %v2070
    %2090 = vmatprep.subr.bf16.mxu0 0
    %2091 = vmatpush1.bf16.msra.mxu0 %v2069
    %2092 = vmatprep.subr.bf16.mxu0 0
    %2093 = vmatpush1.bf16.msra.mxu0 %v2068
    %2094 = vmatprep.subr.bf16.mxu0 0
    %2095 = vmatpush1.bf16.msra.mxu0 %v2067
    %2096 = vmatprep.subr.bf16.mxu0 0
    %2097 = vmatpush2.bf16.msra.mxu0 0
    %2098 = vmatprep.subr.bf16.mxu0 0
    %2099 = vmatpush2.bf16.msra.mxu0 0
    %2100 = vmatprep.subr.bf16.mxu0 0
    %2101 = vmatpush2.bf16.msra.mxu0 0
    %2102 = vmatprep.subr.bf16.mxu0 0
    %2103 = vmatpush2.bf16.msra.mxu0 0
    %2104 = vmatprep.subr.bf16.mxu0 0
    %2105 = vmatpush2.bf16.msra.mxu0 0
    %2106 = vmatprep.subr.bf16.mxu0 0
    %2107 = vmatpush2.bf16.msra.mxu0 0
    %2108 = vmatprep.subr.bf16.mxu0 0
    %2109 = vmatpush2.bf16.msra.mxu0 0
    %2110 = vmatprep.subr.bf16.mxu0 0
    %2111 = vmatpush2.bf16.msra.mxu0 0
    %2112 = vmatprep.mubr.bf16.mxu0 0
    %2113 = vmatmul.mubr.bf16.gmra.mxu0 %v2078
    %v2114 = vpop.f32.mrf.mxu0
    %v2115 = vadd.f32 %v2046, %v2114
    %v2116 = vpop.f32.mrf.mxu0
    %v2117 = vpop.f32.mrf.mxu0
    %v2118 = vpop.f32.mrf.mxu0
    %2119 = vdwg.mxu0
    %v2120 = vtanh.pop %v2115
    %v2121 = vpack.c.bf16 %v2120, %v2120
    %s2122 = scalar_lea.vmem [#allocation2], 920
    %v2123 = vld [vmem:[%s2122] sm:$0xf]
    %v2124 = vld [vmem:[%s2122 + $0x4] sm:$0xf]
    %v2125 = vld [vmem:[%s2122 + $0x8] sm:$0xf]
    %v2126 = vld [vmem:[%s2122 + $0xc] sm:$0xf]
    %v2127 = vld [vmem:[%s2122 + $0x10] sm:$0xf]
    %v2128 = vld [vmem:[%s2122 + $0x14] sm:$0xf]
    %v2129 = vld [vmem:[%s2122 + $0x18] sm:$0xf]
    %v2130 = vld [vmem:[%s2122 + $0x1c] sm:$0xf]
    %v2131 = vld [vmem:[%s2122 + $0x20] sm:$0xf]
    %v2132 = vld [vmem:[%s2122 + $0x24] sm:$0xf]
    %v2133 = vlaneseq
    %v2134 = vshrl.u32 %v2133, 7
    %v2135 = vsub.s32 3, %v2134
    %v2136 = vrot.slane %v1847, %v2135
    %v2147 = vunpack.c.l.b16 %v2123
    %v2148 = vunpack.c.l.b16 %v2124
    %v2149 = vunpack.c.l.b16 %v2125
    %v2150 = vunpack.c.l.b16 %v2126
    %v2151 = vunpack.c.l.b16 %v2127
    %v2152 = vunpack.c.l.b16 %v2128
    %v2153 = vunpack.c.l.b16 %v2129
    %v2154 = vunpack.c.l.b16 %v2130
    %v2155 = vunpack.c.l.b16 %v2131
    %v2156 = vunpack.c.l.b16 %v2132
    %v2157 = vpack.c.b16 %v2148, %v2147
    %v2158 = vpack.c.b16 %v2150, %v2149
    %v2159 = vpack.c.b16 %v2152, %v2151
    %v2160 = vpack.c.b16 %v2154, %v2153
    %v2161 = vpack.c.b16 %v2156, %v2155
    %v2168 = vsel %vm77, %v2121, 0
    %2170 = vmatprep.subr.bf16.mxu0 0
    %2171 = vmatpush1.bf16.msra.mxu0 0
    %2172 = vmatprep.subr.bf16.mxu0 0
    %2173 = vmatpush1.bf16.msra.mxu0 0
    %2174 = vmatprep.subr.bf16.mxu0 0
    %2175 = vmatpush1.bf16.msra.mxu0 0
    %2176 = vmatprep.subr.bf16.mxu0 0
    %2177 = vmatpush1.bf16.msra.mxu0 %v2161
    %2178 = vmatprep.subr.bf16.mxu0 0
    %2179 = vmatpush1.bf16.msra.mxu0 %v2160
    %2180 = vmatprep.subr.bf16.mxu0 0
    %2181 = vmatpush1.bf16.msra.mxu0 %v2159
    %2182 = vmatprep.subr.bf16.mxu0 0
    %2183 = vmatpush1.bf16.msra.mxu0 %v2158
    %2184 = vmatprep.subr.bf16.mxu0 0
    %2185 = vmatpush1.bf16.msra.mxu0 %v2157
    %2186 = vmatprep.subr.bf16.mxu0 0
    %2187 = vmatpush2.bf16.msra.mxu0 0
    %2188 = vmatprep.subr.bf16.mxu0 0
    %2189 = vmatpush2.bf16.msra.mxu0 0
    %2190 = vmatprep.subr.bf16.mxu0 0
    %2191 = vmatpush2.bf16.msra.mxu0 0
    %2192 = vmatprep.subr.bf16.mxu0 0
    %2193 = vmatpush2.bf16.msra.mxu0 0
    %2194 = vmatprep.subr.bf16.mxu0 0
    %2195 = vmatpush2.bf16.msra.mxu0 0
    %2196 = vmatprep.subr.bf16.mxu0 0
    %2197 = vmatpush2.bf16.msra.mxu0 0
    %2198 = vmatprep.subr.bf16.mxu0 0
    %2199 = vmatpush2.bf16.msra.mxu0 0
    %2200 = vmatprep.subr.bf16.mxu0 0
    %2201 = vmatpush2.bf16.msra.mxu0 0
    %2202 = vmatprep.mubr.bf16.mxu0 0
    %2203 = vmatmul.mubr.bf16.gmra.mxu0 %v2168
    %v2204 = vpop.f32.mrf.mxu0
    %v2205 = vadd.f32 %v2136, %v2204
    %v2206 = vpop.f32.mrf.mxu0
    %v2207 = vpop.f32.mrf.mxu0
    %v2208 = vpop.f32.mrf.mxu0
    %2209 = vdwg.mxu0
    %v2210 = vtanh.pop %v2205
    %s2211 = scalar_lea.vmem %s3, 48
    %2212 = vst [vmem:[%s2211] sm:$0xff] %v2210
    %v2213 = vpack.c.bf16 %v2210, %v2210
    %s2214 = scalar_lea.vmem [#allocation2], 960
    %v2215 = vld [vmem:[%s2214] sm:$0xf]
    %v2216 = vld [vmem:[%s2214 + $0x4] sm:$0xf]
    %v2217 = vld [vmem:[%s2214 + $0x8] sm:$0xf]
    %v2218 = vld [vmem:[%s2214 + $0xc] sm:$0xf]
    %v2219 = vld [vmem:[%s2214 + $0x10] sm:$0xf]
    %v2220 = vld [vmem:[%s2214 + $0x14] sm:$0xf]
    %v2221 = vld [vmem:[%s2214 + $0x18] sm:$0xf]
    %v2222 = vld [vmem:[%s2214 + $0x1c] sm:$0xf]
    %v2223 = vld [vmem:[%s2214 + $0x20] sm:$0xf]
    %v2224 = vld [vmem:[%s2214 + $0x24] sm:$0xf]
    %v2225 = vlaneseq
    %v2226 = vshrl.u32 %v2225, 7
    %v2227 = vsub.s32 4, %v2226
    %v2228 = vrot.slane %v1847, %v2227
    %v2239 = vunpack.c.l.b16 %v2215
    %v2240 = vunpack.c.l.b16 %v2216
    %v2241 = vunpack.c.l.b16 %v2217
    %v2242 = vunpack.c.l.b16 %v2218
    %v2243 = vunpack.c.l.b16 %v2219
    %v2244 = vunpack.c.l.b16 %v2220
    %v2245 = vunpack.c.l.b16 %v2221
    %v2246 = vunpack.c.l.b16 %v2222
    %v2247 = vunpack.c.l.b16 %v2223
    %v2248 = vunpack.c.l.b16 %v2224
    %v2249 = vpack.c.b16 %v2240, %v2239
    %v2250 = vpack.c.b16 %v2242, %v2241
    %v2251 = vpack.c.b16 %v2244, %v2243
    %v2252 = vpack.c.b16 %v2246, %v2245
    %v2253 = vpack.c.b16 %v2248, %v2247
    %v2260 = vsel %vm77, %v2213, 0
    %2262 = vmatprep.subr.bf16.mxu0 0
    %2263 = vmatpush1.bf16.msra.mxu0 0
    %2264 = vmatprep.subr.bf16.mxu0 0
    %2265 = vmatpush1.bf16.msra.mxu0 0
    %2266 = vmatprep.subr.bf16.mxu0 0
    %2267 = vmatpush1.bf16.msra.mxu0 0
    %2268 = vmatprep.subr.bf16.mxu0 0
    %2269 = vmatpush1.bf16.msra.mxu0 %v2253
    %2270 = vmatprep.subr.bf16.mxu0 0
    %2271 = vmatpush1.bf16.msra.mxu0 %v2252
    %2272 = vmatprep.subr.bf16.mxu0 0
    %2273 = vmatpush1.bf16.msra.mxu0 %v2251
    %2274 = vmatprep.subr.bf16.mxu0 0
    %2275 = vmatpush1.bf16.msra.mxu0 %v2250
    %2276 = vmatprep.subr.bf16.mxu0 0
    %2277 = vmatpush1.bf16.msra.mxu0 %v2249
    %2278 = vmatprep.subr.bf16.mxu0 0
    %2279 = vmatpush2.bf16.msra.mxu0 0
    %2280 = vmatprep.subr.bf16.mxu0 0
    %2281 = vmatpush2.bf16.msra.mxu0 0
    %2282 = vmatprep.subr.bf16.mxu0 0
    %2283 = vmatpush2.bf16.msra.mxu0 0
    %2284 = vmatprep.subr.bf16.mxu0 0
    %2285 = vmatpush2.bf16.msra.mxu0 0
    %2286 = vmatprep.subr.bf16.mxu0 0
    %2287 = vmatpush2.bf16.msra.mxu0 0
    %2288 = vmatprep.subr.bf16.mxu0 0
    %2289 = vmatpush2.bf16.msra.mxu0 0
    %2290 = vmatprep.subr.bf16.mxu0 0
    %2291 = vmatpush2.bf16.msra.mxu0 0
    %2292 = vmatprep.subr.bf16.mxu0 0
    %2293 = vmatpush2.bf16.msra.mxu0 0
    %2294 = vmatprep.mubr.bf16.mxu0 0
    %2295 = vmatmul.mubr.bf16.gmra.mxu0 %v2260
    %v2296 = vpop.f32.mrf.mxu0
    %v2297 = vadd.f32 %v2228, %v2296
    %v2298 = vpop.f32.mrf.mxu0
    %v2299 = vpop.f32.mrf.mxu0
    %v2300 = vpop.f32.mrf.mxu0
    %2301 = vdwg.mxu0
    %v2302 = vtanh.pop %v2297
    %v2303 = vpack.c.bf16 %v2302, %v2302
    %s2304 = scalar_lea.vmem [#allocation2], 1000
    %v2305 = vld [vmem:[%s2304] sm:$0xf]
    %v2306 = vld [vmem:[%s2304 + $0x4] sm:$0xf]
    %v2307 = vld [vmem:[%s2304 + $0x8] sm:$0xf]
    %v2308 = vld [vmem:[%s2304 + $0xc] sm:$0xf]
    %v2309 = vld [vmem:[%s2304 + $0x10] sm:$0xf]
    %v2310 = vld [vmem:[%s2304 + $0x14] sm:$0xf]
    %v2311 = vld [vmem:[%s2304 + $0x18] sm:$0xf]
    %v2312 = vld [vmem:[%s2304 + $0x1c] sm:$0xf]
    %v2313 = vld [vmem:[%s2304 + $0x20] sm:$0xf]
    %v2314 = vld [vmem:[%s2304 + $0x24] sm:$0xf]
    %v2315 = vlaneseq
    %v2316 = vshrl.u32 %v2315, 7
    %v2317 = vsub.s32 5, %v2316
    %v2318 = vrot.slane %v1847, %v2317
    %v2329 = vunpack.c.l.b16 %v2305
    %v2330 = vunpack.c.l.b16 %v2306
    %v2331 = vunpack.c.l.b16 %v2307
    %v2332 = vunpack.c.l.b16 %v2308
    %v2333 = vunpack.c.l.b16 %v2309
    %v2334 = vunpack.c.l.b16 %v2310
    %v2335 = vunpack.c.l.b16 %v2311
    %v2336 = vunpack.c.l.b16 %v2312
    %v2337 = vunpack.c.l.b16 %v2313
    %v2338 = vunpack.c.l.b16 %v2314
    %v2339 = vpack.c.b16 %v2330, %v2329
    %v2340 = vpack.c.b16 %v2332, %v2331
    %v2341 = vpack.c.b16 %v2334, %v2333
    %v2342 = vpack.c.b16 %v2336, %v2335
    %v2343 = vpack.c.b16 %v2338, %v2337
    %v2350 = vsel %vm77, %v2303, 0
    %2352 = vmatprep.subr.bf16.mxu0 0
    %2353 = vmatpush1.bf16.msra.mxu0 0
    %2354 = vmatprep.subr.bf16.mxu0 0
    %2355 = vmatpush1.bf16.msra.mxu0 0
    %2356 = vmatprep.subr.bf16.mxu0 0
    %2357 = vmatpush1.bf16.msra.mxu0 0
    %2358 = vmatprep.subr.bf16.mxu0 0
    %2359 = vmatpush1.bf16.msra.mxu0 %v2343
    %2360 = vmatprep.subr.bf16.mxu0 0
    %2361 = vmatpush1.bf16.msra.mxu0 %v2342
    %2362 = vmatprep.subr.bf16.mxu0 0
    %2363 = vmatpush1.bf16.msra.mxu0 %v2341
    %2364 = vmatprep.subr.bf16.mxu0 0
    %2365 = vmatpush1.bf16.msra.mxu0 %v2340
    %2366 = vmatprep.subr.bf16.mxu0 0
    %2367 = vmatpush1.bf16.msra.mxu0 %v2339
    %2368 = vmatprep.subr.bf16.mxu0 0
    %2369 = vmatpush2.bf16.msra.mxu0 0
    %2370 = vmatprep.subr.bf16.mxu0 0
    %2371 = vmatpush2.bf16.msra.mxu0 0
    %2372 = vmatprep.subr.bf16.mxu0 0
    %2373 = vmatpush2.bf16.msra.mxu0 0
    %2374 = vmatprep.subr.bf16.mxu0 0
    %2375 = vmatpush2.bf16.msra.mxu0 0
    %2376 = vmatprep.subr.bf16.mxu0 0
    %2377 = vmatpush2.bf16.msra.mxu0 0
    %2378 = vmatprep.subr.bf16.mxu0 0
    %2379 = vmatpush2.bf16.msra.mxu0 0
    %2380 = vmatprep.subr.bf16.mxu0 0
    %2381 = vmatpush2.bf16.msra.mxu0 0
    %2382 = vmatprep.subr.bf16.mxu0 0
    %2383 = vmatpush2.bf16.msra.mxu0 0
    %2384 = vmatprep.mubr.bf16.mxu0 0
    %2385 = vmatmul.mubr.bf16.gmra.mxu0 %v2350
    %v2386 = vpop.f32.mrf.mxu0
    %v2387 = vadd.f32 %v2318, %v2386
    %v2388 = vpop.f32.mrf.mxu0
    %v2389 = vpop.f32.mrf.mxu0
    %v2390 = vpop.f32.mrf.mxu0
    %2391 = vdwg.mxu0
    %v2392 = vtanh.pop %v2387
    %v2393 = vpack.c.bf16 %v2392, %v2392
    %s2394 = scalar_lea.vmem [#allocation2], 1040
    %v2395 = vld [vmem:[%s2394] sm:$0xf]
    %v2396 = vld [vmem:[%s2394 + $0x4] sm:$0xf]
    %v2397 = vld [vmem:[%s2394 + $0x8] sm:$0xf]
    %v2398 = vld [vmem:[%s2394 + $0xc] sm:$0xf]
    %v2399 = vld [vmem:[%s2394 + $0x10] sm:$0xf]
    %v2400 = vld [vmem:[%s2394 + $0x14] sm:$0xf]
    %v2401 = vld [vmem:[%s2394 + $0x18] sm:$0xf]
    %v2402 = vld [vmem:[%s2394 + $0x1c] sm:$0xf]
    %v2403 = vld [vmem:[%s2394 + $0x20] sm:$0xf]
    %v2404 = vld [vmem:[%s2394 + $0x24] sm:$0xf]
    %v2405 = vlaneseq
    %v2406 = vshrl.u32 %v2405, 7
    %v2407 = vsub.s32 6, %v2406
    %v2408 = vrot.slane %v1847, %v2407
    %v2419 = vunpack.c.l.b16 %v2395
    %v2420 = vunpack.c.l.b16 %v2396
    %v2421 = vunpack.c.l.b16 %v2397
    %v2422 = vunpack.c.l.b16 %v2398
    %v2423 = vunpack.c.l.b16 %v2399
    %v2424 = vunpack.c.l.b16 %v2400
    %v2425 = vunpack.c.l.b16 %v2401
    %v2426 = vunpack.c.l.b16 %v2402
    %v2427 = vunpack.c.l.b16 %v2403
    %v2428 = vunpack.c.l.b16 %v2404
    %v2429 = vpack.c.b16 %v2420, %v2419
    %v2430 = vpack.c.b16 %v2422, %v2421
    %v2431 = vpack.c.b16 %v2424, %v2423
    %v2432 = vpack.c.b16 %v2426, %v2425
    %v2433 = vpack.c.b16 %v2428, %v2427
    %v2440 = vsel %vm77, %v2393, 0
    %2442 = vmatprep.subr.bf16.mxu0 0
    %2443 = vmatpush1.bf16.msra.mxu0 0
    %2444 = vmatprep.subr.bf16.mxu0 0
    %2445 = vmatpush1.bf16.msra.mxu0 0
    %2446 = vmatprep.subr.bf16.mxu0 0
    %2447 = vmatpush1.bf16.msra.mxu0 0
    %2448 = vmatprep.subr.bf16.mxu0 0
    %2449 = vmatpush1.bf16.msra.mxu0 %v2433
    %2450 = vmatprep.subr.bf16.mxu0 0
    %2451 = vmatpush1.bf16.msra.mxu0 %v2432
    %2452 = vmatprep.subr.bf16.mxu0 0
    %2453 = vmatpush1.bf16.msra.mxu0 %v2431
    %2454 = vmatprep.subr.bf16.mxu0 0
    %2455 = vmatpush1.bf16.msra.mxu0 %v2430
    %2456 = vmatprep.subr.bf16.mxu0 0
    %2457 = vmatpush1.bf16.msra.mxu0 %v2429
    %2458 = vmatprep.subr.bf16.mxu0 0
    %2459 = vmatpush2.bf16.msra.mxu0 0
    %2460 = vmatprep.subr.bf16.mxu0 0
    %2461 = vmatpush2.bf16.msra.mxu0 0
    %2462 = vmatprep.subr.bf16.mxu0 0
    %2463 = vmatpush2.bf16.msra.mxu0 0
    %2464 = vmatprep.subr.bf16.mxu0 0
    %2465 = vmatpush2.bf16.msra.mxu0 0
    %2466 = vmatprep.subr.bf16.mxu0 0
    %2467 = vmatpush2.bf16.msra.mxu0 0
    %2468 = vmatprep.subr.bf16.mxu0 0
    %2469 = vmatpush2.bf16.msra.mxu0 0
    %2470 = vmatprep.subr.bf16.mxu0 0
    %2471 = vmatpush2.bf16.msra.mxu0 0
    %2472 = vmatprep.subr.bf16.mxu0 0
    %2473 = vmatpush2.bf16.msra.mxu0 0
    %2474 = vmatprep.mubr.bf16.mxu0 0
    %2475 = vmatmul.mubr.bf16.gmra.mxu0 %v2440
    %v2476 = vpop.f32.mrf.mxu0
    %v2477 = vadd.f32 %v2408, %v2476
    %v2478 = vpop.f32.mrf.mxu0
    %v2479 = vpop.f32.mrf.mxu0
    %v2480 = vpop.f32.mrf.mxu0
    %2481 = vdwg.mxu0
    %v2482 = vtanh.pop %v2477
    %v2483 = vpack.c.bf16 %v2482, %v2482
    %s2484 = scalar_lea.vmem [#allocation2], 1080
    %v2485 = vld [vmem:[%s2484] sm:$0xf]
    %v2486 = vld [vmem:[%s2484 + $0x4] sm:$0xf]
    %v2487 = vld [vmem:[%s2484 + $0x8] sm:$0xf]
    %v2488 = vld [vmem:[%s2484 + $0xc] sm:$0xf]
    %v2489 = vld [vmem:[%s2484 + $0x10] sm:$0xf]
    %v2490 = vld [vmem:[%s2484 + $0x14] sm:$0xf]
    %v2491 = vld [vmem:[%s2484 + $0x18] sm:$0xf]
    %v2492 = vld [vmem:[%s2484 + $0x1c] sm:$0xf]
    %v2493 = vld [vmem:[%s2484 + $0x20] sm:$0xf]
    %v2494 = vld [vmem:[%s2484 + $0x24] sm:$0xf]
    %v2495 = vlaneseq
    %v2496 = vshrl.u32 %v2495, 7
    %v2497 = vsub.s32 7, %v2496
    %v2498 = vrot.slane %v1847, %v2497
    %v2509 = vunpack.c.l.b16 %v2485
    %v2510 = vunpack.c.l.b16 %v2486
    %v2511 = vunpack.c.l.b16 %v2487
    %v2512 = vunpack.c.l.b16 %v2488
    %v2513 = vunpack.c.l.b16 %v2489
    %v2514 = vunpack.c.l.b16 %v2490
    %v2515 = vunpack.c.l.b16 %v2491
    %v2516 = vunpack.c.l.b16 %v2492
    %v2517 = vunpack.c.l.b16 %v2493
    %v2518 = vunpack.c.l.b16 %v2494
    %v2519 = vpack.c.b16 %v2510, %v2509
    %v2520 = vpack.c.b16 %v2512, %v2511
    %v2521 = vpack.c.b16 %v2514, %v2513
    %v2522 = vpack.c.b16 %v2516, %v2515
    %v2523 = vpack.c.b16 %v2518, %v2517
    %v2530 = vsel %vm77, %v2483, 0
    %2532 = vmatprep.subr.bf16.mxu0 0
    %2533 = vmatpush1.bf16.msra.mxu0 0
    %2534 = vmatprep.subr.bf16.mxu0 0
    %2535 = vmatpush1.bf16.msra.mxu0 0
    %2536 = vmatprep.subr.bf16.mxu0 0
    %2537 = vmatpush1.bf16.msra.mxu0 0
    %2538 = vmatprep.subr.bf16.mxu0 0
    %2539 = vmatpush1.bf16.msra.mxu0 %v2523
    %2540 = vmatprep.subr.bf16.mxu0 0
    %2541 = vmatpush1.bf16.msra.mxu0 %v2522
    %2542 = vmatprep.subr.bf16.mxu0 0
    %2543 = vmatpush1.bf16.msra.mxu0 %v2521
    %2544 = vmatprep.subr.bf16.mxu0 0
    %2545 = vmatpush1.bf16.msra.mxu0 %v2520
    %2546 = vmatprep.subr.bf16.mxu0 0
    %2547 = vmatpush1.bf16.msra.mxu0 %v2519
    %2548 = vmatprep.subr.bf16.mxu0 0
    %2549 = vmatpush2.bf16.msra.mxu0 0
    %2550 = vmatprep.subr.bf16.mxu0 0
    %2551 = vmatpush2.bf16.msra.mxu0 0
    %2552 = vmatprep.subr.bf16.mxu0 0
    %2553 = vmatpush2.bf16.msra.mxu0 0
    %2554 = vmatprep.subr.bf16.mxu0 0
    %2555 = vmatpush2.bf16.msra.mxu0 0
    %2556 = vmatprep.subr.bf16.mxu0 0
    %2557 = vmatpush2.bf16.msra.mxu0 0
    %2558 = vmatprep.subr.bf16.mxu0 0
    %2559 = vmatpush2.bf16.msra.mxu0 0
    %2560 = vmatprep.subr.bf16.mxu0 0
    %2561 = vmatpush2.bf16.msra.mxu0 0
    %2562 = vmatprep.subr.bf16.mxu0 0
    %2563 = vmatpush2.bf16.msra.mxu0 0
    %2564 = vmatprep.mubr.bf16.mxu0 0
    %2565 = vmatmul.mubr.bf16.gmra.mxu0 %v2530
    %v2566 = vpop.f32.mrf.mxu0
    %v2567 = vadd.f32 %v2498, %v2566
    %v2568 = vpop.f32.mrf.mxu0
    %v2569 = vpop.f32.mrf.mxu0
    %v2570 = vpop.f32.mrf.mxu0
    %2571 = vdwg.mxu0
    %v2572 = vxor.u32 %v2567, 2147483648
    %v2573 = vmul.f32 %v2572, 1.442695
    %v2574 = vpow.pop %v2573
    %v2575 = vadd.f32 %v2574, 1.0
    %v2576 = vrcp.pop %v2575
    %v2577 = vmul.f32 1.0, %v2576
    %2578 = vst [vmem:[%s2211 + $0x8] sm:$0xff] %v2577
    %s2579 = scalar_lea.vmem [#allocation2], 1120
    %v2580 = vld [vmem:[%s2579] sm:$0xf]
    %v2581 = vld [vmem:[%s2579 + $0x4] sm:$0xf]
    %v2582 = vld [vmem:[%s2579 + $0x8] sm:$0xf]
    %v2583 = vld [vmem:[%s2579 + $0xc] sm:$0xf]
    %v2584 = vld [vmem:[%s2579 + $0x10] sm:$0xf]
    %v2585 = vld [vmem:[%s2579 + $0x14] sm:$0xf]
    %v2586 = vld [vmem:[%s2579 + $0x18] sm:$0xf]
    %v2587 = vld [vmem:[%s2579 + $0x1c] sm:$0xf]
    %v2588 = vld [vmem:[%s2579 + $0x20] sm:$0xf]
    %v2589 = vld [vmem:[%s2579 + $0x24] sm:$0xf]
    %v2590 = vlaneseq
    %v2591 = vshrl.u32 %v2590, 7
    %v2592 = vsub.s32 0, %v2591
    %v2593 = vrot.slane %v1848, %v2592
    %v2604 = vunpack.c.l.b16 %v2580
    %v2605 = vunpack.c.l.b16 %v2581
    %v2606 = vunpack.c.l.b16 %v2582
    %v2607 = vunpack.c.l.b16 %v2583
    %v2608 = vunpack.c.l.b16 %v2584
    %v2609 = vunpack.c.l.b16 %v2585
    %v2610 = vunpack.c.l.b16 %v2586
    %v2611 = vunpack.c.l.b16 %v2587
    %v2612 = vunpack.c.l.b16 %v2588
    %v2613 = vunpack.c.l.b16 %v2589
    %v2614 = vpack.c.b16 %v2605, %v2604
    %v2615 = vpack.c.b16 %v2607, %v2606
    %v2616 = vpack.c.b16 %v2609, %v2608
    %v2617 = vpack.c.b16 %v2611, %v2610
    %v2618 = vpack.c.b16 %v2613, %v2612
    %2624 = vmatprep.subr.bf16.mxu0 0
    %2625 = vmatpush1.bf16.msra.mxu0 0
    %2626 = vmatprep.subr.bf16.mxu0 0
    %2627 = vmatpush1.bf16.msra.mxu0 0
    %2628 = vmatprep.subr.bf16.mxu0 0
    %2629 = vmatpush1.bf16.msra.mxu0 0
    %2630 = vmatprep.subr.bf16.mxu0 0
    %2631 = vmatpush1.bf16.msra.mxu0 %v2618
    %2632 = vmatprep.subr.bf16.mxu0 0
    %2633 = vmatpush1.bf16.msra.mxu0 %v2617
    %2634 = vmatprep.subr.bf16.mxu0 0
    %2635 = vmatpush1.bf16.msra.mxu0 %v2616
    %2636 = vmatprep.subr.bf16.mxu0 0
    %2637 = vmatpush1.bf16.msra.mxu0 %v2615
    %2638 = vmatprep.subr.bf16.mxu0 0
    %2639 = vmatpush1.bf16.msra.mxu0 %v2614
    %2640 = vmatprep.subr.bf16.mxu0 0
    %2641 = vmatpush2.bf16.msra.mxu0 0
    %2642 = vmatprep.subr.bf16.mxu0 0
    %2643 = vmatpush2.bf16.msra.mxu0 0
    %2644 = vmatprep.subr.bf16.mxu0 0
    %2645 = vmatpush2.bf16.msra.mxu0 0
    %2646 = vmatprep.subr.bf16.mxu0 0
    %2647 = vmatpush2.bf16.msra.mxu0 0
    %2648 = vmatprep.subr.bf16.mxu0 0
    %2649 = vmatpush2.bf16.msra.mxu0 0
    %2650 = vmatprep.subr.bf16.mxu0 0
    %2651 = vmatpush2.bf16.msra.mxu0 0
    %2652 = vmatprep.subr.bf16.mxu0 0
    %2653 = vmatpush2.bf16.msra.mxu0 0
    %2654 = vmatprep.subr.bf16.mxu0 0
    %2655 = vmatpush2.bf16.msra.mxu0 0
    %2656 = vmatprep.mubr.bf16.mxu0 0
    %2657 = vmatmul.mubr.bf16.gmra.mxu0 %v2260
    %v2658 = vpop.f32.mrf.mxu0
    %v2659 = vadd.f32 %v2593, %v2658
    %v2660 = vpop.f32.mrf.mxu0
    %v2661 = vpop.f32.mrf.mxu0
    %v2662 = vpop.f32.mrf.mxu0
    %2663 = vdwg.mxu0
    %v2664 = vtanh.pop %v2659
    %v2665 = vpack.c.bf16 %v2664, %v2664
    %s2666 = scalar_lea.vmem [#allocation2], 1160
    %v2667 = vld [vmem:[%s2666] sm:$0xf]
    %v2668 = vld [vmem:[%s2666 + $0x4] sm:$0xf]
    %v2669 = vld [vmem:[%s2666 + $0x8] sm:$0xf]
    %v2670 = vld [vmem:[%s2666 + $0xc] sm:$0xf]
    %v2671 = vld [vmem:[%s2666 + $0x10] sm:$0xf]
    %v2672 = vld [vmem:[%s2666 + $0x14] sm:$0xf]
    %v2673 = vld [vmem:[%s2666 + $0x18] sm:$0xf]
    %v2674 = vld [vmem:[%s2666 + $0x1c] sm:$0xf]
    %v2675 = vld [vmem:[%s2666 + $0x20] sm:$0xf]
    %v2676 = vld [vmem:[%s2666 + $0x24] sm:$0xf]
    %v2677 = vlaneseq
    %v2678 = vshrl.u32 %v2677, 7
    %v2679 = vsub.s32 1, %v2678
    %v2680 = vrot.slane %v1848, %v2679
    %v2691 = vunpack.c.l.b16 %v2667
    %v2692 = vunpack.c.l.b16 %v2668
    %v2693 = vunpack.c.l.b16 %v2669
    %v2694 = vunpack.c.l.b16 %v2670
    %v2695 = vunpack.c.l.b16 %v2671
    %v2696 = vunpack.c.l.b16 %v2672
    %v2697 = vunpack.c.l.b16 %v2673
    %v2698 = vunpack.c.l.b16 %v2674
    %v2699 = vunpack.c.l.b16 %v2675
    %v2700 = vunpack.c.l.b16 %v2676
    %v2701 = vpack.c.b16 %v2692, %v2691
    %v2702 = vpack.c.b16 %v2694, %v2693
    %v2703 = vpack.c.b16 %v2696, %v2695
    %v2704 = vpack.c.b16 %v2698, %v2697
    %v2705 = vpack.c.b16 %v2700, %v2699
    %v2712 = vsel %vm77, %v2665, 0
    %2714 = vmatprep.subr.bf16.mxu0 0
    %2715 = vmatpush1.bf16.msra.mxu0 0
    %2716 = vmatprep.subr.bf16.mxu0 0
    %2717 = vmatpush1.bf16.msra.mxu0 0
    %2718 = vmatprep.subr.bf16.mxu0 0
    %2719 = vmatpush1.bf16.msra.mxu0 0
    %2720 = vmatprep.subr.bf16.mxu0 0
    %2721 = vmatpush1.bf16.msra.mxu0 %v2705
    %2722 = vmatprep.subr.bf16.mxu0 0
    %2723 = vmatpush1.bf16.msra.mxu0 %v2704
    %2724 = vmatprep.subr.bf16.mxu0 0
    %2725 = vmatpush1.bf16.msra.mxu0 %v2703
    %2726 = vmatprep.subr.bf16.mxu0 0
    %2727 = vmatpush1.bf16.msra.mxu0 %v2702
    %2728 = vmatprep.subr.bf16.mxu0 0
    %2729 = vmatpush1.bf16.msra.mxu0 %v2701
    %2730 = vmatprep.subr.bf16.mxu0 0
    %2731 = vmatpush2.bf16.msra.mxu0 0
    %2732 = vmatprep.subr.bf16.mxu0 0
    %2733 = vmatpush2.bf16.msra.mxu0 0
    %2734 = vmatprep.subr.bf16.mxu0 0
    %2735 = vmatpush2.bf16.msra.mxu0 0
    %2736 = vmatprep.subr.bf16.mxu0 0
    %2737 = vmatpush2.bf16.msra.mxu0 0
    %2738 = vmatprep.subr.bf16.mxu0 0
    %2739 = vmatpush2.bf16.msra.mxu0 0
    %2740 = vmatprep.subr.bf16.mxu0 0
    %2741 = vmatpush2.bf16.msra.mxu0 0
    %2742 = vmatprep.subr.bf16.mxu0 0
    %2743 = vmatpush2.bf16.msra.mxu0 0
    %2744 = vmatprep.subr.bf16.mxu0 0
    %2745 = vmatpush2.bf16.msra.mxu0 0
    %2746 = vmatprep.mubr.bf16.mxu0 0
    %2747 = vmatmul.mubr.bf16.gmra.mxu0 %v2712
    %v2748 = vpop.f32.mrf.mxu0
    %v2749 = vadd.f32 %v2680, %v2748
    %v2750 = vpop.f32.mrf.mxu0
    %v2751 = vpop.f32.mrf.mxu0
    %v2752 = vpop.f32.mrf.mxu0
    %2753 = vdwg.mxu0
    %v2754 = vtanh.pop %v2749
    %2755 = vst [vmem:[%s2211 + $0x10] sm:$0xff] %v2754
    // Predicated region
    $region18: #{forward.1} parent=1 // pred_check
      _
    $region19: #{forward.1} parent=1 // pred_check_branch
      %2757 = sbr.rel (0) target = $region21
    $region20: #{forward.1} parent=1 // pred_region
      _
    $region21: #{forward.1} parent=1 // pred_fallthru
      _
    // Predicated region
    $region22: #{forward.1} parent=1 // pred_check
      _
    $region23: #{forward.1} parent=1 // pred_check_branch
      %2759 = sbr.rel (0) target = $region25
    $region24: #{forward.1} parent=1 // pred_region
      _
    $region25: #{forward.1} parent=1 // pred_fallthru
      _
    %2760 = vsyncpa [#allocation3], 1

</llo_original>
